<compile_context>
chip_gen: v7x
topology: tpu7x:2x2x1
jax: 0.10.0
libtpu: 0.0.40
codegen_flags: <defaults>
</compile_context>

<pallas_src>
import functools

import jax
import jax.numpy as jnp
from jax import lax
from jax.experimental import pallas as pl
from jax.experimental.pallas import tpu as pltpu


def gsm_kernel(x_ref, scale_ref, shift_ref, w_ref, b_ref, out_ref, pad_ref,
               *, C, T, H, W, fast_epilogue):
    """One batch element: BN(eval)+ReLU -> grouped 3x3x3 conv -> tanh gate ->
    gating + temporal zero-padded shift + channel regrouping."""
    HW = H * W
    Cg = C // 2          # channels per conv group
    Cq = C // 4          # channels per regroup quarter
    base = W + 1         # lane-halo width of the padded scratch

    # ---- eval-mode BatchNorm3d (folded scale/shift) + ReLU --------------------
    # Written straight into the lane-padded scratch so every conv tap is a plain
    # offset-slice read of a full block.
    pad_ref[:, :, base:base + HW] = jnp.maximum(
        x_ref[...] * scale_ref[...] + shift_ref[...], 0.0)
    # Zero the halos once per step: out-of-image row (dh) reads land here, so
    # no dh boundary masks are needed (mandatory: scratch persists across steps).
    halo = jnp.zeros((T, C, base), jnp.float32)
    pad_ref[:, :, 0:base] = halo
    pad_ref[:, :, base + HW:base + HW + base] = halo

    # Lane (w) boundary masks — only the 6 taps with dw != 1 need one.
    w_idx = lax.broadcasted_iota(jnp.int32, (1, 1, HW), 2) % W
    mask_l = w_idx >= 1          # for dw == 0 taps
    mask_r = w_idx <= W - 2      # for dw == 2 taps

    # ---- grouped Conv3d: 9 spatial taps, 3 temporal weights each --------------
    # accs[dt][g]: per-group channel-reduced contribution, tiny (T, 1, HW).
    # The full-size per-channel product is reduced over channels immediately,
    # so no full (T, C, HW) accumulator is ever written back.
    accs = [[jnp.zeros((T, 1, HW), jnp.float32) for _ in range(2)]
            for _ in range(3)]
    for dh in range(3):
        for dw in range(3):
            off = (dh - 1) * W + (dw - 1)
            s = pad_ref[:, :, base + off:base + off + HW]   # shifted (T, C, HW)
            if dw == 0:
                s = jnp.where(mask_l, s, 0.0)
            elif dw == 2:
                s = jnp.where(mask_r, s, 0.0)
            for dt in range(3):
                tap = (dt * 3 + dh) * 3 + dw
                prod = s * w_ref[:, tap:tap + 1]             # (C,1) broadcast
                accs[dt][0] = accs[dt][0] + jnp.sum(
                    prod[:, :Cg, :], axis=1, keepdims=True)
                accs[dt][1] = accs[dt][1] + jnp.sum(
                    prod[:, Cg:, :], axis=1, keepdims=True)

    # temporal (dt) offsets applied on the tiny reduced accumulators + tanh gate
    zg = jnp.zeros((1, 1, HW), jnp.float32)
    gates = []
    for g in range(2):
        pre = (accs[1][g]
               + jnp.concatenate([zg, accs[0][g][:T - 1]], axis=0)   # dt=0[t-1]
               + jnp.concatenate([accs[2][g][1:], zg], axis=0))      # dt=2[t+1]
        gates.append(jnp.tanh(pre + b_ref[g]))

    # ---- gating + temporal zero-padded shift (x re-read here, not kept live) --
    x1 = x_ref[:, :Cg, :]
    x2 = x_ref[:, Cg:, :]
    y1 = gates[0] * x1
    y2 = gates[1] * x2
    r1 = x1 - y1
    r2 = x2 - y2
    zc = jnp.zeros((1, Cg, HW), jnp.float32)
    out1 = jnp.concatenate([y1[1:], zc], axis=0) + r1         # lshift_zeroPad + res
    out2 = jnp.concatenate([zc, y2[:T - 1]], axis=0) + r2     # rshift_zeroPad + res

    # ---- channel regrouping (the view/permute/view in the PyTorch module):
    #      output channel k reads group-local source channel Cq*(k%2) + k//2.
    if fast_epilogue:
        # Assemble the statically permuted value once and write it with a
        # single unmasked full-block store.
        parts = []
        for k in range(C):
            g, kk = divmod(k, Cg)
            src = Cq * (kk % 2) + kk // 2
            grp = out1 if g == 0 else out2
            parts.append(grp[:, src:src + 1, :])
        out_ref[...] = jnp.concatenate(parts, axis=1)
    else:
        # Fallback epilogue: per-channel masked stores (always lowers).
        for k in range(C):
            g, kk = divmod(k, Cg)
            src = Cq * (kk % 2) + kk // 2
            grp = out1 if g == 0 else out2
            out_ref[:, k:k + 1, :] = grp[:, src:src + 1, :]


def _build_gsm_call(B, T, C, H, W, fast_epilogue):
    HW = H * W
    kernel = functools.partial(gsm_kernel, C=C, T=T, H=H, W=W,
                               fast_epilogue=fast_epilogue)
    return pl.pallas_call(
        kernel,
        out_shape=jax.ShapeDtypeStruct((B, T, C, HW), jnp.float32),
        grid=(B,),
        in_specs=[
            pl.BlockSpec((None, T, C, HW), lambda b: (b, 0, 0, 0)),
            pl.BlockSpec((C, 1), lambda b: (0, 0)),
            pl.BlockSpec((C, 1), lambda b: (0, 0)),
            pl.BlockSpec((C, 27), lambda b: (0, 0)),
            pl.BlockSpec(memory_space=pltpu.MemorySpace.SMEM),
        ],
        out_specs=pl.BlockSpec((None, T, C, HW), lambda b: (b, 0, 0, 0)),
        scratch_shapes=[pltpu.VMEM((T, C, HW + 2 * (W + 1)), jnp.float32)],
        compiler_params=pltpu.CompilerParams(
            dimension_semantics=("parallel",),   # batch elements independent
            vmem_limit_bytes=32 * 1024 * 1024,   # headroom on v7x's 64 MiB VMEM
        ),
    )


def gsm_forward(x, gamma, beta, rmean, rvar, conv_w, conv_b,
                num_segments=3, eps=1e-5):
    NT, C, H, W = x.shape
    assert NT % num_segments == 0 and C % 4 == 0
    B = NT // num_segments
    T = num_segments
    HW = H * W

    # pure reshapes only — no HBM transposes on either side of the kernel
    x4 = x.astype(jnp.float32).reshape(B, T, C, HW)

    # fold eval-mode BatchNorm into per-channel scale/shift shaped (C, 1)
    scale = (gamma / jnp.sqrt(rvar + eps)).astype(jnp.float32).reshape(C, 1)
    shift = (beta.astype(jnp.float32).reshape(C, 1)
             - rmean.astype(jnp.float32).reshape(C, 1) * scale)

    # per-channel tap weights, lane-dense: (C, 27); tap = (dt*3 + dh)*3 + dw
    w_taps = jnp.concatenate(
        [conv_w[0], conv_w[1]], axis=0).astype(jnp.float32).reshape(C, 27)
    b_flat = conv_b.astype(jnp.float32)                       # (2,)

    args = (x4, scale, shift, w_taps, b_flat)
    try:
        out = _build_gsm_call(B, T, C, H, W, fast_epilogue=True)(*args)
    except Exception:
        # The single-store permuted epilogue needs unaligned sublane
        # concatenation; if this Mosaic build rejects it, fall back to the
        # proven per-channel-store epilogue (same math, slower stores).
        out = _build_gsm_call(B, T, C, H, W, fast_epilogue=False)(*args)

    # pure reshape back to the module's (B*T, C, H, W) output layout
    return out.reshape(NT, C, H, W)


def gsm_reference(x, gamma, beta, rmean, rvar, conv_w, conv_b,
                  num_segments=3, eps=1e-5):
    """Pure-JAX reference mirroring the PyTorch forward (eval-mode BN)."""
    NT, C, H, W = x.shape
    B = NT // num_segments
    T = num_segments
    x5 = x.reshape(B, T, C, H, W).transpose(0, 2, 1, 3, 4)
    scale = gamma / jnp.sqrt(rvar + eps)
    shift = beta - rmean * scale
    xr = jnp.maximum(x5 * scale[None, :, None, None, None]
                     + shift[None, :, None, None, None], 0.0)
    gate = jax.lax.conv_general_dilated(
        xr, conv_w, window_strides=(1, 1, 1), padding=[(1, 1)] * 3,
        dimension_numbers=('NCDHW', 'OIDHW', 'NCDHW'),
        feature_group_count=2, precision=jax.lax.Precision.HIGHEST)
    gate = jnp.tanh(gate + conv_b[None, :, None, None, None])
    g1, g2 = gate[:, 0:1], gate[:, 1:2]
    x1, x2 = x5[:, :C // 2], x5[:, C // 2:]
    y1, y2 = g1 * x1, g2 * x2
    r1, r2 = x1 - y1, x2 - y2
    lsh = jnp.concatenate([y1[:, :, 1:], jnp.zeros_like(y1[:, :, :1])], axis=2)
    rsh = jnp.concatenate([jnp.zeros_like(y2[:, :, :1]), y2[:, :, :-1]], axis=2)
    y1 = lsh + r1
    y2 = rsh + r2
    y1 = y1.reshape(B, 2, C // 4, T, H, W).transpose(0, 2, 1, 3, 4, 5) \
           .reshape(B, C // 2, T, H, W)
    y2 = y2.reshape(B, 2, C // 4, T, H, W).transpose(0, 2, 1, 3, 4, 5) \
           .reshape(B, C // 2, T, H, W)
    y = jnp.concatenate([y1, y2], axis=1)
    return y.transpose(0, 2, 1, 3, 4).reshape(NT, C, H, W)


if __name__ == "__main__":
    fPlane, num_segments = 8, 3
    B, H, W = 2, 8, 8

    key = jax.random.PRNGKey(0)
    keys = jax.random.split(key, 7)
    x = jax.random.normal(keys[0], (B * num_segments, fPlane, H, W), jnp.float32)
    gamma = 1.0 + 0.1 * jax.random.normal(keys[1], (fPlane,), jnp.float32)
    beta = 0.1 * jax.random.normal(keys[2], (fPlane,), jnp.float32)
    rmean = 0.1 * jax.random.normal(keys[3], (fPlane,), jnp.float32)
    rvar = 1.0 + 0.1 * jax.random.uniform(keys[4], (fPlane,), jnp.float32)
    # The PyTorch __init__ zero-inits the conv (identity gate); use small random
    # values instead so the gating path is actually exercised.
    conv_w = 0.1 * jax.random.normal(keys[5], (2, fPlane // 2, 3, 3, 3), jnp.float32)
    conv_b = 0.1 * jax.random.normal(keys[6], (2,), jnp.float32)

    out = gsm_forward(x, gamma, beta, rmean, rvar, conv_w, conv_b, num_segments)
    out = jax.block_until_ready(out)

    ref = gsm_reference(x, gamma, beta, rmean, rvar, conv_w, conv_b, num_segments)
    assert out.shape == x.shape
    max_err = float(jnp.max(jnp.abs(out - ref)))
    assert jnp.allclose(out, ref, atol=1e-3, rtol=1e-3), max_err
    print("KERNEL_OK")
</pallas_src>

<mosaic_0001>
module attributes {stable_mosaic.version = 11 : i64} {
  func.func @gsm_kernel(%arg0: i32, %arg1: memref<1x3x8x64xf32, #tpu.memory_space<vmem>>, %arg2: memref<8x1xf32, #tpu.memory_space<vmem>>, %arg3: memref<8x1xf32, #tpu.memory_space<vmem>>, %arg4: memref<8x27xf32, #tpu.memory_space<vmem>>, %arg5: memref<2xf32, #tpu.memory_space<smem>>, %arg6: memref<1x3x8x64xf32, #tpu.memory_space<vmem>>, %arg7: memref<3x8x82xf32, #tpu.memory_space<vmem>>) attributes {dimension_semantics = [#tpu.dimension_semantics<parallel>], iteration_bounds = array<i64: 2>, scalar_prefetch = 0 : i64, scratch_operands = 1 : i64, tpu.core_type = #tpu.core_type<tc>, window_params = [{transform_indices = @transform_0, window_bounds = array<i64: 1, 3, 8, 64>}, {pipeline_mode = #tpu.pipeline_mode<synchronous>, transform_indices = @transform_1, window_bounds = array<i64: 8, 1>}, {pipeline_mode = #tpu.pipeline_mode<synchronous>, transform_indices = @transform_2, window_bounds = array<i64: 8, 1>}, {pipeline_mode = #tpu.pipeline_mode<synchronous>, transform_indices = @transform_3, window_bounds = array<i64: 8, 27>}, {transform_indices = @transform_4, window_bounds = array<i64: 2>}, {transform_indices = @transform_5, window_bounds = array<i64: 1, 3, 8, 64>}]} {
    %c0 = arith.constant 0 : index
    %c0_0 = arith.constant 0 : index
    %c0_1 = arith.constant 0 : index
    %c0_2 = arith.constant 0 : index
    %0 = vector.load %arg1[%c0, %c0_0, %c0_1, %c0_2] : memref<1x3x8x64xf32, #tpu.memory_space<vmem>>, vector<1x3x8x64xf32>
    %1 = vector.shape_cast %0 : vector<1x3x8x64xf32> to vector<3x8x64xf32>
    %c0_3 = arith.constant 0 : index
    %c0_4 = arith.constant 0 : index
    %2 = vector.load %arg2[%c0_3, %c0_4] : memref<8x1xf32, #tpu.memory_space<vmem>>, vector<8x1xf32>
    %3 = vector.shape_cast %2 : vector<8x1xf32> to vector<1x8x1xf32>
    %4 = vector.broadcast %3 : vector<1x8x1xf32> to vector<3x8x64xf32>
    %5 = arith.mulf %1, %4 : vector<3x8x64xf32>
    %c0_5 = arith.constant 0 : index
    %c0_6 = arith.constant 0 : index
    %6 = vector.load %arg3[%c0_5, %c0_6] : memref<8x1xf32, #tpu.memory_space<vmem>>, vector<8x1xf32>
    %7 = vector.shape_cast %6 : vector<8x1xf32> to vector<1x8x1xf32>
    %8 = vector.broadcast %7 : vector<1x8x1xf32> to vector<3x8x64xf32>
    %9 = arith.addf %5, %8 : vector<3x8x64xf32>
    %cst = arith.constant 0.000000e+00 : f32
    %10 = vector.broadcast %cst : f32 to vector<3x8x64xf32>
    %11 = arith.maximumf %9, %10 : vector<3x8x64xf32>
    %c0_7 = arith.constant 0 : index
    %c0_8 = arith.constant 0 : index
    %c9 = arith.constant 9 : index
    %12 = vector.load %arg7[%c0_7, %c0_8, %c9] : memref<3x8x82xf32, #tpu.memory_space<vmem>>, vector<3x8x64xf32>
    tpu.vector_store %arg7[%c0_7, %c0_8, %c9], %11 {strides = array<i32>} : memref<3x8x82xf32, #tpu.memory_space<vmem>>, vector<3x8x64xf32>,
    %cst_9 = arith.constant 0.000000e+00 : f32
    %13 = vector.broadcast %cst_9 : f32 to vector<3x8x9xf32>
    %c0_10 = arith.constant 0 : index
    %c0_11 = arith.constant 0 : index
    %c0_12 = arith.constant 0 : index
    %14 = vector.load %arg7[%c0_10, %c0_11, %c0_12] : memref<3x8x82xf32, #tpu.memory_space<vmem>>, vector<3x8x9xf32>
    tpu.vector_store %arg7[%c0_10, %c0_11, %c0_12], %13 {strides = array<i32>} : memref<3x8x82xf32, #tpu.memory_space<vmem>>, vector<3x8x9xf32>,
    %c0_13 = arith.constant 0 : index
    %c0_14 = arith.constant 0 : index
    %c73 = arith.constant 73 : index
    %15 = vector.load %arg7[%c0_13, %c0_14, %c73] : memref<3x8x82xf32, #tpu.memory_space<vmem>>, vector<3x8x9xf32>
    tpu.vector_store %arg7[%c0_13, %c0_14, %c73], %13 {strides = array<i32>} : memref<3x8x82xf32, #tpu.memory_space<vmem>>, vector<3x8x9xf32>,
    %16 = tpu.iota {dimensions = array<i32: 2>} : vector<1x1x64xi32>
    %c8_i32 = arith.constant 8 : i32
    %c0_i32 = arith.constant 0 : i32
    %17 = arith.cmpi eq, %c8_i32, %c0_i32 : i32
    %c1_i32 = arith.constant 1 : i32
    %18 = arith.select %17, %c1_i32, %c8_i32 : i32
    %19 = vector.broadcast %18 : i32 to vector<1x1x64xi32>
    %20 = arith.remsi %16, %19 : vector<1x1x64xi32>
    %c0_i32_15 = arith.constant 0 : i32
    %21 = vector.broadcast %c0_i32_15 : i32 to vector<1x1x64xi32>
    %22 = arith.cmpi ne, %20, %21 : vector<1x1x64xi32>
    %c0_i32_16 = arith.constant 0 : i32
    %23 = vector.broadcast %c0_i32_16 : i32 to vector<1x1x64xi32>
    %24 = arith.cmpi slt, %20, %23 : vector<1x1x64xi32>
    %c0_i32_17 = arith.constant 0 : i32
    %25 = arith.cmpi slt, %18, %c0_i32_17 : i32
    %26 = vector.broadcast %25 : i1 to vector<1x1x64xi1>
    %27 = vector.broadcast %26 : vector<1x1x64xi1> to vector<1x1x64xi1>
    %28 = arith.xori %24, %27 : vector<1x1x64xi1>
    %29 = arith.andi %28, %22 : vector<1x1x64xi1>
    %30 = vector.broadcast %18 : i32 to vector<1x1x64xi32>
    %31 = arith.addi %20, %30 : vector<1x1x64xi32>
    %32 = arith.select %29, %31, %20 : vector<1x1x64xi1>, vector<1x1x64xi32>
    %c1_i32_18 = arith.constant 1 : i32
    %33 = vector.broadcast %c1_i32_18 : i32 to vector<1x1x64xi32>
    %34 = arith.cmpi sge, %32, %33 : vector<1x1x64xi32>
    %c6_i32 = arith.constant 6 : i32
    %35 = vector.broadcast %c6_i32 : i32 to vector<1x1x64xi32>
    %36 = arith.cmpi sle, %32, %35 : vector<1x1x64xi32>
    %cst_19 = arith.constant 0.000000e+00 : f32
    %37 = vector.broadcast %cst_19 : f32 to vector<3x1x64xf32>
    %cst_20 = arith.constant 0.000000e+00 : f32
    %38 = vector.broadcast %cst_20 : f32 to vector<3x1x64xf32>
    %cst_21 = arith.constant 0.000000e+00 : f32
    %39 = vector.broadcast %cst_21 : f32 to vector<3x1x64xf32>
    %cst_22 = arith.constant 0.000000e+00 : f32
    %40 = vector.broadcast %cst_22 : f32 to vector<3x1x64xf32>
    %cst_23 = arith.constant 0.000000e+00 : f32
    %41 = vector.broadcast %cst_23 : f32 to vector<3x1x64xf32>
    %cst_24 = arith.constant 0.000000e+00 : f32
    %42 = vector.broadcast %cst_24 : f32 to vector<3x1x64xf32>
    %c0_25 = arith.constant 0 : index
    %c0_26 = arith.constant 0 : index
    %c0_27 = arith.constant 0 : index
    %43 = vector.load %arg7[%c0_25, %c0_26, %c0_27] : memref<3x8x82xf32, #tpu.memory_space<vmem>>, vector<3x8x64xf32>
    %cst_28 = arith.constant 0.000000e+00 : f32
    %44 = vector.shape_cast %34 : vector<1x1x64xi1> to vector<1x1x64xi1>
    %45 = vector.broadcast %44 : vector<1x1x64xi1> to vector<3x8x64xi1>
    %46 = vector.broadcast %cst_28 : f32 to vector<3x8x64xf32>
    %47 = arith.select %45, %43, %46 : vector<3x8x64xi1>, vector<3x8x64xf32>
    %c0_29 = arith.constant 0 : index
    %c0_30 = arith.constant 0 : index
    %48 = vector.load %arg4[%c0_29, %c0_30] : memref<8x27xf32, #tpu.memory_space<vmem>>, vector<8x1xf32>
    %49 = vector.shape_cast %48 : vector<8x1xf32> to vector<1x8x1xf32>
    %50 = vector.broadcast %49 : vector<1x8x1xf32> to vector<3x8x64xf32>
    %51 = arith.mulf %47, %50 : vector<3x8x64xf32>
    %52 = vector.extract_strided_slice %51 {offsets = [0, 0, 0], sizes = [3, 4, 64], strides = [1, 1, 1]} : vector<3x8x64xf32> to vector<3x4x64xf32>
    %cst_31 = arith.constant dense<0.000000e+00> : vector<3x64xf32>
    %53 = vector.multi_reduction <add>, %52, %cst_31 [1] : vector<3x4x64xf32> to vector<3x64xf32>
    %54 = vector.shape_cast %53 : vector<3x64xf32> to vector<3x1x64xf32>
    %55 = arith.addf %37, %54 : vector<3x1x64xf32>
    %56 = vector.extract_strided_slice %51 {offsets = [0, 4, 0], sizes = [3, 4, 64], strides = [1, 1, 1]} : vector<3x8x64xf32> to vector<3x4x64xf32>
    %cst_32 = arith.constant dense<0.000000e+00> : vector<3x64xf32>
    %57 = vector.multi_reduction <add>, %56, %cst_32 [1] : vector<3x4x64xf32> to vector<3x64xf32>
    %58 = vector.shape_cast %57 : vector<3x64xf32> to vector<3x1x64xf32>
    %59 = arith.addf %38, %58 : vector<3x1x64xf32>
    %c0_33 = arith.constant 0 : index
    %c9_34 = arith.constant 9 : index
    %60 = vector.load %arg4[%c0_33, %c9_34] : memref<8x27xf32, #tpu.memory_space<vmem>>, vector<8x1xf32>
    %61 = vector.shape_cast %60 : vector<8x1xf32> to vector<1x8x1xf32>
    %62 = vector.broadcast %61 : vector<1x8x1xf32> to vector<3x8x64xf32>
    %63 = arith.mulf %47, %62 : vector<3x8x64xf32>
    %64 = vector.extract_strided_slice %63 {offsets = [0, 0, 0], sizes = [3, 4, 64], strides = [1, 1, 1]} : vector<3x8x64xf32> to vector<3x4x64xf32>
    %cst_35 = arith.constant dense<0.000000e+00> : vector<3x64xf32>
    %65 = vector.multi_reduction <add>, %64, %cst_35 [1] : vector<3x4x64xf32> to vector<3x64xf32>
    %66 = vector.shape_cast %65 : vector<3x64xf32> to vector<3x1x64xf32>
    %67 = arith.addf %39, %66 : vector<3x1x64xf32>
    %68 = vector.extract_strided_slice %63 {offsets = [0, 4, 0], sizes = [3, 4, 64], strides = [1, 1, 1]} : vector<3x8x64xf32> to vector<3x4x64xf32>
    %cst_36 = arith.constant dense<0.000000e+00> : vector<3x64xf32>
    %69 = vector.multi_reduction <add>, %68, %cst_36 [1] : vector<3x4x64xf32> to vector<3x64xf32>
    %70 = vector.shape_cast %69 : vector<3x64xf32> to vector<3x1x64xf32>
    %71 = arith.addf %40, %70 : vector<3x1x64xf32>
    %c0_37 = arith.constant 0 : index
    %c18 = arith.constant 18 : index
    %72 = vector.load %arg4[%c0_37, %c18] : memref<8x27xf32, #tpu.memory_space<vmem>>, vector<8x1xf32>
    %73 = vector.shape_cast %72 : vector<8x1xf32> to vector<1x8x1xf32>
    %74 = vector.broadcast %73 : vector<1x8x1xf32> to vector<3x8x64xf32>
    %75 = arith.mulf %47, %74 : vector<3x8x64xf32>
    %76 = vector.extract_strided_slice %75 {offsets = [0, 0, 0], sizes = [3, 4, 64], strides = [1, 1, 1]} : vector<3x8x64xf32> to vector<3x4x64xf32>
    %cst_38 = arith.constant dense<0.000000e+00> : vector<3x64xf32>
    %77 = vector.multi_reduction <add>, %76, %cst_38 [1] : vector<3x4x64xf32> to vector<3x64xf32>
    %78 = vector.shape_cast %77 : vector<3x64xf32> to vector<3x1x64xf32>
    %79 = arith.addf %41, %78 : vector<3x1x64xf32>
    %80 = vector.extract_strided_slice %75 {offsets = [0, 4, 0], sizes = [3, 4, 64], strides = [1, 1, 1]} : vector<3x8x64xf32> to vector<3x4x64xf32>
    %cst_39 = arith.constant dense<0.000000e+00> : vector<3x64xf32>
    %81 = vector.multi_reduction <add>, %80, %cst_39 [1] : vector<3x4x64xf32> to vector<3x64xf32>
    %82 = vector.shape_cast %81 : vector<3x64xf32> to vector<3x1x64xf32>
    %83 = arith.addf %42, %82 : vector<3x1x64xf32>
    %c0_40 = arith.constant 0 : index
    %c0_41 = arith.constant 0 : index
    %c1 = arith.constant 1 : index
    %84 = vector.load %arg7[%c0_40, %c0_41, %c1] : memref<3x8x82xf32, #tpu.memory_space<vmem>>, vector<3x8x64xf32>
    %c0_42 = arith.constant 0 : index
    %c1_43 = arith.constant 1 : index
    %85 = vector.load %arg4[%c0_42, %c1_43] : memref<8x27xf32, #tpu.memory_space<vmem>>, vector<8x1xf32>
    %86 = vector.shape_cast %85 : vector<8x1xf32> to vector<1x8x1xf32>
    %87 = vector.broadcast %86 : vector<1x8x1xf32> to vector<3x8x64xf32>
    %88 = arith.mulf %84, %87 : vector<3x8x64xf32>
    %89 = vector.extract_strided_slice %88 {offsets = [0, 0, 0], sizes = [3, 4, 64], strides = [1, 1, 1]} : vector<3x8x64xf32> to vector<3x4x64xf32>
    %cst_44 = arith.constant dense<0.000000e+00> : vector<3x64xf32>
    %90 = vector.multi_reduction <add>, %89, %cst_44 [1] : vector<3x4x64xf32> to vector<3x64xf32>
    %91 = vector.shape_cast %90 : vector<3x64xf32> to vector<3x1x64xf32>
    %92 = arith.addf %55, %91 : vector<3x1x64xf32>
    %93 = vector.extract_strided_slice %88 {offsets = [0, 4, 0], sizes = [3, 4, 64], strides = [1, 1, 1]} : vector<3x8x64xf32> to vector<3x4x64xf32>
    %cst_45 = arith.constant dense<0.000000e+00> : vector<3x64xf32>
    %94 = vector.multi_reduction <add>, %93, %cst_45 [1] : vector<3x4x64xf32> to vector<3x64xf32>
    %95 = vector.shape_cast %94 : vector<3x64xf32> to vector<3x1x64xf32>
    %96 = arith.addf %59, %95 : vector<3x1x64xf32>
    %c0_46 = arith.constant 0 : index
    %c10 = arith.constant 10 : index
    %97 = vector.load %arg4[%c0_46, %c10] : memref<8x27xf32, #tpu.memory_space<vmem>>, vector<8x1xf32>
    %98 = vector.shape_cast %97 : vector<8x1xf32> to vector<1x8x1xf32>
    %99 = vector.broadcast %98 : vector<1x8x1xf32> to vector<3x8x64xf32>
    %100 = arith.mulf %84, %99 : vector<3x8x64xf32>
    %101 = vector.extract_strided_slice %100 {offsets = [0, 0, 0], sizes = [3, 4, 64], strides = [1, 1, 1]} : vector<3x8x64xf32> to vector<3x4x64xf32>
    %cst_47 = arith.constant dense<0.000000e+00> : vector<3x64xf32>
    %102 = vector.multi_reduction <add>, %101, %cst_47 [1] : vector<3x4x64xf32> to vector<3x64xf32>
    %103 = vector.shape_cast %102 : vector<3x64xf32> to vector<3x1x64xf32>
    %104 = arith.addf %67, %103 : vector<3x1x64xf32>
    %105 = vector.extract_strided_slice %100 {offsets = [0, 4, 0], sizes = [3, 4, 64], strides = [1, 1, 1]} : vector<3x8x64xf32> to vector<3x4x64xf32>
    %cst_48 = arith.constant dense<0.000000e+00> : vector<3x64xf32>
    %106 = vector.multi_reduction <add>, %105, %cst_48 [1] : vector<3x4x64xf32> to vector<3x64xf32>
    %107 = vector.shape_cast %106 : vector<3x64xf32> to vector<3x1x64xf32>
    %108 = arith.addf %71, %107 : vector<3x1x64xf32>
    %c0_49 = arith.constant 0 : index
    %c19 = arith.constant 19 : index
    %109 = vector.load %arg4[%c0_49, %c19] : memref<8x27xf32, #tpu.memory_space<vmem>>, vector<8x1xf32>
    %110 = vector.shape_cast %109 : vector<8x1xf32> to vector<1x8x1xf32>
    %111 = vector.broadcast %110 : vector<1x8x1xf32> to vector<3x8x64xf32>
    %112 = arith.mulf %84, %111 : vector<3x8x64xf32>
    %113 = vector.extract_strided_slice %112 {offsets = [0, 0, 0], sizes = [3, 4, 64], strides = [1, 1, 1]} : vector<3x8x64xf32> to vector<3x4x64xf32>
    %cst_50 = arith.constant dense<0.000000e+00> : vector<3x64xf32>
    %114 = vector.multi_reduction <add>, %113, %cst_50 [1] : vector<3x4x64xf32> to vector<3x64xf32>
    %115 = vector.shape_cast %114 : vector<3x64xf32> to vector<3x1x64xf32>
    %116 = arith.addf %79, %115 : vector<3x1x64xf32>
    %117 = vector.extract_strided_slice %112 {offsets = [0, 4, 0], sizes = [3, 4, 64], strides = [1, 1, 1]} : vector<3x8x64xf32> to vector<3x4x64xf32>
    %cst_51 = arith.constant dense<0.000000e+00> : vector<3x64xf32>
    %118 = vector.multi_reduction <add>, %117, %cst_51 [1] : vector<3x4x64xf32> to vector<3x64xf32>
    %119 = vector.shape_cast %118 : vector<3x64xf32> to vector<3x1x64xf32>
    %120 = arith.addf %83, %119 : vector<3x1x64xf32>
    %c0_52 = arith.constant 0 : index
    %c0_53 = arith.constant 0 : index
    %c2 = arith.constant 2 : index
    %121 = vector.load %arg7[%c0_52, %c0_53, %c2] : memref<3x8x82xf32, #tpu.memory_space<vmem>>, vector<3x8x64xf32>
    %cst_54 = arith.constant 0.000000e+00 : f32
    %122 = vector.shape_cast %36 : vector<1x1x64xi1> to vector<1x1x64xi1>
    %123 = vector.broadcast %122 : vector<1x1x64xi1> to vector<3x8x64xi1>
    %124 = vector.broadcast %cst_54 : f32 to vector<3x8x64xf32>
    %125 = arith.select %123, %121, %124 : vector<3x8x64xi1>, vector<3x8x64xf32>
    %c0_55 = arith.constant 0 : index
    %c2_56 = arith.constant 2 : index
    %126 = vector.load %arg4[%c0_55, %c2_56] : memref<8x27xf32, #tpu.memory_space<vmem>>, vector<8x1xf32>
    %127 = vector.shape_cast %126 : vector<8x1xf32> to vector<1x8x1xf32>
    %128 = vector.broadcast %127 : vector<1x8x1xf32> to vector<3x8x64xf32>
    %129 = arith.mulf %125, %128 : vector<3x8x64xf32>
    %130 = vector.extract_strided_slice %129 {offsets = [0, 0, 0], sizes = [3, 4, 64], strides = [1, 1, 1]} : vector<3x8x64xf32> to vector<3x4x64xf32>
    %cst_57 = arith.constant dense<0.000000e+00> : vector<3x64xf32>
    %131 = vector.multi_reduction <add>, %130, %cst_57 [1] : vector<3x4x64xf32> to vector<3x64xf32>
    %132 = vector.shape_cast %131 : vector<3x64xf32> to vector<3x1x64xf32>
    %133 = arith.addf %92, %132 : vector<3x1x64xf32>
    %134 = vector.extract_strided_slice %129 {offsets = [0, 4, 0], sizes = [3, 4, 64], strides = [1, 1, 1]} : vector<3x8x64xf32> to vector<3x4x64xf32>
    %cst_58 = arith.constant dense<0.000000e+00> : vector<3x64xf32>
    %135 = vector.multi_reduction <add>, %134, %cst_58 [1] : vector<3x4x64xf32> to vector<3x64xf32>
    %136 = vector.shape_cast %135 : vector<3x64xf32> to vector<3x1x64xf32>
    %137 = arith.addf %96, %136 : vector<3x1x64xf32>
    %c0_59 = arith.constant 0 : index
    %c11 = arith.constant 11 : index
    %138 = vector.load %arg4[%c0_59, %c11] : memref<8x27xf32, #tpu.memory_space<vmem>>, vector<8x1xf32>
    %139 = vector.shape_cast %138 : vector<8x1xf32> to vector<1x8x1xf32>
    %140 = vector.broadcast %139 : vector<1x8x1xf32> to vector<3x8x64xf32>
    %141 = arith.mulf %125, %140 : vector<3x8x64xf32>
    %142 = vector.extract_strided_slice %141 {offsets = [0, 0, 0], sizes = [3, 4, 64], strides = [1, 1, 1]} : vector<3x8x64xf32> to vector<3x4x64xf32>
    %cst_60 = arith.constant dense<0.000000e+00> : vector<3x64xf32>
    %143 = vector.multi_reduction <add>, %142, %cst_60 [1] : vector<3x4x64xf32> to vector<3x64xf32>
    %144 = vector.shape_cast %143 : vector<3x64xf32> to vector<3x1x64xf32>
    %145 = arith.addf %104, %144 : vector<3x1x64xf32>
    %146 = vector.extract_strided_slice %141 {offsets = [0, 4, 0], sizes = [3, 4, 64], strides = [1, 1, 1]} : vector<3x8x64xf32> to vector<3x4x64xf32>
    %cst_61 = arith.constant dense<0.000000e+00> : vector<3x64xf32>
    %147 = vector.multi_reduction <add>, %146, %cst_61 [1] : vector<3x4x64xf32> to vector<3x64xf32>
    %148 = vector.shape_cast %147 : vector<3x64xf32> to vector<3x1x64xf32>
    %149 = arith.addf %108, %148 : vector<3x1x64xf32>
    %c0_62 = arith.constant 0 : index
    %c20 = arith.constant 20 : index
    %150 = vector.load %arg4[%c0_62, %c20] : memref<8x27xf32, #tpu.memory_space<vmem>>, vector<8x1xf32>
    %151 = vector.shape_cast %150 : vector<8x1xf32> to vector<1x8x1xf32>
    %152 = vector.broadcast %151 : vector<1x8x1xf32> to vector<3x8x64xf32>
    %153 = arith.mulf %125, %152 : vector<3x8x64xf32>
    %154 = vector.extract_strided_slice %153 {offsets = [0, 0, 0], sizes = [3, 4, 64], strides = [1, 1, 1]} : vector<3x8x64xf32> to vector<3x4x64xf32>
    %cst_63 = arith.constant dense<0.000000e+00> : vector<3x64xf32>
    %155 = vector.multi_reduction <add>, %154, %cst_63 [1] : vector<3x4x64xf32> to vector<3x64xf32>
    %156 = vector.shape_cast %155 : vector<3x64xf32> to vector<3x1x64xf32>
    %157 = arith.addf %116, %156 : vector<3x1x64xf32>
    %158 = vector.extract_strided_slice %153 {offsets = [0, 4, 0], sizes = [3, 4, 64], strides = [1, 1, 1]} : vector<3x8x64xf32> to vector<3x4x64xf32>
    %cst_64 = arith.constant dense<0.000000e+00> : vector<3x64xf32>
    %159 = vector.multi_reduction <add>, %158, %cst_64 [1] : vector<3x4x64xf32> to vector<3x64xf32>
    %160 = vector.shape_cast %159 : vector<3x64xf32> to vector<3x1x64xf32>
    %161 = arith.addf %120, %160 : vector<3x1x64xf32>
    %c0_65 = arith.constant 0 : index
    %c0_66 = arith.constant 0 : index
    %c8 = arith.constant 8 : index
    %162 = vector.load %arg7[%c0_65, %c0_66, %c8] : memref<3x8x82xf32, #tpu.memory_space<vmem>>, vector<3x8x64xf32>
    %cst_67 = arith.constant 0.000000e+00 : f32
    %163 = vector.shape_cast %34 : vector<1x1x64xi1> to vector<1x1x64xi1>
    %164 = vector.broadcast %163 : vector<1x1x64xi1> to vector<3x8x64xi1>
    %165 = vector.broadcast %cst_67 : f32 to vector<3x8x64xf32>
    %166 = arith.select %164, %162, %165 : vector<3x8x64xi1>, vector<3x8x64xf32>
    %c0_68 = arith.constant 0 : index
    %c3 = arith.constant 3 : index
    %167 = vector.load %arg4[%c0_68, %c3] : memref<8x27xf32, #tpu.memory_space<vmem>>, vector<8x1xf32>
    %168 = vector.shape_cast %167 : vector<8x1xf32> to vector<1x8x1xf32>
    %169 = vector.broadcast %168 : vector<1x8x1xf32> to vector<3x8x64xf32>
    %170 = arith.mulf %166, %169 : vector<3x8x64xf32>
    %171 = vector.extract_strided_slice %170 {offsets = [0, 0, 0], sizes = [3, 4, 64], strides = [1, 1, 1]} : vector<3x8x64xf32> to vector<3x4x64xf32>
    %cst_69 = arith.constant dense<0.000000e+00> : vector<3x64xf32>
    %172 = vector.multi_reduction <add>, %171, %cst_69 [1] : vector<3x4x64xf32> to vector<3x64xf32>
    %173 = vector.shape_cast %172 : vector<3x64xf32> to vector<3x1x64xf32>
    %174 = arith.addf %133, %173 : vector<3x1x64xf32>
    %175 = vector.extract_strided_slice %170 {offsets = [0, 4, 0], sizes = [3, 4, 64], strides = [1, 1, 1]} : vector<3x8x64xf32> to vector<3x4x64xf32>
    %cst_70 = arith.constant dense<0.000000e+00> : vector<3x64xf32>
    %176 = vector.multi_reduction <add>, %175, %cst_70 [1] : vector<3x4x64xf32> to vector<3x64xf32>
    %177 = vector.shape_cast %176 : vector<3x64xf32> to vector<3x1x64xf32>
    %178 = arith.addf %137, %177 : vector<3x1x64xf32>
    %c0_71 = arith.constant 0 : index
    %c12 = arith.constant 12 : index
    %179 = vector.load %arg4[%c0_71, %c12] : memref<8x27xf32, #tpu.memory_space<vmem>>, vector<8x1xf32>
    %180 = vector.shape_cast %179 : vector<8x1xf32> to vector<1x8x1xf32>
    %181 = vector.broadcast %180 : vector<1x8x1xf32> to vector<3x8x64xf32>
    %182 = arith.mulf %166, %181 : vector<3x8x64xf32>
    %183 = vector.extract_strided_slice %182 {offsets = [0, 0, 0], sizes = [3, 4, 64], strides = [1, 1, 1]} : vector<3x8x64xf32> to vector<3x4x64xf32>
    %cst_72 = arith.constant dense<0.000000e+00> : vector<3x64xf32>
    %184 = vector.multi_reduction <add>, %183, %cst_72 [1] : vector<3x4x64xf32> to vector<3x64xf32>
    %185 = vector.shape_cast %184 : vector<3x64xf32> to vector<3x1x64xf32>
    %186 = arith.addf %145, %185 : vector<3x1x64xf32>
    %187 = vector.extract_strided_slice %182 {offsets = [0, 4, 0], sizes = [3, 4, 64], strides = [1, 1, 1]} : vector<3x8x64xf32> to vector<3x4x64xf32>
    %cst_73 = arith.constant dense<0.000000e+00> : vector<3x64xf32>
    %188 = vector.multi_reduction <add>, %187, %cst_73 [1] : vector<3x4x64xf32> to vector<3x64xf32>
    %189 = vector.shape_cast %188 : vector<3x64xf32> to vector<3x1x64xf32>
    %190 = arith.addf %149, %189 : vector<3x1x64xf32>
    %c0_74 = arith.constant 0 : index
    %c21 = arith.constant 21 : index
    %191 = vector.load %arg4[%c0_74, %c21] : memref<8x27xf32, #tpu.memory_space<vmem>>, vector<8x1xf32>
    %192 = vector.shape_cast %191 : vector<8x1xf32> to vector<1x8x1xf32>
    %193 = vector.broadcast %192 : vector<1x8x1xf32> to vector<3x8x64xf32>
    %194 = arith.mulf %166, %193 : vector<3x8x64xf32>
    %195 = vector.extract_strided_slice %194 {offsets = [0, 0, 0], sizes = [3, 4, 64], strides = [1, 1, 1]} : vector<3x8x64xf32> to vector<3x4x64xf32>
    %cst_75 = arith.constant dense<0.000000e+00> : vector<3x64xf32>
    %196 = vector.multi_reduction <add>, %195, %cst_75 [1] : vector<3x4x64xf32> to vector<3x64xf32>
    %197 = vector.shape_cast %196 : vector<3x64xf32> to vector<3x1x64xf32>
    %198 = arith.addf %157, %197 : vector<3x1x64xf32>
    %199 = vector.extract_strided_slice %194 {offsets = [0, 4, 0], sizes = [3, 4, 64], strides = [1, 1, 1]} : vector<3x8x64xf32> to vector<3x4x64xf32>
    %cst_76 = arith.constant dense<0.000000e+00> : vector<3x64xf32>
    %200 = vector.multi_reduction <add>, %199, %cst_76 [1] : vector<3x4x64xf32> to vector<3x64xf32>
    %201 = vector.shape_cast %200 : vector<3x64xf32> to vector<3x1x64xf32>
    %202 = arith.addf %161, %201 : vector<3x1x64xf32>
    %c0_77 = arith.constant 0 : index
    %c0_78 = arith.constant 0 : index
    %c9_79 = arith.constant 9 : index
    %203 = vector.load %arg7[%c0_77, %c0_78, %c9_79] : memref<3x8x82xf32, #tpu.memory_space<vmem>>, vector<3x8x64xf32>
    %c0_80 = arith.constant 0 : index
    %c4 = arith.constant 4 : index
    %204 = vector.load %arg4[%c0_80, %c4] : memref<8x27xf32, #tpu.memory_space<vmem>>, vector<8x1xf32>
    %205 = vector.shape_cast %204 : vector<8x1xf32> to vector<1x8x1xf32>
    %206 = vector.broadcast %205 : vector<1x8x1xf32> to vector<3x8x64xf32>
    %207 = arith.mulf %203, %206 : vector<3x8x64xf32>
    %208 = vector.extract_strided_slice %207 {offsets = [0, 0, 0], sizes = [3, 4, 64], strides = [1, 1, 1]} : vector<3x8x64xf32> to vector<3x4x64xf32>
    %cst_81 = arith.constant dense<0.000000e+00> : vector<3x64xf32>
    %209 = vector.multi_reduction <add>, %208, %cst_81 [1] : vector<3x4x64xf32> to vector<3x64xf32>
    %210 = vector.shape_cast %209 : vector<3x64xf32> to vector<3x1x64xf32>
    %211 = arith.addf %174, %210 : vector<3x1x64xf32>
    %212 = vector.extract_strided_slice %207 {offsets = [0, 4, 0], sizes = [3, 4, 64], strides = [1, 1, 1]} : vector<3x8x64xf32> to vector<3x4x64xf32>
    %cst_82 = arith.constant dense<0.000000e+00> : vector<3x64xf32>
    %213 = vector.multi_reduction <add>, %212, %cst_82 [1] : vector<3x4x64xf32> to vector<3x64xf32>
    %214 = vector.shape_cast %213 : vector<3x64xf32> to vector<3x1x64xf32>
    %215 = arith.addf %178, %214 : vector<3x1x64xf32>
    %c0_83 = arith.constant 0 : index
    %c13 = arith.constant 13 : index
    %216 = vector.load %arg4[%c0_83, %c13] : memref<8x27xf32, #tpu.memory_space<vmem>>, vector<8x1xf32>
    %217 = vector.shape_cast %216 : vector<8x1xf32> to vector<1x8x1xf32>
    %218 = vector.broadcast %217 : vector<1x8x1xf32> to vector<3x8x64xf32>
    %219 = arith.mulf %203, %218 : vector<3x8x64xf32>
    %220 = vector.extract_strided_slice %219 {offsets = [0, 0, 0], sizes = [3, 4, 64], strides = [1, 1, 1]} : vector<3x8x64xf32> to vector<3x4x64xf32>
    %cst_84 = arith.constant dense<0.000000e+00> : vector<3x64xf32>
    %221 = vector.multi_reduction <add>, %220, %cst_84 [1] : vector<3x4x64xf32> to vector<3x64xf32>
    %222 = vector.shape_cast %221 : vector<3x64xf32> to vector<3x1x64xf32>
    %223 = arith.addf %186, %222 : vector<3x1x64xf32>
    %224 = vector.extract_strided_slice %219 {offsets = [0, 4, 0], sizes = [3, 4, 64], strides = [1, 1, 1]} : vector<3x8x64xf32> to vector<3x4x64xf32>
    %cst_85 = arith.constant dense<0.000000e+00> : vector<3x64xf32>
    %225 = vector.multi_reduction <add>, %224, %cst_85 [1] : vector<3x4x64xf32> to vector<3x64xf32>
    %226 = vector.shape_cast %225 : vector<3x64xf32> to vector<3x1x64xf32>
    %227 = arith.addf %190, %226 : vector<3x1x64xf32>
    %c0_86 = arith.constant 0 : index
    %c22 = arith.constant 22 : index
    %228 = vector.load %arg4[%c0_86, %c22] : memref<8x27xf32, #tpu.memory_space<vmem>>, vector<8x1xf32>
    %229 = vector.shape_cast %228 : vector<8x1xf32> to vector<1x8x1xf32>
    %230 = vector.broadcast %229 : vector<1x8x1xf32> to vector<3x8x64xf32>
    %231 = arith.mulf %203, %230 : vector<3x8x64xf32>
    %232 = vector.extract_strided_slice %231 {offsets = [0, 0, 0], sizes = [3, 4, 64], strides = [1, 1, 1]} : vector<3x8x64xf32> to vector<3x4x64xf32>
    %cst_87 = arith.constant dense<0.000000e+00> : vector<3x64xf32>
    %233 = vector.multi_reduction <add>, %232, %cst_87 [1] : vector<3x4x64xf32> to vector<3x64xf32>
    %234 = vector.shape_cast %233 : vector<3x64xf32> to vector<3x1x64xf32>
    %235 = arith.addf %198, %234 : vector<3x1x64xf32>
    %236 = vector.extract_strided_slice %231 {offsets = [0, 4, 0], sizes = [3, 4, 64], strides = [1, 1, 1]} : vector<3x8x64xf32> to vector<3x4x64xf32>
    %cst_88 = arith.constant dense<0.000000e+00> : vector<3x64xf32>
    %237 = vector.multi_reduction <add>, %236, %cst_88 [1] : vector<3x4x64xf32> to vector<3x64xf32>
    %238 = vector.shape_cast %237 : vector<3x64xf32> to vector<3x1x64xf32>
    %239 = arith.addf %202, %238 : vector<3x1x64xf32>
    %c0_89 = arith.constant 0 : index
    %c0_90 = arith.constant 0 : index
    %c10_91 = arith.constant 10 : index
    %240 = vector.load %arg7[%c0_89, %c0_90, %c10_91] : memref<3x8x82xf32, #tpu.memory_space<vmem>>, vector<3x8x64xf32>
    %cst_92 = arith.constant 0.000000e+00 : f32
    %241 = vector.shape_cast %36 : vector<1x1x64xi1> to vector<1x1x64xi1>
    %242 = vector.broadcast %241 : vector<1x1x64xi1> to vector<3x8x64xi1>
    %243 = vector.broadcast %cst_92 : f32 to vector<3x8x64xf32>
    %244 = arith.select %242, %240, %243 : vector<3x8x64xi1>, vector<3x8x64xf32>
    %c0_93 = arith.constant 0 : index
    %c5 = arith.constant 5 : index
    %245 = vector.load %arg4[%c0_93, %c5] : memref<8x27xf32, #tpu.memory_space<vmem>>, vector<8x1xf32>
    %246 = vector.shape_cast %245 : vector<8x1xf32> to vector<1x8x1xf32>
    %247 = vector.broadcast %246 : vector<1x8x1xf32> to vector<3x8x64xf32>
    %248 = arith.mulf %244, %247 : vector<3x8x64xf32>
    %249 = vector.extract_strided_slice %248 {offsets = [0, 0, 0], sizes = [3, 4, 64], strides = [1, 1, 1]} : vector<3x8x64xf32> to vector<3x4x64xf32>
    %cst_94 = arith.constant dense<0.000000e+00> : vector<3x64xf32>
    %250 = vector.multi_reduction <add>, %249, %cst_94 [1] : vector<3x4x64xf32> to vector<3x64xf32>
    %251 = vector.shape_cast %250 : vector<3x64xf32> to vector<3x1x64xf32>
    %252 = arith.addf %211, %251 : vector<3x1x64xf32>
    %253 = vector.extract_strided_slice %248 {offsets = [0, 4, 0], sizes = [3, 4, 64], strides = [1, 1, 1]} : vector<3x8x64xf32> to vector<3x4x64xf32>
    %cst_95 = arith.constant dense<0.000000e+00> : vector<3x64xf32>
    %254 = vector.multi_reduction <add>, %253, %cst_95 [1] : vector<3x4x64xf32> to vector<3x64xf32>
    %255 = vector.shape_cast %254 : vector<3x64xf32> to vector<3x1x64xf32>
    %256 = arith.addf %215, %255 : vector<3x1x64xf32>
    %c0_96 = arith.constant 0 : index
    %c14 = arith.constant 14 : index
    %257 = vector.load %arg4[%c0_96, %c14] : memref<8x27xf32, #tpu.memory_space<vmem>>, vector<8x1xf32>
    %258 = vector.shape_cast %257 : vector<8x1xf32> to vector<1x8x1xf32>
    %259 = vector.broadcast %258 : vector<1x8x1xf32> to vector<3x8x64xf32>
    %260 = arith.mulf %244, %259 : vector<3x8x64xf32>
    %261 = vector.extract_strided_slice %260 {offsets = [0, 0, 0], sizes = [3, 4, 64], strides = [1, 1, 1]} : vector<3x8x64xf32> to vector<3x4x64xf32>
    %cst_97 = arith.constant dense<0.000000e+00> : vector<3x64xf32>
    %262 = vector.multi_reduction <add>, %261, %cst_97 [1] : vector<3x4x64xf32> to vector<3x64xf32>
    %263 = vector.shape_cast %262 : vector<3x64xf32> to vector<3x1x64xf32>
    %264 = arith.addf %223, %263 : vector<3x1x64xf32>
    %265 = vector.extract_strided_slice %260 {offsets = [0, 4, 0], sizes = [3, 4, 64], strides = [1, 1, 1]} : vector<3x8x64xf32> to vector<3x4x64xf32>
    %cst_98 = arith.constant dense<0.000000e+00> : vector<3x64xf32>
    %266 = vector.multi_reduction <add>, %265, %cst_98 [1] : vector<3x4x64xf32> to vector<3x64xf32>
    %267 = vector.shape_cast %266 : vector<3x64xf32> to vector<3x1x64xf32>
    %268 = arith.addf %227, %267 : vector<3x1x64xf32>
    %c0_99 = arith.constant 0 : index
    %c23 = arith.constant 23 : index
    %269 = vector.load %arg4[%c0_99, %c23] : memref<8x27xf32, #tpu.memory_space<vmem>>, vector<8x1xf32>
    %270 = vector.shape_cast %269 : vector<8x1xf32> to vector<1x8x1xf32>
    %271 = vector.broadcast %270 : vector<1x8x1xf32> to vector<3x8x64xf32>
    %272 = arith.mulf %244, %271 : vector<3x8x64xf32>
    %273 = vector.extract_strided_slice %272 {offsets = [0, 0, 0], sizes = [3, 4, 64], strides = [1, 1, 1]} : vector<3x8x64xf32> to vector<3x4x64xf32>
    %cst_100 = arith.constant dense<0.000000e+00> : vector<3x64xf32>
    %274 = vector.multi_reduction <add>, %273, %cst_100 [1] : vector<3x4x64xf32> to vector<3x64xf32>
    %275 = vector.shape_cast %274 : vector<3x64xf32> to vector<3x1x64xf32>
    %276 = arith.addf %235, %275 : vector<3x1x64xf32>
    %277 = vector.extract_strided_slice %272 {offsets = [0, 4, 0], sizes = [3, 4, 64], strides = [1, 1, 1]} : vector<3x8x64xf32> to vector<3x4x64xf32>
    %cst_101 = arith.constant dense<0.000000e+00> : vector<3x64xf32>
    %278 = vector.multi_reduction <add>, %277, %cst_101 [1] : vector<3x4x64xf32> to vector<3x64xf32>
    %279 = vector.shape_cast %278 : vector<3x64xf32> to vector<3x1x64xf32>
    %280 = arith.addf %239, %279 : vector<3x1x64xf32>
    %c0_102 = arith.constant 0 : index
    %c0_103 = arith.constant 0 : index
    %c16 = arith.constant 16 : index
    %281 = vector.load %arg7[%c0_102, %c0_103, %c16] : memref<3x8x82xf32, #tpu.memory_space<vmem>>, vector<3x8x64xf32>
    %cst_104 = arith.constant 0.000000e+00 : f32
    %282 = vector.shape_cast %34 : vector<1x1x64xi1> to vector<1x1x64xi1>
    %283 = vector.broadcast %282 : vector<1x1x64xi1> to vector<3x8x64xi1>
    %284 = vector.broadcast %cst_104 : f32 to vector<3x8x64xf32>
    %285 = arith.select %283, %281, %284 : vector<3x8x64xi1>, vector<3x8x64xf32>
    %c0_105 = arith.constant 0 : index
    %c6 = arith.constant 6 : index
    %286 = vector.load %arg4[%c0_105, %c6] : memref<8x27xf32, #tpu.memory_space<vmem>>, vector<8x1xf32>
    %287 = vector.shape_cast %286 : vector<8x1xf32> to vector<1x8x1xf32>
    %288 = vector.broadcast %287 : vector<1x8x1xf32> to vector<3x8x64xf32>
    %289 = arith.mulf %285, %288 : vector<3x8x64xf32>
    %290 = vector.extract_strided_slice %289 {offsets = [0, 0, 0], sizes = [3, 4, 64], strides = [1, 1, 1]} : vector<3x8x64xf32> to vector<3x4x64xf32>
    %cst_106 = arith.constant dense<0.000000e+00> : vector<3x64xf32>
    %291 = vector.multi_reduction <add>, %290, %cst_106 [1] : vector<3x4x64xf32> to vector<3x64xf32>
    %292 = vector.shape_cast %291 : vector<3x64xf32> to vector<3x1x64xf32>
    %293 = arith.addf %252, %292 : vector<3x1x64xf32>
    %294 = vector.extract_strided_slice %289 {offsets = [0, 4, 0], sizes = [3, 4, 64], strides = [1, 1, 1]} : vector<3x8x64xf32> to vector<3x4x64xf32>
    %cst_107 = arith.constant dense<0.000000e+00> : vector<3x64xf32>
    %295 = vector.multi_reduction <add>, %294, %cst_107 [1] : vector<3x4x64xf32> to vector<3x64xf32>
    %296 = vector.shape_cast %295 : vector<3x64xf32> to vector<3x1x64xf32>
    %297 = arith.addf %256, %296 : vector<3x1x64xf32>
    %c0_108 = arith.constant 0 : index
    %c15 = arith.constant 15 : index
    %298 = vector.load %arg4[%c0_108, %c15] : memref<8x27xf32, #tpu.memory_space<vmem>>, vector<8x1xf32>
    %299 = vector.shape_cast %298 : vector<8x1xf32> to vector<1x8x1xf32>
    %300 = vector.broadcast %299 : vector<1x8x1xf32> to vector<3x8x64xf32>
    %301 = arith.mulf %285, %300 : vector<3x8x64xf32>
    %302 = vector.extract_strided_slice %301 {offsets = [0, 0, 0], sizes = [3, 4, 64], strides = [1, 1, 1]} : vector<3x8x64xf32> to vector<3x4x64xf32>
    %cst_109 = arith.constant dense<0.000000e+00> : vector<3x64xf32>
    %303 = vector.multi_reduction <add>, %302, %cst_109 [1] : vector<3x4x64xf32> to vector<3x64xf32>
    %304 = vector.shape_cast %303 : vector<3x64xf32> to vector<3x1x64xf32>
    %305 = arith.addf %264, %304 : vector<3x1x64xf32>
    %306 = vector.extract_strided_slice %301 {offsets = [0, 4, 0], sizes = [3, 4, 64], strides = [1, 1, 1]} : vector<3x8x64xf32> to vector<3x4x64xf32>
    %cst_110 = arith.constant dense<0.000000e+00> : vector<3x64xf32>
    %307 = vector.multi_reduction <add>, %306, %cst_110 [1] : vector<3x4x64xf32> to vector<3x64xf32>
    %308 = vector.shape_cast %307 : vector<3x64xf32> to vector<3x1x64xf32>
    %309 = arith.addf %268, %308 : vector<3x1x64xf32>
    %c0_111 = arith.constant 0 : index
    %c24 = arith.constant 24 : index
    %310 = vector.load %arg4[%c0_111, %c24] : memref<8x27xf32, #tpu.memory_space<vmem>>, vector<8x1xf32>
    %311 = vector.shape_cast %310 : vector<8x1xf32> to vector<1x8x1xf32>
    %312 = vector.broadcast %311 : vector<1x8x1xf32> to vector<3x8x64xf32>
    %313 = arith.mulf %285, %312 : vector<3x8x64xf32>
    %314 = vector.extract_strided_slice %313 {offsets = [0, 0, 0], sizes = [3, 4, 64], strides = [1, 1, 1]} : vector<3x8x64xf32> to vector<3x4x64xf32>
    %cst_112 = arith.constant dense<0.000000e+00> : vector<3x64xf32>
    %315 = vector.multi_reduction <add>, %314, %cst_112 [1] : vector<3x4x64xf32> to vector<3x64xf32>
    %316 = vector.shape_cast %315 : vector<3x64xf32> to vector<3x1x64xf32>
    %317 = arith.addf %276, %316 : vector<3x1x64xf32>
    %318 = vector.extract_strided_slice %313 {offsets = [0, 4, 0], sizes = [3, 4, 64], strides = [1, 1, 1]} : vector<3x8x64xf32> to vector<3x4x64xf32>
    %cst_113 = arith.constant dense<0.000000e+00> : vector<3x64xf32>
    %319 = vector.multi_reduction <add>, %318, %cst_113 [1] : vector<3x4x64xf32> to vector<3x64xf32>
    %320 = vector.shape_cast %319 : vector<3x64xf32> to vector<3x1x64xf32>
    %321 = arith.addf %280, %320 : vector<3x1x64xf32>
    %c0_114 = arith.constant 0 : index
    %c0_115 = arith.constant 0 : index
    %c17 = arith.constant 17 : index
    %322 = vector.load %arg7[%c0_114, %c0_115, %c17] : memref<3x8x82xf32, #tpu.memory_space<vmem>>, vector<3x8x64xf32>
    %c0_116 = arith.constant 0 : index
    %c7 = arith.constant 7 : index
    %323 = vector.load %arg4[%c0_116, %c7] : memref<8x27xf32, #tpu.memory_space<vmem>>, vector<8x1xf32>
    %324 = vector.shape_cast %323 : vector<8x1xf32> to vector<1x8x1xf32>
    %325 = vector.broadcast %324 : vector<1x8x1xf32> to vector<3x8x64xf32>
    %326 = arith.mulf %322, %325 : vector<3x8x64xf32>
    %327 = vector.extract_strided_slice %326 {offsets = [0, 0, 0], sizes = [3, 4, 64], strides = [1, 1, 1]} : vector<3x8x64xf32> to vector<3x4x64xf32>
    %cst_117 = arith.constant dense<0.000000e+00> : vector<3x64xf32>
    %328 = vector.multi_reduction <add>, %327, %cst_117 [1] : vector<3x4x64xf32> to vector<3x64xf32>
    %329 = vector.shape_cast %328 : vector<3x64xf32> to vector<3x1x64xf32>
    %330 = arith.addf %293, %329 : vector<3x1x64xf32>
    %331 = vector.extract_strided_slice %326 {offsets = [0, 4, 0], sizes = [3, 4, 64], strides = [1, 1, 1]} : vector<3x8x64xf32> to vector<3x4x64xf32>
    %cst_118 = arith.constant dense<0.000000e+00> : vector<3x64xf32>
    %332 = vector.multi_reduction <add>, %331, %cst_118 [1] : vector<3x4x64xf32> to vector<3x64xf32>
    %333 = vector.shape_cast %332 : vector<3x64xf32> to vector<3x1x64xf32>
    %334 = arith.addf %297, %333 : vector<3x1x64xf32>
    %c0_119 = arith.constant 0 : index
    %c16_120 = arith.constant 16 : index
    %335 = vector.load %arg4[%c0_119, %c16_120] : memref<8x27xf32, #tpu.memory_space<vmem>>, vector<8x1xf32>
    %336 = vector.shape_cast %335 : vector<8x1xf32> to vector<1x8x1xf32>
    %337 = vector.broadcast %336 : vector<1x8x1xf32> to vector<3x8x64xf32>
    %338 = arith.mulf %322, %337 : vector<3x8x64xf32>
    %339 = vector.extract_strided_slice %338 {offsets = [0, 0, 0], sizes = [3, 4, 64], strides = [1, 1, 1]} : vector<3x8x64xf32> to vector<3x4x64xf32>
    %cst_121 = arith.constant dense<0.000000e+00> : vector<3x64xf32>
    %340 = vector.multi_reduction <add>, %339, %cst_121 [1] : vector<3x4x64xf32> to vector<3x64xf32>
    %341 = vector.shape_cast %340 : vector<3x64xf32> to vector<3x1x64xf32>
    %342 = arith.addf %305, %341 : vector<3x1x64xf32>
    %343 = vector.extract_strided_slice %338 {offsets = [0, 4, 0], sizes = [3, 4, 64], strides = [1, 1, 1]} : vector<3x8x64xf32> to vector<3x4x64xf32>
    %cst_122 = arith.constant dense<0.000000e+00> : vector<3x64xf32>
    %344 = vector.multi_reduction <add>, %343, %cst_122 [1] : vector<3x4x64xf32> to vector<3x64xf32>
    %345 = vector.shape_cast %344 : vector<3x64xf32> to vector<3x1x64xf32>
    %346 = arith.addf %309, %345 : vector<3x1x64xf32>
    %c0_123 = arith.constant 0 : index
    %c25 = arith.constant 25 : index
    %347 = vector.load %arg4[%c0_123, %c25] : memref<8x27xf32, #tpu.memory_space<vmem>>, vector<8x1xf32>
    %348 = vector.shape_cast %347 : vector<8x1xf32> to vector<1x8x1xf32>
    %349 = vector.broadcast %348 : vector<1x8x1xf32> to vector<3x8x64xf32>
    %350 = arith.mulf %322, %349 : vector<3x8x64xf32>
    %351 = vector.extract_strided_slice %350 {offsets = [0, 0, 0], sizes = [3, 4, 64], strides = [1, 1, 1]} : vector<3x8x64xf32> to vector<3x4x64xf32>
    %cst_124 = arith.constant dense<0.000000e+00> : vector<3x64xf32>
    %352 = vector.multi_reduction <add>, %351, %cst_124 [1] : vector<3x4x64xf32> to vector<3x64xf32>
    %353 = vector.shape_cast %352 : vector<3x64xf32> to vector<3x1x64xf32>
    %354 = arith.addf %317, %353 : vector<3x1x64xf32>
    %355 = vector.extract_strided_slice %350 {offsets = [0, 4, 0], sizes = [3, 4, 64], strides = [1, 1, 1]} : vector<3x8x64xf32> to vector<3x4x64xf32>
    %cst_125 = arith.constant dense<0.000000e+00> : vector<3x64xf32>
    %356 = vector.multi_reduction <add>, %355, %cst_125 [1] : vector<3x4x64xf32> to vector<3x64xf32>
    %357 = vector.shape_cast %356 : vector<3x64xf32> to vector<3x1x64xf32>
    %358 = arith.addf %321, %357 : vector<3x1x64xf32>
    %c0_126 = arith.constant 0 : index
    %c0_127 = arith.constant 0 : index
    %c18_128 = arith.constant 18 : index
    %359 = vector.load %arg7[%c0_126, %c0_127, %c18_128] : memref<3x8x82xf32, #tpu.memory_space<vmem>>, vector<3x8x64xf32>
    %cst_129 = arith.constant 0.000000e+00 : f32
    %360 = vector.shape_cast %36 : vector<1x1x64xi1> to vector<1x1x64xi1>
    %361 = vector.broadcast %360 : vector<1x1x64xi1> to vector<3x8x64xi1>
    %362 = vector.broadcast %cst_129 : f32 to vector<3x8x64xf32>
    %363 = arith.select %361, %359, %362 : vector<3x8x64xi1>, vector<3x8x64xf32>
    %c0_130 = arith.constant 0 : index
    %c8_131 = arith.constant 8 : index
    %364 = vector.load %arg4[%c0_130, %c8_131] : memref<8x27xf32, #tpu.memory_space<vmem>>, vector<8x1xf32>
    %365 = vector.shape_cast %364 : vector<8x1xf32> to vector<1x8x1xf32>
    %366 = vector.broadcast %365 : vector<1x8x1xf32> to vector<3x8x64xf32>
    %367 = arith.mulf %363, %366 : vector<3x8x64xf32>
    %368 = vector.extract_strided_slice %367 {offsets = [0, 0, 0], sizes = [3, 4, 64], strides = [1, 1, 1]} : vector<3x8x64xf32> to vector<3x4x64xf32>
    %cst_132 = arith.constant dense<0.000000e+00> : vector<3x64xf32>
    %369 = vector.multi_reduction <add>, %368, %cst_132 [1] : vector<3x4x64xf32> to vector<3x64xf32>
    %370 = vector.shape_cast %369 : vector<3x64xf32> to vector<3x1x64xf32>
    %371 = arith.addf %330, %370 : vector<3x1x64xf32>
    %372 = vector.extract_strided_slice %367 {offsets = [0, 4, 0], sizes = [3, 4, 64], strides = [1, 1, 1]} : vector<3x8x64xf32> to vector<3x4x64xf32>
    %cst_133 = arith.constant dense<0.000000e+00> : vector<3x64xf32>
    %373 = vector.multi_reduction <add>, %372, %cst_133 [1] : vector<3x4x64xf32> to vector<3x64xf32>
    %374 = vector.shape_cast %373 : vector<3x64xf32> to vector<3x1x64xf32>
    %375 = arith.addf %334, %374 : vector<3x1x64xf32>
    %c0_134 = arith.constant 0 : index
    %c17_135 = arith.constant 17 : index
    %376 = vector.load %arg4[%c0_134, %c17_135] : memref<8x27xf32, #tpu.memory_space<vmem>>, vector<8x1xf32>
    %377 = vector.shape_cast %376 : vector<8x1xf32> to vector<1x8x1xf32>
    %378 = vector.broadcast %377 : vector<1x8x1xf32> to vector<3x8x64xf32>
    %379 = arith.mulf %363, %378 : vector<3x8x64xf32>
    %380 = vector.extract_strided_slice %379 {offsets = [0, 0, 0], sizes = [3, 4, 64], strides = [1, 1, 1]} : vector<3x8x64xf32> to vector<3x4x64xf32>
    %cst_136 = arith.constant dense<0.000000e+00> : vector<3x64xf32>
    %381 = vector.multi_reduction <add>, %380, %cst_136 [1] : vector<3x4x64xf32> to vector<3x64xf32>
    %382 = vector.shape_cast %381 : vector<3x64xf32> to vector<3x1x64xf32>
    %383 = arith.addf %342, %382 : vector<3x1x64xf32>
    %384 = vector.extract_strided_slice %379 {offsets = [0, 4, 0], sizes = [3, 4, 64], strides = [1, 1, 1]} : vector<3x8x64xf32> to vector<3x4x64xf32>
    %cst_137 = arith.constant dense<0.000000e+00> : vector<3x64xf32>
    %385 = vector.multi_reduction <add>, %384, %cst_137 [1] : vector<3x4x64xf32> to vector<3x64xf32>
    %386 = vector.shape_cast %385 : vector<3x64xf32> to vector<3x1x64xf32>
    %387 = arith.addf %346, %386 : vector<3x1x64xf32>
    %c0_138 = arith.constant 0 : index
    %c26 = arith.constant 26 : index
    %388 = vector.load %arg4[%c0_138, %c26] : memref<8x27xf32, #tpu.memory_space<vmem>>, vector<8x1xf32>
    %389 = vector.shape_cast %388 : vector<8x1xf32> to vector<1x8x1xf32>
    %390 = vector.broadcast %389 : vector<1x8x1xf32> to vector<3x8x64xf32>
    %391 = arith.mulf %363, %390 : vector<3x8x64xf32>
    %392 = vector.extract_strided_slice %391 {offsets = [0, 0, 0], sizes = [3, 4, 64], strides = [1, 1, 1]} : vector<3x8x64xf32> to vector<3x4x64xf32>
    %cst_139 = arith.constant dense<0.000000e+00> : vector<3x64xf32>
    %393 = vector.multi_reduction <add>, %392, %cst_139 [1] : vector<3x4x64xf32> to vector<3x64xf32>
    %394 = vector.shape_cast %393 : vector<3x64xf32> to vector<3x1x64xf32>
    %395 = arith.addf %354, %394 : vector<3x1x64xf32>
    %396 = vector.extract_strided_slice %391 {offsets = [0, 4, 0], sizes = [3, 4, 64], strides = [1, 1, 1]} : vector<3x8x64xf32> to vector<3x4x64xf32>
    %cst_140 = arith.constant dense<0.000000e+00> : vector<3x64xf32>
    %397 = vector.multi_reduction <add>, %396, %cst_140 [1] : vector<3x4x64xf32> to vector<3x64xf32>
    %398 = vector.shape_cast %397 : vector<3x64xf32> to vector<3x1x64xf32>
    %399 = arith.addf %358, %398 : vector<3x1x64xf32>
    %cst_141 = arith.constant 0.000000e+00 : f32
    %400 = vector.broadcast %cst_141 : f32 to vector<1x1x64xf32>
    %401 = vector.extract_strided_slice %371 {offsets = [0, 0, 0], sizes = [2, 1, 64], strides = [1, 1, 1]} : vector<3x1x64xf32> to vector<2x1x64xf32>
    %402 = tpu.concatenate %400, %401 in 0 : vector<1x1x64xf32>, vector<2x1x64xf32> -> vector<3x1x64xf32>
    %403 = arith.addf %383, %402 : vector<3x1x64xf32>
    %404 = vector.extract_strided_slice %395 {offsets = [1, 0, 0], sizes = [2, 1, 64], strides = [1, 1, 1]} : vector<3x1x64xf32> to vector<2x1x64xf32>
    %405 = tpu.concatenate %404, %400 in 0 : vector<2x1x64xf32>, vector<1x1x64xf32> -> vector<3x1x64xf32>
    %406 = arith.addf %403, %405 : vector<3x1x64xf32>
    %c0_142 = arith.constant 0 : index
    %407 = memref.load %arg5[%c0_142] : memref<2xf32, #tpu.memory_space<smem>>
    %408 = vector.broadcast %407 : f32 to vector<3x1x64xf32>
    %409 = arith.addf %406, %408 : vector<3x1x64xf32>
    %410 = math.tanh %409 : vector<3x1x64xf32>
    %411 = vector.extract_strided_slice %375 {offsets = [0, 0, 0], sizes = [2, 1, 64], strides = [1, 1, 1]} : vector<3x1x64xf32> to vector<2x1x64xf32>
    %412 = tpu.concatenate %400, %411 in 0 : vector<1x1x64xf32>, vector<2x1x64xf32> -> vector<3x1x64xf32>
    %413 = arith.addf %387, %412 : vector<3x1x64xf32>
    %414 = vector.extract_strided_slice %399 {offsets = [1, 0, 0], sizes = [2, 1, 64], strides = [1, 1, 1]} : vector<3x1x64xf32> to vector<2x1x64xf32>
    %415 = tpu.concatenate %414, %400 in 0 : vector<2x1x64xf32>, vector<1x1x64xf32> -> vector<3x1x64xf32>
    %416 = arith.addf %413, %415 : vector<3x1x64xf32>
    %c1_143 = arith.constant 1 : index
    %417 = memref.load %arg5[%c1_143] : memref<2xf32, #tpu.memory_space<smem>>
    %418 = vector.broadcast %417 : f32 to vector<3x1x64xf32>
    %419 = arith.addf %416, %418 : vector<3x1x64xf32>
    %420 = math.tanh %419 : vector<3x1x64xf32>
    %c0_144 = arith.constant 0 : index
    %c0_145 = arith.constant 0 : index
    %c0_146 = arith.constant 0 : index
    %c0_147 = arith.constant 0 : index
    %421 = vector.load %arg1[%c0_144, %c0_145, %c0_146, %c0_147] : memref<1x3x8x64xf32, #tpu.memory_space<vmem>>, vector<1x3x4x64xf32>
    %422 = vector.shape_cast %421 : vector<1x3x4x64xf32> to vector<3x4x64xf32>
    %c0_148 = arith.constant 0 : index
    %c0_149 = arith.constant 0 : index
    %c4_150 = arith.constant 4 : index
    %c0_151 = arith.constant 0 : index
    %423 = vector.load %arg1[%c0_148, %c0_149, %c4_150, %c0_151] : memref<1x3x8x64xf32, #tpu.memory_space<vmem>>, vector<1x3x4x64xf32>
    %424 = vector.shape_cast %423 : vector<1x3x4x64xf32> to vector<3x4x64xf32>
    %425 = vector.broadcast %410 : vector<3x1x64xf32> to vector<3x4x64xf32>
    %426 = arith.mulf %425, %422 : vector<3x4x64xf32>
    %427 = vector.broadcast %420 : vector<3x1x64xf32> to vector<3x4x64xf32>
    %428 = arith.mulf %427, %424 : vector<3x4x64xf32>
    %429 = arith.subf %422, %426 : vector<3x4x64xf32>
    %430 = arith.subf %424, %428 : vector<3x4x64xf32>
    %cst_152 = arith.constant 0.000000e+00 : f32
    %431 = vector.broadcast %cst_152 : f32 to vector<1x4x64xf32>
    %432 = vector.extract_strided_slice %426 {offsets = [1, 0, 0], sizes = [2, 4, 64], strides = [1, 1, 1]} : vector<3x4x64xf32> to vector<2x4x64xf32>
    %433 = tpu.concatenate %432, %431 in 0 : vector<2x4x64xf32>, vector<1x4x64xf32> -> vector<3x4x64xf32>
    %434 = arith.addf %433, %429 : vector<3x4x64xf32>
    %435 = vector.extract_strided_slice %428 {offsets = [0, 0, 0], sizes = [2, 4, 64], strides = [1, 1, 1]} : vector<3x4x64xf32> to vector<2x4x64xf32>
    %436 = tpu.concatenate %431, %435 in 0 : vector<1x4x64xf32>, vector<2x4x64xf32> -> vector<3x4x64xf32>
    %437 = arith.addf %436, %430 : vector<3x4x64xf32>
    %438 = vector.extract_strided_slice %434 {offsets = [0, 0, 0], sizes = [3, 1, 64], strides = [1, 1, 1]} : vector<3x4x64xf32> to vector<3x1x64xf32>
    %439 = vector.extract_strided_slice %434 {offsets = [0, 2, 0], sizes = [3, 1, 64], strides = [1, 1, 1]} : vector<3x4x64xf32> to vector<3x1x64xf32>
    %440 = vector.extract_strided_slice %434 {offsets = [0, 1, 0], sizes = [3, 1, 64], strides = [1, 1, 1]} : vector<3x4x64xf32> to vector<3x1x64xf32>
    %441 = vector.extract_strided_slice %434 {offsets = [0, 3, 0], sizes = [3, 1, 64], strides = [1, 1, 1]} : vector<3x4x64xf32> to vector<3x1x64xf32>
    %442 = vector.extract_strided_slice %437 {offsets = [0, 0, 0], sizes = [3, 1, 64], strides = [1, 1, 1]} : vector<3x4x64xf32> to vector<3x1x64xf32>
    %443 = vector.extract_strided_slice %437 {offsets = [0, 2, 0], sizes = [3, 1, 64], strides = [1, 1, 1]} : vector<3x4x64xf32> to vector<3x1x64xf32>
    %444 = vector.extract_strided_slice %437 {offsets = [0, 1, 0], sizes = [3, 1, 64], strides = [1, 1, 1]} : vector<3x4x64xf32> to vector<3x1x64xf32>
    %445 = vector.extract_strided_slice %437 {offsets = [0, 3, 0], sizes = [3, 1, 64], strides = [1, 1, 1]} : vector<3x4x64xf32> to vector<3x1x64xf32>
    %446 = tpu.concatenate %438, %439, %440, %441, %442, %443, %444, %445 in 1 : vector<3x1x64xf32>, vector<3x1x64xf32>, vector<3x1x64xf32>, vector<3x1x64xf32>, vector<3x1x64xf32>, vector<3x1x64xf32>, vector<3x1x64xf32>, vector<3x1x64xf32> -> vector<3x8x64xf32>
    %c0_153 = arith.constant 0 : index
    %c0_154 = arith.constant 0 : index
    %c0_155 = arith.constant 0 : index
    %c0_156 = arith.constant 0 : index
    %447 = vector.load %arg6[%c0_153, %c0_154, %c0_155, %c0_156] : memref<1x3x8x64xf32, #tpu.memory_space<vmem>>, vector<1x3x8x64xf32>
    %448 = vector.shape_cast %447 : vector<1x3x8x64xf32> to vector<3x8x64xf32>
    %449 = vector.shape_cast %446 : vector<3x8x64xf32> to vector<1x3x8x64xf32>
    tpu.vector_store %arg6[%c0_153, %c0_154, %c0_155, %c0_156], %449 {strides = array<i32>} : memref<1x3x8x64xf32, #tpu.memory_space<vmem>>, vector<1x3x8x64xf32>,
    return
  }
  func.func @transform_0(%arg0: i32) -> (i32, i32, i32, i32) {
    %c0_i32 = arith.constant 0 : i32
    %c0_i32_0 = arith.constant 0 : i32
    %c0_i32_1 = arith.constant 0 : i32
    %c0_i32_2 = arith.constant 0 : i32
    return %arg0, %c0_i32, %c0_i32_0, %c0_i32_1 : i32, i32, i32, i32
  }
  func.func @transform_1(%arg0: i32) -> (i32, i32) {
    %c0_i32 = arith.constant 0 : i32
    %c0_i32_0 = arith.constant 0 : i32
    %c0_i32_1 = arith.constant 0 : i32
    return %c0_i32, %c0_i32_0 : i32, i32
  }
  func.func @transform_2(%arg0: i32) -> (i32, i32) {
    %c0_i32 = arith.constant 0 : i32
    %c0_i32_0 = arith.constant 0 : i32
    %c0_i32_1 = arith.constant 0 : i32
    return %c0_i32, %c0_i32_0 : i32, i32
  }
  func.func @transform_3(%arg0: i32) -> (i32, i32) {
    %c0_i32 = arith.constant 0 : i32
    %c0_i32_0 = arith.constant 0 : i32
    %c0_i32_1 = arith.constant 0 : i32
    return %c0_i32, %c0_i32_0 : i32, i32
  }
  func.func @transform_4(%arg0: i32) -> i32 {
    %c0_i32 = arith.constant 0 : i32
    %c0_i32_0 = arith.constant 0 : i32
    return %c0_i32 : i32
  }
  func.func @transform_5(%arg0: i32) -> (i32, i32, i32, i32) {
    %c0_i32 = arith.constant 0 : i32
    %c0_i32_0 = arith.constant 0 : i32
    %c0_i32_1 = arith.constant 0 : i32
    %c0_i32_2 = arith.constant 0 : i32
    return %arg0, %c0_i32, %c0_i32_0, %c0_i32_1 : i32, i32, i32, i32
  }
}

module attributes {stable_mosaic.version = 11 : i64} {
  func.func @gsm_kernel(%arg0: i32, %arg1: memref<1x3x8x64xf32, #tpu.memory_space<vmem>>, %arg2: memref<8x1xf32, #tpu.memory_space<vmem>>, %arg3: memref<8x1xf32, #tpu.memory_space<vmem>>, %arg4: memref<8x27xf32, #tpu.memory_space<vmem>>, %arg5: memref<2xf32, #tpu.memory_space<smem>>, %arg6: memref<1x3x8x64xf32, #tpu.memory_space<vmem>>, %arg7: memref<3x8x82xf32, #tpu.memory_space<vmem>>) attributes {dimension_semantics = [#tpu.dimension_semantics<parallel>], iteration_bounds = array<i64: 2>, scalar_prefetch = 0 : i64, scratch_operands = 1 : i64, tpu.core_type = #tpu.core_type<tc>, window_params = [{transform_indices = @transform_0, window_bounds = array<i64: 1, 3, 8, 64>}, {pipeline_mode = #tpu.pipeline_mode<synchronous>, transform_indices = @transform_1, window_bounds = array<i64: 8, 1>}, {pipeline_mode = #tpu.pipeline_mode<synchronous>, transform_indices = @transform_2, window_bounds = array<i64: 8, 1>}, {pipeline_mode = #tpu.pipeline_mode<synchronous>, transform_indices = @transform_3, window_bounds = array<i64: 8, 27>}, {transform_indices = @transform_4, window_bounds = array<i64: 2>}, {transform_indices = @transform_5, window_bounds = array<i64: 1, 3, 8, 64>}]} {
    %c0 = arith.constant 0 : index
    %c0_0 = arith.constant 0 : index
    %c0_1 = arith.constant 0 : index
    %c0_2 = arith.constant 0 : index
    %0 = vector.load %arg1[%c0, %c0_0, %c0_1, %c0_2] : memref<1x3x8x64xf32, #tpu.memory_space<vmem>>, vector<1x3x8x64xf32>
    %1 = vector.shape_cast %0 : vector<1x3x8x64xf32> to vector<3x8x64xf32>
    %c0_3 = arith.constant 0 : index
    %c0_4 = arith.constant 0 : index
    %2 = vector.load %arg2[%c0_3, %c0_4] : memref<8x1xf32, #tpu.memory_space<vmem>>, vector<8x1xf32>
    %3 = vector.shape_cast %2 : vector<8x1xf32> to vector<1x8x1xf32>
    %4 = vector.broadcast %3 : vector<1x8x1xf32> to vector<3x8x64xf32>
    %5 = arith.mulf %1, %4 : vector<3x8x64xf32>
    %c0_5 = arith.constant 0 : index
    %c0_6 = arith.constant 0 : index
    %6 = vector.load %arg3[%c0_5, %c0_6] : memref<8x1xf32, #tpu.memory_space<vmem>>, vector<8x1xf32>
    %7 = vector.shape_cast %6 : vector<8x1xf32> to vector<1x8x1xf32>
    %8 = vector.broadcast %7 : vector<1x8x1xf32> to vector<3x8x64xf32>
    %9 = arith.addf %5, %8 : vector<3x8x64xf32>
    %cst = arith.constant 0.000000e+00 : f32
    %10 = vector.broadcast %cst : f32 to vector<3x8x64xf32>
    %11 = arith.maximumf %9, %10 : vector<3x8x64xf32>
    %c0_7 = arith.constant 0 : index
    %c0_8 = arith.constant 0 : index
    %c9 = arith.constant 9 : index
    %12 = vector.load %arg7[%c0_7, %c0_8, %c9] : memref<3x8x82xf32, #tpu.memory_space<vmem>>, vector<3x8x64xf32>
    tpu.vector_store %arg7[%c0_7, %c0_8, %c9], %11 {strides = array<i32>} : memref<3x8x82xf32, #tpu.memory_space<vmem>>, vector<3x8x64xf32>,
    %cst_9 = arith.constant 0.000000e+00 : f32
    %13 = vector.broadcast %cst_9 : f32 to vector<3x8x9xf32>
    %c0_10 = arith.constant 0 : index
    %c0_11 = arith.constant 0 : index
    %c0_12 = arith.constant 0 : index
    %14 = vector.load %arg7[%c0_10, %c0_11, %c0_12] : memref<3x8x82xf32, #tpu.memory_space<vmem>>, vector<3x8x9xf32>
    tpu.vector_store %arg7[%c0_10, %c0_11, %c0_12], %13 {strides = array<i32>} : memref<3x8x82xf32, #tpu.memory_space<vmem>>, vector<3x8x9xf32>,
    %c0_13 = arith.constant 0 : index
    %c0_14 = arith.constant 0 : index
    %c73 = arith.constant 73 : index
    %15 = vector.load %arg7[%c0_13, %c0_14, %c73] : memref<3x8x82xf32, #tpu.memory_space<vmem>>, vector<3x8x9xf32>
    tpu.vector_store %arg7[%c0_13, %c0_14, %c73], %13 {strides = array<i32>} : memref<3x8x82xf32, #tpu.memory_space<vmem>>, vector<3x8x9xf32>,
    %16 = tpu.iota {dimensions = array<i32: 2>} : vector<1x1x64xi32>
    %c8_i32 = arith.constant 8 : i32
    %c0_i32 = arith.constant 0 : i32
    %17 = arith.cmpi eq, %c8_i32, %c0_i32 : i32
    %c1_i32 = arith.constant 1 : i32
    %18 = arith.select %17, %c1_i32, %c8_i32 : i32
    %19 = vector.broadcast %18 : i32 to vector<1x1x64xi32>
    %20 = arith.remsi %16, %19 : vector<1x1x64xi32>
    %c0_i32_15 = arith.constant 0 : i32
    %21 = vector.broadcast %c0_i32_15 : i32 to vector<1x1x64xi32>
    %22 = arith.cmpi ne, %20, %21 : vector<1x1x64xi32>
    %c0_i32_16 = arith.constant 0 : i32
    %23 = vector.broadcast %c0_i32_16 : i32 to vector<1x1x64xi32>
    %24 = arith.cmpi slt, %20, %23 : vector<1x1x64xi32>
    %c0_i32_17 = arith.constant 0 : i32
    %25 = arith.cmpi slt, %18, %c0_i32_17 : i32
    %26 = vector.broadcast %25 : i1 to vector<1x1x64xi1>
    %27 = vector.broadcast %26 : vector<1x1x64xi1> to vector<1x1x64xi1>
    %28 = arith.xori %24, %27 : vector<1x1x64xi1>
    %29 = arith.andi %28, %22 : vector<1x1x64xi1>
    %30 = vector.broadcast %18 : i32 to vector<1x1x64xi32>
    %31 = arith.addi %20, %30 : vector<1x1x64xi32>
    %32 = arith.select %29, %31, %20 : vector<1x1x64xi1>, vector<1x1x64xi32>
    %c1_i32_18 = arith.constant 1 : i32
    %33 = vector.broadcast %c1_i32_18 : i32 to vector<1x1x64xi32>
    %34 = arith.cmpi sge, %32, %33 : vector<1x1x64xi32>
    %c6_i32 = arith.constant 6 : i32
    %35 = vector.broadcast %c6_i32 : i32 to vector<1x1x64xi32>
    %36 = arith.cmpi sle, %32, %35 : vector<1x1x64xi32>
    %cst_19 = arith.constant 0.000000e+00 : f32
    %37 = vector.broadcast %cst_19 : f32 to vector<3x1x64xf32>
    %cst_20 = arith.constant 0.000000e+00 : f32
    %38 = vector.broadcast %cst_20 : f32 to vector<3x1x64xf32>
    %cst_21 = arith.constant 0.000000e+00 : f32
    %39 = vector.broadcast %cst_21 : f32 to vector<3x1x64xf32>
    %cst_22 = arith.constant 0.000000e+00 : f32
    %40 = vector.broadcast %cst_22 : f32 to vector<3x1x64xf32>
    %cst_23 = arith.constant 0.000000e+00 : f32
    %41 = vector.broadcast %cst_23 : f32 to vector<3x1x64xf32>
    %cst_24 = arith.constant 0.000000e+00 : f32
    %42 = vector.broadcast %cst_24 : f32 to vector<3x1x64xf32>
    %c0_25 = arith.constant 0 : index
    %c0_26 = arith.constant 0 : index
    %c0_27 = arith.constant 0 : index
    %43 = vector.load %arg7[%c0_25, %c0_26, %c0_27] : memref<3x8x82xf32, #tpu.memory_space<vmem>>, vector<3x8x64xf32>
    %cst_28 = arith.constant 0.000000e+00 : f32
    %44 = vector.shape_cast %34 : vector<1x1x64xi1> to vector<1x1x64xi1>
    %45 = vector.broadcast %44 : vector<1x1x64xi1> to vector<3x8x64xi1>
    %46 = vector.broadcast %cst_28 : f32 to vector<3x8x64xf32>
    %47 = arith.select %45, %43, %46 : vector<3x8x64xi1>, vector<3x8x64xf32>
    %c0_29 = arith.constant 0 : index
    %c0_30 = arith.constant 0 : index
    %48 = vector.load %arg4[%c0_29, %c0_30] : memref<8x27xf32, #tpu.memory_space<vmem>>, vector<8x1xf32>
    %49 = vector.shape_cast %48 : vector<8x1xf32> to vector<1x8x1xf32>
    %50 = vector.broadcast %49 : vector<1x8x1xf32> to vector<3x8x64xf32>
    %51 = arith.mulf %47, %50 : vector<3x8x64xf32>
    %52 = vector.extract_strided_slice %51 {offsets = [0, 0, 0], sizes = [3, 4, 64], strides = [1, 1, 1]} : vector<3x8x64xf32> to vector<3x4x64xf32>
    %cst_31 = arith.constant dense<0.000000e+00> : vector<3x64xf32>
    %53 = vector.multi_reduction <add>, %52, %cst_31 [1] : vector<3x4x64xf32> to vector<3x64xf32>
    %54 = vector.shape_cast %53 : vector<3x64xf32> to vector<3x1x64xf32>
    %55 = arith.addf %37, %54 : vector<3x1x64xf32>
    %56 = vector.extract_strided_slice %51 {offsets = [0, 4, 0], sizes = [3, 4, 64], strides = [1, 1, 1]} : vector<3x8x64xf32> to vector<3x4x64xf32>
    %cst_32 = arith.constant dense<0.000000e+00> : vector<3x64xf32>
    %57 = vector.multi_reduction <add>, %56, %cst_32 [1] : vector<3x4x64xf32> to vector<3x64xf32>
    %58 = vector.shape_cast %57 : vector<3x64xf32> to vector<3x1x64xf32>
    %59 = arith.addf %38, %58 : vector<3x1x64xf32>
    %c0_33 = arith.constant 0 : index
    %c9_34 = arith.constant 9 : index
    %60 = vector.load %arg4[%c0_33, %c9_34] : memref<8x27xf32, #tpu.memory_space<vmem>>, vector<8x1xf32>
    %61 = vector.shape_cast %60 : vector<8x1xf32> to vector<1x8x1xf32>
    %62 = vector.broadcast %61 : vector<1x8x1xf32> to vector<3x8x64xf32>
    %63 = arith.mulf %47, %62 : vector<3x8x64xf32>
    %64 = vector.extract_strided_slice %63 {offsets = [0, 0, 0], sizes = [3, 4, 64], strides = [1, 1, 1]} : vector<3x8x64xf32> to vector<3x4x64xf32>
    %cst_35 = arith.constant dense<0.000000e+00> : vector<3x64xf32>
    %65 = vector.multi_reduction <add>, %64, %cst_35 [1] : vector<3x4x64xf32> to vector<3x64xf32>
    %66 = vector.shape_cast %65 : vector<3x64xf32> to vector<3x1x64xf32>
    %67 = arith.addf %39, %66 : vector<3x1x64xf32>
    %68 = vector.extract_strided_slice %63 {offsets = [0, 4, 0], sizes = [3, 4, 64], strides = [1, 1, 1]} : vector<3x8x64xf32> to vector<3x4x64xf32>
    %cst_36 = arith.constant dense<0.000000e+00> : vector<3x64xf32>
    %69 = vector.multi_reduction <add>, %68, %cst_36 [1] : vector<3x4x64xf32> to vector<3x64xf32>
    %70 = vector.shape_cast %69 : vector<3x64xf32> to vector<3x1x64xf32>
    %71 = arith.addf %40, %70 : vector<3x1x64xf32>
    %c0_37 = arith.constant 0 : index
    %c18 = arith.constant 18 : index
    %72 = vector.load %arg4[%c0_37, %c18] : memref<8x27xf32, #tpu.memory_space<vmem>>, vector<8x1xf32>
    %73 = vector.shape_cast %72 : vector<8x1xf32> to vector<1x8x1xf32>
    %74 = vector.broadcast %73 : vector<1x8x1xf32> to vector<3x8x64xf32>
    %75 = arith.mulf %47, %74 : vector<3x8x64xf32>
    %76 = vector.extract_strided_slice %75 {offsets = [0, 0, 0], sizes = [3, 4, 64], strides = [1, 1, 1]} : vector<3x8x64xf32> to vector<3x4x64xf32>
    %cst_38 = arith.constant dense<0.000000e+00> : vector<3x64xf32>
    %77 = vector.multi_reduction <add>, %76, %cst_38 [1] : vector<3x4x64xf32> to vector<3x64xf32>
    %78 = vector.shape_cast %77 : vector<3x64xf32> to vector<3x1x64xf32>
    %79 = arith.addf %41, %78 : vector<3x1x64xf32>
    %80 = vector.extract_strided_slice %75 {offsets = [0, 4, 0], sizes = [3, 4, 64], strides = [1, 1, 1]} : vector<3x8x64xf32> to vector<3x4x64xf32>
    %cst_39 = arith.constant dense<0.000000e+00> : vector<3x64xf32>
    %81 = vector.multi_reduction <add>, %80, %cst_39 [1] : vector<3x4x64xf32> to vector<3x64xf32>
    %82 = vector.shape_cast %81 : vector<3x64xf32> to vector<3x1x64xf32>
    %83 = arith.addf %42, %82 : vector<3x1x64xf32>
    %c0_40 = arith.constant 0 : index
    %c0_41 = arith.constant 0 : index
    %c1 = arith.constant 1 : index
    %84 = vector.load %arg7[%c0_40, %c0_41, %c1] : memref<3x8x82xf32, #tpu.memory_space<vmem>>, vector<3x8x64xf32>
    %c0_42 = arith.constant 0 : index
    %c1_43 = arith.constant 1 : index
    %85 = vector.load %arg4[%c0_42, %c1_43] : memref<8x27xf32, #tpu.memory_space<vmem>>, vector<8x1xf32>
    %86 = vector.shape_cast %85 : vector<8x1xf32> to vector<1x8x1xf32>
    %87 = vector.broadcast %86 : vector<1x8x1xf32> to vector<3x8x64xf32>
    %88 = arith.mulf %84, %87 : vector<3x8x64xf32>
    %89 = vector.extract_strided_slice %88 {offsets = [0, 0, 0], sizes = [3, 4, 64], strides = [1, 1, 1]} : vector<3x8x64xf32> to vector<3x4x64xf32>
    %cst_44 = arith.constant dense<0.000000e+00> : vector<3x64xf32>
    %90 = vector.multi_reduction <add>, %89, %cst_44 [1] : vector<3x4x64xf32> to vector<3x64xf32>
    %91 = vector.shape_cast %90 : vector<3x64xf32> to vector<3x1x64xf32>
    %92 = arith.addf %55, %91 : vector<3x1x64xf32>
    %93 = vector.extract_strided_slice %88 {offsets = [0, 4, 0], sizes = [3, 4, 64], strides = [1, 1, 1]} : vector<3x8x64xf32> to vector<3x4x64xf32>
    %cst_45 = arith.constant dense<0.000000e+00> : vector<3x64xf32>
    %94 = vector.multi_reduction <add>, %93, %cst_45 [1] : vector<3x4x64xf32> to vector<3x64xf32>
    %95 = vector.shape_cast %94 : vector<3x64xf32> to vector<3x1x64xf32>
    %96 = arith.addf %59, %95 : vector<3x1x64xf32>
    %c0_46 = arith.constant 0 : index
    %c10 = arith.constant 10 : index
    %97 = vector.load %arg4[%c0_46, %c10] : memref<8x27xf32, #tpu.memory_space<vmem>>, vector<8x1xf32>
    %98 = vector.shape_cast %97 : vector<8x1xf32> to vector<1x8x1xf32>
    %99 = vector.broadcast %98 : vector<1x8x1xf32> to vector<3x8x64xf32>
    %100 = arith.mulf %84, %99 : vector<3x8x64xf32>
    %101 = vector.extract_strided_slice %100 {offsets = [0, 0, 0], sizes = [3, 4, 64], strides = [1, 1, 1]} : vector<3x8x64xf32> to vector<3x4x64xf32>
    %cst_47 = arith.constant dense<0.000000e+00> : vector<3x64xf32>
    %102 = vector.multi_reduction <add>, %101, %cst_47 [1] : vector<3x4x64xf32> to vector<3x64xf32>
    %103 = vector.shape_cast %102 : vector<3x64xf32> to vector<3x1x64xf32>
    %104 = arith.addf %67, %103 : vector<3x1x64xf32>
    %105 = vector.extract_strided_slice %100 {offsets = [0, 4, 0], sizes = [3, 4, 64], strides = [1, 1, 1]} : vector<3x8x64xf32> to vector<3x4x64xf32>
    %cst_48 = arith.constant dense<0.000000e+00> : vector<3x64xf32>
    %106 = vector.multi_reduction <add>, %105, %cst_48 [1] : vector<3x4x64xf32> to vector<3x64xf32>
    %107 = vector.shape_cast %106 : vector<3x64xf32> to vector<3x1x64xf32>
    %108 = arith.addf %71, %107 : vector<3x1x64xf32>
    %c0_49 = arith.constant 0 : index
    %c19 = arith.constant 19 : index
    %109 = vector.load %arg4[%c0_49, %c19] : memref<8x27xf32, #tpu.memory_space<vmem>>, vector<8x1xf32>
    %110 = vector.shape_cast %109 : vector<8x1xf32> to vector<1x8x1xf32>
    %111 = vector.broadcast %110 : vector<1x8x1xf32> to vector<3x8x64xf32>
    %112 = arith.mulf %84, %111 : vector<3x8x64xf32>
    %113 = vector.extract_strided_slice %112 {offsets = [0, 0, 0], sizes = [3, 4, 64], strides = [1, 1, 1]} : vector<3x8x64xf32> to vector<3x4x64xf32>
    %cst_50 = arith.constant dense<0.000000e+00> : vector<3x64xf32>
    %114 = vector.multi_reduction <add>, %113, %cst_50 [1] : vector<3x4x64xf32> to vector<3x64xf32>
    %115 = vector.shape_cast %114 : vector<3x64xf32> to vector<3x1x64xf32>
    %116 = arith.addf %79, %115 : vector<3x1x64xf32>
    %117 = vector.extract_strided_slice %112 {offsets = [0, 4, 0], sizes = [3, 4, 64], strides = [1, 1, 1]} : vector<3x8x64xf32> to vector<3x4x64xf32>
    %cst_51 = arith.constant dense<0.000000e+00> : vector<3x64xf32>
    %118 = vector.multi_reduction <add>, %117, %cst_51 [1] : vector<3x4x64xf32> to vector<3x64xf32>
    %119 = vector.shape_cast %118 : vector<3x64xf32> to vector<3x1x64xf32>
    %120 = arith.addf %83, %119 : vector<3x1x64xf32>
    %c0_52 = arith.constant 0 : index
    %c0_53 = arith.constant 0 : index
    %c2 = arith.constant 2 : index
    %121 = vector.load %arg7[%c0_52, %c0_53, %c2] : memref<3x8x82xf32, #tpu.memory_space<vmem>>, vector<3x8x64xf32>
    %cst_54 = arith.constant 0.000000e+00 : f32
    %122 = vector.shape_cast %36 : vector<1x1x64xi1> to vector<1x1x64xi1>
    %123 = vector.broadcast %122 : vector<1x1x64xi1> to vector<3x8x64xi1>
    %124 = vector.broadcast %cst_54 : f32 to vector<3x8x64xf32>
    %125 = arith.select %123, %121, %124 : vector<3x8x64xi1>, vector<3x8x64xf32>
    %c0_55 = arith.constant 0 : index
    %c2_56 = arith.constant 2 : index
    %126 = vector.load %arg4[%c0_55, %c2_56] : memref<8x27xf32, #tpu.memory_space<vmem>>, vector<8x1xf32>
    %127 = vector.shape_cast %126 : vector<8x1xf32> to vector<1x8x1xf32>
    %128 = vector.broadcast %127 : vector<1x8x1xf32> to vector<3x8x64xf32>
    %129 = arith.mulf %125, %128 : vector<3x8x64xf32>
    %130 = vector.extract_strided_slice %129 {offsets = [0, 0, 0], sizes = [3, 4, 64], strides = [1, 1, 1]} : vector<3x8x64xf32> to vector<3x4x64xf32>
    %cst_57 = arith.constant dense<0.000000e+00> : vector<3x64xf32>
    %131 = vector.multi_reduction <add>, %130, %cst_57 [1] : vector<3x4x64xf32> to vector<3x64xf32>
    %132 = vector.shape_cast %131 : vector<3x64xf32> to vector<3x1x64xf32>
    %133 = arith.addf %92, %132 : vector<3x1x64xf32>
    %134 = vector.extract_strided_slice %129 {offsets = [0, 4, 0], sizes = [3, 4, 64], strides = [1, 1, 1]} : vector<3x8x64xf32> to vector<3x4x64xf32>
    %cst_58 = arith.constant dense<0.000000e+00> : vector<3x64xf32>
    %135 = vector.multi_reduction <add>, %134, %cst_58 [1] : vector<3x4x64xf32> to vector<3x64xf32>
    %136 = vector.shape_cast %135 : vector<3x64xf32> to vector<3x1x64xf32>
    %137 = arith.addf %96, %136 : vector<3x1x64xf32>
    %c0_59 = arith.constant 0 : index
    %c11 = arith.constant 11 : index
    %138 = vector.load %arg4[%c0_59, %c11] : memref<8x27xf32, #tpu.memory_space<vmem>>, vector<8x1xf32>
    %139 = vector.shape_cast %138 : vector<8x1xf32> to vector<1x8x1xf32>
    %140 = vector.broadcast %139 : vector<1x8x1xf32> to vector<3x8x64xf32>
    %141 = arith.mulf %125, %140 : vector<3x8x64xf32>
    %142 = vector.extract_strided_slice %141 {offsets = [0, 0, 0], sizes = [3, 4, 64], strides = [1, 1, 1]} : vector<3x8x64xf32> to vector<3x4x64xf32>
    %cst_60 = arith.constant dense<0.000000e+00> : vector<3x64xf32>
    %143 = vector.multi_reduction <add>, %142, %cst_60 [1] : vector<3x4x64xf32> to vector<3x64xf32>
    %144 = vector.shape_cast %143 : vector<3x64xf32> to vector<3x1x64xf32>
    %145 = arith.addf %104, %144 : vector<3x1x64xf32>
    %146 = vector.extract_strided_slice %141 {offsets = [0, 4, 0], sizes = [3, 4, 64], strides = [1, 1, 1]} : vector<3x8x64xf32> to vector<3x4x64xf32>
    %cst_61 = arith.constant dense<0.000000e+00> : vector<3x64xf32>
    %147 = vector.multi_reduction <add>, %146, %cst_61 [1] : vector<3x4x64xf32> to vector<3x64xf32>
    %148 = vector.shape_cast %147 : vector<3x64xf32> to vector<3x1x64xf32>
    %149 = arith.addf %108, %148 : vector<3x1x64xf32>
    %c0_62 = arith.constant 0 : index
    %c20 = arith.constant 20 : index
    %150 = vector.load %arg4[%c0_62, %c20] : memref<8x27xf32, #tpu.memory_space<vmem>>, vector<8x1xf32>
    %151 = vector.shape_cast %150 : vector<8x1xf32> to vector<1x8x1xf32>
    %152 = vector.broadcast %151 : vector<1x8x1xf32> to vector<3x8x64xf32>
    %153 = arith.mulf %125, %152 : vector<3x8x64xf32>
    %154 = vector.extract_strided_slice %153 {offsets = [0, 0, 0], sizes = [3, 4, 64], strides = [1, 1, 1]} : vector<3x8x64xf32> to vector<3x4x64xf32>
    %cst_63 = arith.constant dense<0.000000e+00> : vector<3x64xf32>
    %155 = vector.multi_reduction <add>, %154, %cst_63 [1] : vector<3x4x64xf32> to vector<3x64xf32>
    %156 = vector.shape_cast %155 : vector<3x64xf32> to vector<3x1x64xf32>
    %157 = arith.addf %116, %156 : vector<3x1x64xf32>
    %158 = vector.extract_strided_slice %153 {offsets = [0, 4, 0], sizes = [3, 4, 64], strides = [1, 1, 1]} : vector<3x8x64xf32> to vector<3x4x64xf32>
    %cst_64 = arith.constant dense<0.000000e+00> : vector<3x64xf32>
    %159 = vector.multi_reduction <add>, %158, %cst_64 [1] : vector<3x4x64xf32> to vector<3x64xf32>
    %160 = vector.shape_cast %159 : vector<3x64xf32> to vector<3x1x64xf32>
    %161 = arith.addf %120, %160 : vector<3x1x64xf32>
    %c0_65 = arith.constant 0 : index
    %c0_66 = arith.constant 0 : index
    %c8 = arith.constant 8 : index
    %162 = vector.load %arg7[%c0_65, %c0_66, %c8] : memref<3x8x82xf32, #tpu.memory_space<vmem>>, vector<3x8x64xf32>
    %cst_67 = arith.constant 0.000000e+00 : f32
    %163 = vector.shape_cast %34 : vector<1x1x64xi1> to vector<1x1x64xi1>
    %164 = vector.broadcast %163 : vector<1x1x64xi1> to vector<3x8x64xi1>
    %165 = vector.broadcast %cst_67 : f32 to vector<3x8x64xf32>
    %166 = arith.select %164, %162, %165 : vector<3x8x64xi1>, vector<3x8x64xf32>
    %c0_68 = arith.constant 0 : index
    %c3 = arith.constant 3 : index
    %167 = vector.load %arg4[%c0_68, %c3] : memref<8x27xf32, #tpu.memory_space<vmem>>, vector<8x1xf32>
    %168 = vector.shape_cast %167 : vector<8x1xf32> to vector<1x8x1xf32>
    %169 = vector.broadcast %168 : vector<1x8x1xf32> to vector<3x8x64xf32>
    %170 = arith.mulf %166, %169 : vector<3x8x64xf32>
    %171 = vector.extract_strided_slice %170 {offsets = [0, 0, 0], sizes = [3, 4, 64], strides = [1, 1, 1]} : vector<3x8x64xf32> to vector<3x4x64xf32>
    %cst_69 = arith.constant dense<0.000000e+00> : vector<3x64xf32>
    %172 = vector.multi_reduction <add>, %171, %cst_69 [1] : vector<3x4x64xf32> to vector<3x64xf32>
    %173 = vector.shape_cast %172 : vector<3x64xf32> to vector<3x1x64xf32>
    %174 = arith.addf %133, %173 : vector<3x1x64xf32>
    %175 = vector.extract_strided_slice %170 {offsets = [0, 4, 0], sizes = [3, 4, 64], strides = [1, 1, 1]} : vector<3x8x64xf32> to vector<3x4x64xf32>
    %cst_70 = arith.constant dense<0.000000e+00> : vector<3x64xf32>
    %176 = vector.multi_reduction <add>, %175, %cst_70 [1] : vector<3x4x64xf32> to vector<3x64xf32>
    %177 = vector.shape_cast %176 : vector<3x64xf32> to vector<3x1x64xf32>
    %178 = arith.addf %137, %177 : vector<3x1x64xf32>
    %c0_71 = arith.constant 0 : index
    %c12 = arith.constant 12 : index
    %179 = vector.load %arg4[%c0_71, %c12] : memref<8x27xf32, #tpu.memory_space<vmem>>, vector<8x1xf32>
    %180 = vector.shape_cast %179 : vector<8x1xf32> to vector<1x8x1xf32>
    %181 = vector.broadcast %180 : vector<1x8x1xf32> to vector<3x8x64xf32>
    %182 = arith.mulf %166, %181 : vector<3x8x64xf32>
    %183 = vector.extract_strided_slice %182 {offsets = [0, 0, 0], sizes = [3, 4, 64], strides = [1, 1, 1]} : vector<3x8x64xf32> to vector<3x4x64xf32>
    %cst_72 = arith.constant dense<0.000000e+00> : vector<3x64xf32>
    %184 = vector.multi_reduction <add>, %183, %cst_72 [1] : vector<3x4x64xf32> to vector<3x64xf32>
    %185 = vector.shape_cast %184 : vector<3x64xf32> to vector<3x1x64xf32>
    %186 = arith.addf %145, %185 : vector<3x1x64xf32>
    %187 = vector.extract_strided_slice %182 {offsets = [0, 4, 0], sizes = [3, 4, 64], strides = [1, 1, 1]} : vector<3x8x64xf32> to vector<3x4x64xf32>
    %cst_73 = arith.constant dense<0.000000e+00> : vector<3x64xf32>
    %188 = vector.multi_reduction <add>, %187, %cst_73 [1] : vector<3x4x64xf32> to vector<3x64xf32>
    %189 = vector.shape_cast %188 : vector<3x64xf32> to vector<3x1x64xf32>
    %190 = arith.addf %149, %189 : vector<3x1x64xf32>
    %c0_74 = arith.constant 0 : index
    %c21 = arith.constant 21 : index
    %191 = vector.load %arg4[%c0_74, %c21] : memref<8x27xf32, #tpu.memory_space<vmem>>, vector<8x1xf32>
    %192 = vector.shape_cast %191 : vector<8x1xf32> to vector<1x8x1xf32>
    %193 = vector.broadcast %192 : vector<1x8x1xf32> to vector<3x8x64xf32>
    %194 = arith.mulf %166, %193 : vector<3x8x64xf32>
    %195 = vector.extract_strided_slice %194 {offsets = [0, 0, 0], sizes = [3, 4, 64], strides = [1, 1, 1]} : vector<3x8x64xf32> to vector<3x4x64xf32>
    %cst_75 = arith.constant dense<0.000000e+00> : vector<3x64xf32>
    %196 = vector.multi_reduction <add>, %195, %cst_75 [1] : vector<3x4x64xf32> to vector<3x64xf32>
    %197 = vector.shape_cast %196 : vector<3x64xf32> to vector<3x1x64xf32>
    %198 = arith.addf %157, %197 : vector<3x1x64xf32>
    %199 = vector.extract_strided_slice %194 {offsets = [0, 4, 0], sizes = [3, 4, 64], strides = [1, 1, 1]} : vector<3x8x64xf32> to vector<3x4x64xf32>
    %cst_76 = arith.constant dense<0.000000e+00> : vector<3x64xf32>
    %200 = vector.multi_reduction <add>, %199, %cst_76 [1] : vector<3x4x64xf32> to vector<3x64xf32>
    %201 = vector.shape_cast %200 : vector<3x64xf32> to vector<3x1x64xf32>
    %202 = arith.addf %161, %201 : vector<3x1x64xf32>
    %c0_77 = arith.constant 0 : index
    %c0_78 = arith.constant 0 : index
    %c9_79 = arith.constant 9 : index
    %203 = vector.load %arg7[%c0_77, %c0_78, %c9_79] : memref<3x8x82xf32, #tpu.memory_space<vmem>>, vector<3x8x64xf32>
    %c0_80 = arith.constant 0 : index
    %c4 = arith.constant 4 : index
    %204 = vector.load %arg4[%c0_80, %c4] : memref<8x27xf32, #tpu.memory_space<vmem>>, vector<8x1xf32>
    %205 = vector.shape_cast %204 : vector<8x1xf32> to vector<1x8x1xf32>
    %206 = vector.broadcast %205 : vector<1x8x1xf32> to vector<3x8x64xf32>
    %207 = arith.mulf %203, %206 : vector<3x8x64xf32>
    %208 = vector.extract_strided_slice %207 {offsets = [0, 0, 0], sizes = [3, 4, 64], strides = [1, 1, 1]} : vector<3x8x64xf32> to vector<3x4x64xf32>
    %cst_81 = arith.constant dense<0.000000e+00> : vector<3x64xf32>
    %209 = vector.multi_reduction <add>, %208, %cst_81 [1] : vector<3x4x64xf32> to vector<3x64xf32>
    %210 = vector.shape_cast %209 : vector<3x64xf32> to vector<3x1x64xf32>
    %211 = arith.addf %174, %210 : vector<3x1x64xf32>
    %212 = vector.extract_strided_slice %207 {offsets = [0, 4, 0], sizes = [3, 4, 64], strides = [1, 1, 1]} : vector<3x8x64xf32> to vector<3x4x64xf32>
    %cst_82 = arith.constant dense<0.000000e+00> : vector<3x64xf32>
    %213 = vector.multi_reduction <add>, %212, %cst_82 [1] : vector<3x4x64xf32> to vector<3x64xf32>
    %214 = vector.shape_cast %213 : vector<3x64xf32> to vector<3x1x64xf32>
    %215 = arith.addf %178, %214 : vector<3x1x64xf32>
    %c0_83 = arith.constant 0 : index
    %c13 = arith.constant 13 : index
    %216 = vector.load %arg4[%c0_83, %c13] : memref<8x27xf32, #tpu.memory_space<vmem>>, vector<8x1xf32>
    %217 = vector.shape_cast %216 : vector<8x1xf32> to vector<1x8x1xf32>
    %218 = vector.broadcast %217 : vector<1x8x1xf32> to vector<3x8x64xf32>
    %219 = arith.mulf %203, %218 : vector<3x8x64xf32>
    %220 = vector.extract_strided_slice %219 {offsets = [0, 0, 0], sizes = [3, 4, 64], strides = [1, 1, 1]} : vector<3x8x64xf32> to vector<3x4x64xf32>
    %cst_84 = arith.constant dense<0.000000e+00> : vector<3x64xf32>
    %221 = vector.multi_reduction <add>, %220, %cst_84 [1] : vector<3x4x64xf32> to vector<3x64xf32>
    %222 = vector.shape_cast %221 : vector<3x64xf32> to vector<3x1x64xf32>
    %223 = arith.addf %186, %222 : vector<3x1x64xf32>
    %224 = vector.extract_strided_slice %219 {offsets = [0, 4, 0], sizes = [3, 4, 64], strides = [1, 1, 1]} : vector<3x8x64xf32> to vector<3x4x64xf32>
    %cst_85 = arith.constant dense<0.000000e+00> : vector<3x64xf32>
    %225 = vector.multi_reduction <add>, %224, %cst_85 [1] : vector<3x4x64xf32> to vector<3x64xf32>
    %226 = vector.shape_cast %225 : vector<3x64xf32> to vector<3x1x64xf32>
    %227 = arith.addf %190, %226 : vector<3x1x64xf32>
    %c0_86 = arith.constant 0 : index
    %c22 = arith.constant 22 : index
    %228 = vector.load %arg4[%c0_86, %c22] : memref<8x27xf32, #tpu.memory_space<vmem>>, vector<8x1xf32>
    %229 = vector.shape_cast %228 : vector<8x1xf32> to vector<1x8x1xf32>
    %230 = vector.broadcast %229 : vector<1x8x1xf32> to vector<3x8x64xf32>
    %231 = arith.mulf %203, %230 : vector<3x8x64xf32>
    %232 = vector.extract_strided_slice %231 {offsets = [0, 0, 0], sizes = [3, 4, 64], strides = [1, 1, 1]} : vector<3x8x64xf32> to vector<3x4x64xf32>
    %cst_87 = arith.constant dense<0.000000e+00> : vector<3x64xf32>
    %233 = vector.multi_reduction <add>, %232, %cst_87 [1] : vector<3x4x64xf32> to vector<3x64xf32>
    %234 = vector.shape_cast %233 : vector<3x64xf32> to vector<3x1x64xf32>
    %235 = arith.addf %198, %234 : vector<3x1x64xf32>
    %236 = vector.extract_strided_slice %231 {offsets = [0, 4, 0], sizes = [3, 4, 64], strides = [1, 1, 1]} : vector<3x8x64xf32> to vector<3x4x64xf32>
    %cst_88 = arith.constant dense<0.000000e+00> : vector<3x64xf32>
    %237 = vector.multi_reduction <add>, %236, %cst_88 [1] : vector<3x4x64xf32> to vector<3x64xf32>
    %238 = vector.shape_cast %237 : vector<3x64xf32> to vector<3x1x64xf32>
    %239 = arith.addf %202, %238 : vector<3x1x64xf32>
    %c0_89 = arith.constant 0 : index
    %c0_90 = arith.constant 0 : index
    %c10_91 = arith.constant 10 : index
    %240 = vector.load %arg7[%c0_89, %c0_90, %c10_91] : memref<3x8x82xf32, #tpu.memory_space<vmem>>, vector<3x8x64xf32>
    %cst_92 = arith.constant 0.000000e+00 : f32
    %241 = vector.shape_cast %36 : vector<1x1x64xi1> to vector<1x1x64xi1>
    %242 = vector.broadcast %241 : vector<1x1x64xi1> to vector<3x8x64xi1>
    %243 = vector.broadcast %cst_92 : f32 to vector<3x8x64xf32>
    %244 = arith.select %242, %240, %243 : vector<3x8x64xi1>, vector<3x8x64xf32>
    %c0_93 = arith.constant 0 : index
    %c5 = arith.constant 5 : index
    %245 = vector.load %arg4[%c0_93, %c5] : memref<8x27xf32, #tpu.memory_space<vmem>>, vector<8x1xf32>
    %246 = vector.shape_cast %245 : vector<8x1xf32> to vector<1x8x1xf32>
    %247 = vector.broadcast %246 : vector<1x8x1xf32> to vector<3x8x64xf32>
    %248 = arith.mulf %244, %247 : vector<3x8x64xf32>
    %249 = vector.extract_strided_slice %248 {offsets = [0, 0, 0], sizes = [3, 4, 64], strides = [1, 1, 1]} : vector<3x8x64xf32> to vector<3x4x64xf32>
    %cst_94 = arith.constant dense<0.000000e+00> : vector<3x64xf32>
    %250 = vector.multi_reduction <add>, %249, %cst_94 [1] : vector<3x4x64xf32> to vector<3x64xf32>
    %251 = vector.shape_cast %250 : vector<3x64xf32> to vector<3x1x64xf32>
    %252 = arith.addf %211, %251 : vector<3x1x64xf32>
    %253 = vector.extract_strided_slice %248 {offsets = [0, 4, 0], sizes = [3, 4, 64], strides = [1, 1, 1]} : vector<3x8x64xf32> to vector<3x4x64xf32>
    %cst_95 = arith.constant dense<0.000000e+00> : vector<3x64xf32>
    %254 = vector.multi_reduction <add>, %253, %cst_95 [1] : vector<3x4x64xf32> to vector<3x64xf32>
    %255 = vector.shape_cast %254 : vector<3x64xf32> to vector<3x1x64xf32>
    %256 = arith.addf %215, %255 : vector<3x1x64xf32>
    %c0_96 = arith.constant 0 : index
    %c14 = arith.constant 14 : index
    %257 = vector.load %arg4[%c0_96, %c14] : memref<8x27xf32, #tpu.memory_space<vmem>>, vector<8x1xf32>
    %258 = vector.shape_cast %257 : vector<8x1xf32> to vector<1x8x1xf32>
    %259 = vector.broadcast %258 : vector<1x8x1xf32> to vector<3x8x64xf32>
    %260 = arith.mulf %244, %259 : vector<3x8x64xf32>
    %261 = vector.extract_strided_slice %260 {offsets = [0, 0, 0], sizes = [3, 4, 64], strides = [1, 1, 1]} : vector<3x8x64xf32> to vector<3x4x64xf32>
    %cst_97 = arith.constant dense<0.000000e+00> : vector<3x64xf32>
    %262 = vector.multi_reduction <add>, %261, %cst_97 [1] : vector<3x4x64xf32> to vector<3x64xf32>
    %263 = vector.shape_cast %262 : vector<3x64xf32> to vector<3x1x64xf32>
    %264 = arith.addf %223, %263 : vector<3x1x64xf32>
    %265 = vector.extract_strided_slice %260 {offsets = [0, 4, 0], sizes = [3, 4, 64], strides = [1, 1, 1]} : vector<3x8x64xf32> to vector<3x4x64xf32>
    %cst_98 = arith.constant dense<0.000000e+00> : vector<3x64xf32>
    %266 = vector.multi_reduction <add>, %265, %cst_98 [1] : vector<3x4x64xf32> to vector<3x64xf32>
    %267 = vector.shape_cast %266 : vector<3x64xf32> to vector<3x1x64xf32>
    %268 = arith.addf %227, %267 : vector<3x1x64xf32>
    %c0_99 = arith.constant 0 : index
    %c23 = arith.constant 23 : index
    %269 = vector.load %arg4[%c0_99, %c23] : memref<8x27xf32, #tpu.memory_space<vmem>>, vector<8x1xf32>
    %270 = vector.shape_cast %269 : vector<8x1xf32> to vector<1x8x1xf32>
    %271 = vector.broadcast %270 : vector<1x8x1xf32> to vector<3x8x64xf32>
    %272 = arith.mulf %244, %271 : vector<3x8x64xf32>
    %273 = vector.extract_strided_slice %272 {offsets = [0, 0, 0], sizes = [3, 4, 64], strides = [1, 1, 1]} : vector<3x8x64xf32> to vector<3x4x64xf32>
    %cst_100 = arith.constant dense<0.000000e+00> : vector<3x64xf32>
    %274 = vector.multi_reduction <add>, %273, %cst_100 [1] : vector<3x4x64xf32> to vector<3x64xf32>
    %275 = vector.shape_cast %274 : vector<3x64xf32> to vector<3x1x64xf32>
    %276 = arith.addf %235, %275 : vector<3x1x64xf32>
    %277 = vector.extract_strided_slice %272 {offsets = [0, 4, 0], sizes = [3, 4, 64], strides = [1, 1, 1]} : vector<3x8x64xf32> to vector<3x4x64xf32>
    %cst_101 = arith.constant dense<0.000000e+00> : vector<3x64xf32>
    %278 = vector.multi_reduction <add>, %277, %cst_101 [1] : vector<3x4x64xf32> to vector<3x64xf32>
    %279 = vector.shape_cast %278 : vector<3x64xf32> to vector<3x1x64xf32>
    %280 = arith.addf %239, %279 : vector<3x1x64xf32>
    %c0_102 = arith.constant 0 : index
    %c0_103 = arith.constant 0 : index
    %c16 = arith.constant 16 : index
    %281 = vector.load %arg7[%c0_102, %c0_103, %c16] : memref<3x8x82xf32, #tpu.memory_space<vmem>>, vector<3x8x64xf32>
    %cst_104 = arith.constant 0.000000e+00 : f32
    %282 = vector.shape_cast %34 : vector<1x1x64xi1> to vector<1x1x64xi1>
    %283 = vector.broadcast %282 : vector<1x1x64xi1> to vector<3x8x64xi1>
    %284 = vector.broadcast %cst_104 : f32 to vector<3x8x64xf32>
    %285 = arith.select %283, %281, %284 : vector<3x8x64xi1>, vector<3x8x64xf32>
    %c0_105 = arith.constant 0 : index
    %c6 = arith.constant 6 : index
    %286 = vector.load %arg4[%c0_105, %c6] : memref<8x27xf32, #tpu.memory_space<vmem>>, vector<8x1xf32>
    %287 = vector.shape_cast %286 : vector<8x1xf32> to vector<1x8x1xf32>
    %288 = vector.broadcast %287 : vector<1x8x1xf32> to vector<3x8x64xf32>
    %289 = arith.mulf %285, %288 : vector<3x8x64xf32>
    %290 = vector.extract_strided_slice %289 {offsets = [0, 0, 0], sizes = [3, 4, 64], strides = [1, 1, 1]} : vector<3x8x64xf32> to vector<3x4x64xf32>
    %cst_106 = arith.constant dense<0.000000e+00> : vector<3x64xf32>
    %291 = vector.multi_reduction <add>, %290, %cst_106 [1] : vector<3x4x64xf32> to vector<3x64xf32>
    %292 = vector.shape_cast %291 : vector<3x64xf32> to vector<3x1x64xf32>
    %293 = arith.addf %252, %292 : vector<3x1x64xf32>
    %294 = vector.extract_strided_slice %289 {offsets = [0, 4, 0], sizes = [3, 4, 64], strides = [1, 1, 1]} : vector<3x8x64xf32> to vector<3x4x64xf32>
    %cst_107 = arith.constant dense<0.000000e+00> : vector<3x64xf32>
    %295 = vector.multi_reduction <add>, %294, %cst_107 [1] : vector<3x4x64xf32> to vector<3x64xf32>
    %296 = vector.shape_cast %295 : vector<3x64xf32> to vector<3x1x64xf32>
    %297 = arith.addf %256, %296 : vector<3x1x64xf32>
    %c0_108 = arith.constant 0 : index
    %c15 = arith.constant 15 : index
    %298 = vector.load %arg4[%c0_108, %c15] : memref<8x27xf32, #tpu.memory_space<vmem>>, vector<8x1xf32>
    %299 = vector.shape_cast %298 : vector<8x1xf32> to vector<1x8x1xf32>
    %300 = vector.broadcast %299 : vector<1x8x1xf32> to vector<3x8x64xf32>
    %301 = arith.mulf %285, %300 : vector<3x8x64xf32>
    %302 = vector.extract_strided_slice %301 {offsets = [0, 0, 0], sizes = [3, 4, 64], strides = [1, 1, 1]} : vector<3x8x64xf32> to vector<3x4x64xf32>
    %cst_109 = arith.constant dense<0.000000e+00> : vector<3x64xf32>
    %303 = vector.multi_reduction <add>, %302, %cst_109 [1] : vector<3x4x64xf32> to vector<3x64xf32>
    %304 = vector.shape_cast %303 : vector<3x64xf32> to vector<3x1x64xf32>
    %305 = arith.addf %264, %304 : vector<3x1x64xf32>
    %306 = vector.extract_strided_slice %301 {offsets = [0, 4, 0], sizes = [3, 4, 64], strides = [1, 1, 1]} : vector<3x8x64xf32> to vector<3x4x64xf32>
    %cst_110 = arith.constant dense<0.000000e+00> : vector<3x64xf32>
    %307 = vector.multi_reduction <add>, %306, %cst_110 [1] : vector<3x4x64xf32> to vector<3x64xf32>
    %308 = vector.shape_cast %307 : vector<3x64xf32> to vector<3x1x64xf32>
    %309 = arith.addf %268, %308 : vector<3x1x64xf32>
    %c0_111 = arith.constant 0 : index
    %c24 = arith.constant 24 : index
    %310 = vector.load %arg4[%c0_111, %c24] : memref<8x27xf32, #tpu.memory_space<vmem>>, vector<8x1xf32>
    %311 = vector.shape_cast %310 : vector<8x1xf32> to vector<1x8x1xf32>
    %312 = vector.broadcast %311 : vector<1x8x1xf32> to vector<3x8x64xf32>
    %313 = arith.mulf %285, %312 : vector<3x8x64xf32>
    %314 = vector.extract_strided_slice %313 {offsets = [0, 0, 0], sizes = [3, 4, 64], strides = [1, 1, 1]} : vector<3x8x64xf32> to vector<3x4x64xf32>
    %cst_112 = arith.constant dense<0.000000e+00> : vector<3x64xf32>
    %315 = vector.multi_reduction <add>, %314, %cst_112 [1] : vector<3x4x64xf32> to vector<3x64xf32>
    %316 = vector.shape_cast %315 : vector<3x64xf32> to vector<3x1x64xf32>
    %317 = arith.addf %276, %316 : vector<3x1x64xf32>
    %318 = vector.extract_strided_slice %313 {offsets = [0, 4, 0], sizes = [3, 4, 64], strides = [1, 1, 1]} : vector<3x8x64xf32> to vector<3x4x64xf32>
    %cst_113 = arith.constant dense<0.000000e+00> : vector<3x64xf32>
    %319 = vector.multi_reduction <add>, %318, %cst_113 [1] : vector<3x4x64xf32> to vector<3x64xf32>
    %320 = vector.shape_cast %319 : vector<3x64xf32> to vector<3x1x64xf32>
    %321 = arith.addf %280, %320 : vector<3x1x64xf32>
    %c0_114 = arith.constant 0 : index
    %c0_115 = arith.constant 0 : index
    %c17 = arith.constant 17 : index
    %322 = vector.load %arg7[%c0_114, %c0_115, %c17] : memref<3x8x82xf32, #tpu.memory_space<vmem>>, vector<3x8x64xf32>
    %c0_116 = arith.constant 0 : index
    %c7 = arith.constant 7 : index
    %323 = vector.load %arg4[%c0_116, %c7] : memref<8x27xf32, #tpu.memory_space<vmem>>, vector<8x1xf32>
    %324 = vector.shape_cast %323 : vector<8x1xf32> to vector<1x8x1xf32>
    %325 = vector.broadcast %324 : vector<1x8x1xf32> to vector<3x8x64xf32>
    %326 = arith.mulf %322, %325 : vector<3x8x64xf32>
    %327 = vector.extract_strided_slice %326 {offsets = [0, 0, 0], sizes = [3, 4, 64], strides = [1, 1, 1]} : vector<3x8x64xf32> to vector<3x4x64xf32>
    %cst_117 = arith.constant dense<0.000000e+00> : vector<3x64xf32>
    %328 = vector.multi_reduction <add>, %327, %cst_117 [1] : vector<3x4x64xf32> to vector<3x64xf32>
    %329 = vector.shape_cast %328 : vector<3x64xf32> to vector<3x1x64xf32>
    %330 = arith.addf %293, %329 : vector<3x1x64xf32>
    %331 = vector.extract_strided_slice %326 {offsets = [0, 4, 0], sizes = [3, 4, 64], strides = [1, 1, 1]} : vector<3x8x64xf32> to vector<3x4x64xf32>
    %cst_118 = arith.constant dense<0.000000e+00> : vector<3x64xf32>
    %332 = vector.multi_reduction <add>, %331, %cst_118 [1] : vector<3x4x64xf32> to vector<3x64xf32>
    %333 = vector.shape_cast %332 : vector<3x64xf32> to vector<3x1x64xf32>
    %334 = arith.addf %297, %333 : vector<3x1x64xf32>
    %c0_119 = arith.constant 0 : index
    %c16_120 = arith.constant 16 : index
    %335 = vector.load %arg4[%c0_119, %c16_120] : memref<8x27xf32, #tpu.memory_space<vmem>>, vector<8x1xf32>
    %336 = vector.shape_cast %335 : vector<8x1xf32> to vector<1x8x1xf32>
    %337 = vector.broadcast %336 : vector<1x8x1xf32> to vector<3x8x64xf32>
    %338 = arith.mulf %322, %337 : vector<3x8x64xf32>
    %339 = vector.extract_strided_slice %338 {offsets = [0, 0, 0], sizes = [3, 4, 64], strides = [1, 1, 1]} : vector<3x8x64xf32> to vector<3x4x64xf32>
    %cst_121 = arith.constant dense<0.000000e+00> : vector<3x64xf32>
    %340 = vector.multi_reduction <add>, %339, %cst_121 [1] : vector<3x4x64xf32> to vector<3x64xf32>
    %341 = vector.shape_cast %340 : vector<3x64xf32> to vector<3x1x64xf32>
    %342 = arith.addf %305, %341 : vector<3x1x64xf32>
    %343 = vector.extract_strided_slice %338 {offsets = [0, 4, 0], sizes = [3, 4, 64], strides = [1, 1, 1]} : vector<3x8x64xf32> to vector<3x4x64xf32>
    %cst_122 = arith.constant dense<0.000000e+00> : vector<3x64xf32>
    %344 = vector.multi_reduction <add>, %343, %cst_122 [1] : vector<3x4x64xf32> to vector<3x64xf32>
    %345 = vector.shape_cast %344 : vector<3x64xf32> to vector<3x1x64xf32>
    %346 = arith.addf %309, %345 : vector<3x1x64xf32>
    %c0_123 = arith.constant 0 : index
    %c25 = arith.constant 25 : index
    %347 = vector.load %arg4[%c0_123, %c25] : memref<8x27xf32, #tpu.memory_space<vmem>>, vector<8x1xf32>
    %348 = vector.shape_cast %347 : vector<8x1xf32> to vector<1x8x1xf32>
    %349 = vector.broadcast %348 : vector<1x8x1xf32> to vector<3x8x64xf32>
    %350 = arith.mulf %322, %349 : vector<3x8x64xf32>
    %351 = vector.extract_strided_slice %350 {offsets = [0, 0, 0], sizes = [3, 4, 64], strides = [1, 1, 1]} : vector<3x8x64xf32> to vector<3x4x64xf32>
    %cst_124 = arith.constant dense<0.000000e+00> : vector<3x64xf32>
    %352 = vector.multi_reduction <add>, %351, %cst_124 [1] : vector<3x4x64xf32> to vector<3x64xf32>
    %353 = vector.shape_cast %352 : vector<3x64xf32> to vector<3x1x64xf32>
    %354 = arith.addf %317, %353 : vector<3x1x64xf32>
    %355 = vector.extract_strided_slice %350 {offsets = [0, 4, 0], sizes = [3, 4, 64], strides = [1, 1, 1]} : vector<3x8x64xf32> to vector<3x4x64xf32>
    %cst_125 = arith.constant dense<0.000000e+00> : vector<3x64xf32>
    %356 = vector.multi_reduction <add>, %355, %cst_125 [1] : vector<3x4x64xf32> to vector<3x64xf32>
    %357 = vector.shape_cast %356 : vector<3x64xf32> to vector<3x1x64xf32>
    %358 = arith.addf %321, %357 : vector<3x1x64xf32>
    %c0_126 = arith.constant 0 : index
    %c0_127 = arith.constant 0 : index
    %c18_128 = arith.constant 18 : index
    %359 = vector.load %arg7[%c0_126, %c0_127, %c18_128] : memref<3x8x82xf32, #tpu.memory_space<vmem>>, vector<3x8x64xf32>
    %cst_129 = arith.constant 0.000000e+00 : f32
    %360 = vector.shape_cast %36 : vector<1x1x64xi1> to vector<1x1x64xi1>
    %361 = vector.broadcast %360 : vector<1x1x64xi1> to vector<3x8x64xi1>
    %362 = vector.broadcast %cst_129 : f32 to vector<3x8x64xf32>
    %363 = arith.select %361, %359, %362 : vector<3x8x64xi1>, vector<3x8x64xf32>
    %c0_130 = arith.constant 0 : index
    %c8_131 = arith.constant 8 : index
    %364 = vector.load %arg4[%c0_130, %c8_131] : memref<8x27xf32, #tpu.memory_space<vmem>>, vector<8x1xf32>
    %365 = vector.shape_cast %364 : vector<8x1xf32> to vector<1x8x1xf32>
    %366 = vector.broadcast %365 : vector<1x8x1xf32> to vector<3x8x64xf32>
    %367 = arith.mulf %363, %366 : vector<3x8x64xf32>
    %368 = vector.extract_strided_slice %367 {offsets = [0, 0, 0], sizes = [3, 4, 64], strides = [1, 1, 1]} : vector<3x8x64xf32> to vector<3x4x64xf32>
    %cst_132 = arith.constant dense<0.000000e+00> : vector<3x64xf32>
    %369 = vector.multi_reduction <add>, %368, %cst_132 [1] : vector<3x4x64xf32> to vector<3x64xf32>
    %370 = vector.shape_cast %369 : vector<3x64xf32> to vector<3x1x64xf32>
    %371 = arith.addf %330, %370 : vector<3x1x64xf32>
    %372 = vector.extract_strided_slice %367 {offsets = [0, 4, 0], sizes = [3, 4, 64], strides = [1, 1, 1]} : vector<3x8x64xf32> to vector<3x4x64xf32>
    %cst_133 = arith.constant dense<0.000000e+00> : vector<3x64xf32>
    %373 = vector.multi_reduction <add>, %372, %cst_133 [1] : vector<3x4x64xf32> to vector<3x64xf32>
    %374 = vector.shape_cast %373 : vector<3x64xf32> to vector<3x1x64xf32>
    %375 = arith.addf %334, %374 : vector<3x1x64xf32>
    %c0_134 = arith.constant 0 : index
    %c17_135 = arith.constant 17 : index
    %376 = vector.load %arg4[%c0_134, %c17_135] : memref<8x27xf32, #tpu.memory_space<vmem>>, vector<8x1xf32>
    %377 = vector.shape_cast %376 : vector<8x1xf32> to vector<1x8x1xf32>
    %378 = vector.broadcast %377 : vector<1x8x1xf32> to vector<3x8x64xf32>
    %379 = arith.mulf %363, %378 : vector<3x8x64xf32>
    %380 = vector.extract_strided_slice %379 {offsets = [0, 0, 0], sizes = [3, 4, 64], strides = [1, 1, 1]} : vector<3x8x64xf32> to vector<3x4x64xf32>
    %cst_136 = arith.constant dense<0.000000e+00> : vector<3x64xf32>
    %381 = vector.multi_reduction <add>, %380, %cst_136 [1] : vector<3x4x64xf32> to vector<3x64xf32>
    %382 = vector.shape_cast %381 : vector<3x64xf32> to vector<3x1x64xf32>
    %383 = arith.addf %342, %382 : vector<3x1x64xf32>
    %384 = vector.extract_strided_slice %379 {offsets = [0, 4, 0], sizes = [3, 4, 64], strides = [1, 1, 1]} : vector<3x8x64xf32> to vector<3x4x64xf32>
    %cst_137 = arith.constant dense<0.000000e+00> : vector<3x64xf32>
    %385 = vector.multi_reduction <add>, %384, %cst_137 [1] : vector<3x4x64xf32> to vector<3x64xf32>
    %386 = vector.shape_cast %385 : vector<3x64xf32> to vector<3x1x64xf32>
    %387 = arith.addf %346, %386 : vector<3x1x64xf32>
    %c0_138 = arith.constant 0 : index
    %c26 = arith.constant 26 : index
    %388 = vector.load %arg4[%c0_138, %c26] : memref<8x27xf32, #tpu.memory_space<vmem>>, vector<8x1xf32>
    %389 = vector.shape_cast %388 : vector<8x1xf32> to vector<1x8x1xf32>
    %390 = vector.broadcast %389 : vector<1x8x1xf32> to vector<3x8x64xf32>
    %391 = arith.mulf %363, %390 : vector<3x8x64xf32>
    %392 = vector.extract_strided_slice %391 {offsets = [0, 0, 0], sizes = [3, 4, 64], strides = [1, 1, 1]} : vector<3x8x64xf32> to vector<3x4x64xf32>
    %cst_139 = arith.constant dense<0.000000e+00> : vector<3x64xf32>
    %393 = vector.multi_reduction <add>, %392, %cst_139 [1] : vector<3x4x64xf32> to vector<3x64xf32>
    %394 = vector.shape_cast %393 : vector<3x64xf32> to vector<3x1x64xf32>
    %395 = arith.addf %354, %394 : vector<3x1x64xf32>
    %396 = vector.extract_strided_slice %391 {offsets = [0, 4, 0], sizes = [3, 4, 64], strides = [1, 1, 1]} : vector<3x8x64xf32> to vector<3x4x64xf32>
    %cst_140 = arith.constant dense<0.000000e+00> : vector<3x64xf32>
    %397 = vector.multi_reduction <add>, %396, %cst_140 [1] : vector<3x4x64xf32> to vector<3x64xf32>
    %398 = vector.shape_cast %397 : vector<3x64xf32> to vector<3x1x64xf32>
    %399 = arith.addf %358, %398 : vector<3x1x64xf32>
    %cst_141 = arith.constant 0.000000e+00 : f32
    %400 = vector.broadcast %cst_141 : f32 to vector<1x1x64xf32>
    %401 = vector.extract_strided_slice %371 {offsets = [0, 0, 0], sizes = [2, 1, 64], strides = [1, 1, 1]} : vector<3x1x64xf32> to vector<2x1x64xf32>
    %402 = tpu.concatenate %400, %401 in 0 : vector<1x1x64xf32>, vector<2x1x64xf32> -> vector<3x1x64xf32>
    %403 = arith.addf %383, %402 : vector<3x1x64xf32>
    %404 = vector.extract_strided_slice %395 {offsets = [1, 0, 0], sizes = [2, 1, 64], strides = [1, 1, 1]} : vector<3x1x64xf32> to vector<2x1x64xf32>
    %405 = tpu.concatenate %404, %400 in 0 : vector<2x1x64xf32>, vector<1x1x64xf32> -> vector<3x1x64xf32>
    %406 = arith.addf %403, %405 : vector<3x1x64xf32>
    %c0_142 = arith.constant 0 : index
    %407 = memref.load %arg5[%c0_142] : memref<2xf32, #tpu.memory_space<smem>>
    %408 = vector.broadcast %407 : f32 to vector<3x1x64xf32>
    %409 = arith.addf %406, %408 : vector<3x1x64xf32>
    %410 = math.tanh %409 : vector<3x1x64xf32>
    %411 = vector.extract_strided_slice %375 {offsets = [0, 0, 0], sizes = [2, 1, 64], strides = [1, 1, 1]} : vector<3x1x64xf32> to vector<2x1x64xf32>
    %412 = tpu.concatenate %400, %411 in 0 : vector<1x1x64xf32>, vector<2x1x64xf32> -> vector<3x1x64xf32>
    %413 = arith.addf %387, %412 : vector<3x1x64xf32>
    %414 = vector.extract_strided_slice %399 {offsets = [1, 0, 0], sizes = [2, 1, 64], strides = [1, 1, 1]} : vector<3x1x64xf32> to vector<2x1x64xf32>
    %415 = tpu.concatenate %414, %400 in 0 : vector<2x1x64xf32>, vector<1x1x64xf32> -> vector<3x1x64xf32>
    %416 = arith.addf %413, %415 : vector<3x1x64xf32>
    %c1_143 = arith.constant 1 : index
    %417 = memref.load %arg5[%c1_143] : memref<2xf32, #tpu.memory_space<smem>>
    %418 = vector.broadcast %417 : f32 to vector<3x1x64xf32>
    %419 = arith.addf %416, %418 : vector<3x1x64xf32>
    %420 = math.tanh %419 : vector<3x1x64xf32>
    %c0_144 = arith.constant 0 : index
    %c0_145 = arith.constant 0 : index
    %c0_146 = arith.constant 0 : index
    %c0_147 = arith.constant 0 : index
    %421 = vector.load %arg1[%c0_144, %c0_145, %c0_146, %c0_147] : memref<1x3x8x64xf32, #tpu.memory_space<vmem>>, vector<1x3x4x64xf32>
    %422 = vector.shape_cast %421 : vector<1x3x4x64xf32> to vector<3x4x64xf32>
    %c0_148 = arith.constant 0 : index
    %c0_149 = arith.constant 0 : index
    %c4_150 = arith.constant 4 : index
    %c0_151 = arith.constant 0 : index
    %423 = vector.load %arg1[%c0_148, %c0_149, %c4_150, %c0_151] : memref<1x3x8x64xf32, #tpu.memory_space<vmem>>, vector<1x3x4x64xf32>
    %424 = vector.shape_cast %423 : vector<1x3x4x64xf32> to vector<3x4x64xf32>
    %425 = vector.broadcast %410 : vector<3x1x64xf32> to vector<3x4x64xf32>
    %426 = arith.mulf %425, %422 : vector<3x4x64xf32>
    %427 = vector.broadcast %420 : vector<3x1x64xf32> to vector<3x4x64xf32>
    %428 = arith.mulf %427, %424 : vector<3x4x64xf32>
    %429 = arith.subf %422, %426 : vector<3x4x64xf32>
    %430 = arith.subf %424, %428 : vector<3x4x64xf32>
    %cst_152 = arith.constant 0.000000e+00 : f32
    %431 = vector.broadcast %cst_152 : f32 to vector<1x4x64xf32>
    %432 = vector.extract_strided_slice %426 {offsets = [1, 0, 0], sizes = [2, 4, 64], strides = [1, 1, 1]} : vector<3x4x64xf32> to vector<2x4x64xf32>
    %433 = tpu.concatenate %432, %431 in 0 : vector<2x4x64xf32>, vector<1x4x64xf32> -> vector<3x4x64xf32>
    %434 = arith.addf %433, %429 : vector<3x4x64xf32>
    %435 = vector.extract_strided_slice %428 {offsets = [0, 0, 0], sizes = [2, 4, 64], strides = [1, 1, 1]} : vector<3x4x64xf32> to vector<2x4x64xf32>
    %436 = tpu.concatenate %431, %435 in 0 : vector<1x4x64xf32>, vector<2x4x64xf32> -> vector<3x4x64xf32>
    %437 = arith.addf %436, %430 : vector<3x4x64xf32>
    %438 = vector.extract_strided_slice %434 {offsets = [0, 0, 0], sizes = [3, 1, 64], strides = [1, 1, 1]} : vector<3x4x64xf32> to vector<3x1x64xf32>
    %c0_153 = arith.constant 0 : index
    %c0_154 = arith.constant 0 : index
    %c0_155 = arith.constant 0 : index
    %c0_156 = arith.constant 0 : index
    %439 = vector.load %arg6[%c0_153, %c0_154, %c0_155, %c0_156] : memref<1x3x8x64xf32, #tpu.memory_space<vmem>>, vector<1x3x1x64xf32>
    %440 = vector.shape_cast %439 : vector<1x3x1x64xf32> to vector<3x1x64xf32>
    %441 = vector.shape_cast %438 : vector<3x1x64xf32> to vector<1x3x1x64xf32>
    tpu.vector_store %arg6[%c0_153, %c0_154, %c0_155, %c0_156], %441 {strides = array<i32>} : memref<1x3x8x64xf32, #tpu.memory_space<vmem>>, vector<1x3x1x64xf32>,
    %442 = vector.extract_strided_slice %434 {offsets = [0, 2, 0], sizes = [3, 1, 64], strides = [1, 1, 1]} : vector<3x4x64xf32> to vector<3x1x64xf32>
    %c0_157 = arith.constant 0 : index
    %c0_158 = arith.constant 0 : index
    %c1_159 = arith.constant 1 : index
    %c0_160 = arith.constant 0 : index
    %443 = vector.load %arg6[%c0_157, %c0_158, %c1_159, %c0_160] : memref<1x3x8x64xf32, #tpu.memory_space<vmem>>, vector<1x3x1x64xf32>
    %444 = vector.shape_cast %443 : vector<1x3x1x64xf32> to vector<3x1x64xf32>
    %445 = vector.shape_cast %442 : vector<3x1x64xf32> to vector<1x3x1x64xf32>
    tpu.vector_store %arg6[%c0_157, %c0_158, %c1_159, %c0_160], %445 {strides = array<i32>} : memref<1x3x8x64xf32, #tpu.memory_space<vmem>>, vector<1x3x1x64xf32>,
    %446 = vector.extract_strided_slice %434 {offsets = [0, 1, 0], sizes = [3, 1, 64], strides = [1, 1, 1]} : vector<3x4x64xf32> to vector<3x1x64xf32>
    %c0_161 = arith.constant 0 : index
    %c0_162 = arith.constant 0 : index
    %c2_163 = arith.constant 2 : index
    %c0_164 = arith.constant 0 : index
    %447 = vector.load %arg6[%c0_161, %c0_162, %c2_163, %c0_164] : memref<1x3x8x64xf32, #tpu.memory_space<vmem>>, vector<1x3x1x64xf32>
    %448 = vector.shape_cast %447 : vector<1x3x1x64xf32> to vector<3x1x64xf32>
    %449 = vector.shape_cast %446 : vector<3x1x64xf32> to vector<1x3x1x64xf32>
    tpu.vector_store %arg6[%c0_161, %c0_162, %c2_163, %c0_164], %449 {strides = array<i32>} : memref<1x3x8x64xf32, #tpu.memory_space<vmem>>, vector<1x3x1x64xf32>,
    %450 = vector.extract_strided_slice %434 {offsets = [0, 3, 0], sizes = [3, 1, 64], strides = [1, 1, 1]} : vector<3x4x64xf32> to vector<3x1x64xf32>
    %c0_165 = arith.constant 0 : index
    %c0_166 = arith.constant 0 : index
    %c3_167 = arith.constant 3 : index
    %c0_168 = arith.constant 0 : index
    %451 = vector.load %arg6[%c0_165, %c0_166, %c3_167, %c0_168] : memref<1x3x8x64xf32, #tpu.memory_space<vmem>>, vector<1x3x1x64xf32>
    %452 = vector.shape_cast %451 : vector<1x3x1x64xf32> to vector<3x1x64xf32>
    %453 = vector.shape_cast %450 : vector<3x1x64xf32> to vector<1x3x1x64xf32>
    tpu.vector_store %arg6[%c0_165, %c0_166, %c3_167, %c0_168], %453 {strides = array<i32>} : memref<1x3x8x64xf32, #tpu.memory_space<vmem>>, vector<1x3x1x64xf32>,
    %454 = vector.extract_strided_slice %437 {offsets = [0, 0, 0], sizes = [3, 1, 64], strides = [1, 1, 1]} : vector<3x4x64xf32> to vector<3x1x64xf32>
    %c0_169 = arith.constant 0 : index
    %c0_170 = arith.constant 0 : index
    %c4_171 = arith.constant 4 : index
    %c0_172 = arith.constant 0 : index
    %455 = vector.load %arg6[%c0_169, %c0_170, %c4_171, %c0_172] : memref<1x3x8x64xf32, #tpu.memory_space<vmem>>, vector<1x3x1x64xf32>
    %456 = vector.shape_cast %455 : vector<1x3x1x64xf32> to vector<3x1x64xf32>
    %457 = vector.shape_cast %454 : vector<3x1x64xf32> to vector<1x3x1x64xf32>
    tpu.vector_store %arg6[%c0_169, %c0_170, %c4_171, %c0_172], %457 {strides = array<i32>} : memref<1x3x8x64xf32, #tpu.memory_space<vmem>>, vector<1x3x1x64xf32>,
    %458 = vector.extract_strided_slice %437 {offsets = [0, 2, 0], sizes = [3, 1, 64], strides = [1, 1, 1]} : vector<3x4x64xf32> to vector<3x1x64xf32>
    %c0_173 = arith.constant 0 : index
    %c0_174 = arith.constant 0 : index
    %c5_175 = arith.constant 5 : index
    %c0_176 = arith.constant 0 : index
    %459 = vector.load %arg6[%c0_173, %c0_174, %c5_175, %c0_176] : memref<1x3x8x64xf32, #tpu.memory_space<vmem>>, vector<1x3x1x64xf32>
    %460 = vector.shape_cast %459 : vector<1x3x1x64xf32> to vector<3x1x64xf32>
    %461 = vector.shape_cast %458 : vector<3x1x64xf32> to vector<1x3x1x64xf32>
    tpu.vector_store %arg6[%c0_173, %c0_174, %c5_175, %c0_176], %461 {strides = array<i32>} : memref<1x3x8x64xf32, #tpu.memory_space<vmem>>, vector<1x3x1x64xf32>,
    %462 = vector.extract_strided_slice %437 {offsets = [0, 1, 0], sizes = [3, 1, 64], strides = [1, 1, 1]} : vector<3x4x64xf32> to vector<3x1x64xf32>
    %c0_177 = arith.constant 0 : index
    %c0_178 = arith.constant 0 : index
    %c6_179 = arith.constant 6 : index
    %c0_180 = arith.constant 0 : index
    %463 = vector.load %arg6[%c0_177, %c0_178, %c6_179, %c0_180] : memref<1x3x8x64xf32, #tpu.memory_space<vmem>>, vector<1x3x1x64xf32>
    %464 = vector.shape_cast %463 : vector<1x3x1x64xf32> to vector<3x1x64xf32>
    %465 = vector.shape_cast %462 : vector<3x1x64xf32> to vector<1x3x1x64xf32>
    tpu.vector_store %arg6[%c0_177, %c0_178, %c6_179, %c0_180], %465 {strides = array<i32>} : memref<1x3x8x64xf32, #tpu.memory_space<vmem>>, vector<1x3x1x64xf32>,
    %466 = vector.extract_strided_slice %437 {offsets = [0, 3, 0], sizes = [3, 1, 64], strides = [1, 1, 1]} : vector<3x4x64xf32> to vector<3x1x64xf32>
    %c0_181 = arith.constant 0 : index
    %c0_182 = arith.constant 0 : index
    %c7_183 = arith.constant 7 : index
    %c0_184 = arith.constant 0 : index
    %467 = vector.load %arg6[%c0_181, %c0_182, %c7_183, %c0_184] : memref<1x3x8x64xf32, #tpu.memory_space<vmem>>, vector<1x3x1x64xf32>
    %468 = vector.shape_cast %467 : vector<1x3x1x64xf32> to vector<3x1x64xf32>
    %469 = vector.shape_cast %466 : vector<3x1x64xf32> to vector<1x3x1x64xf32>
    tpu.vector_store %arg6[%c0_181, %c0_182, %c7_183, %c0_184], %469 {strides = array<i32>} : memref<1x3x8x64xf32, #tpu.memory_space<vmem>>, vector<1x3x1x64xf32>,
    return
  }
  func.func @transform_0(%arg0: i32) -> (i32, i32, i32, i32) {
    %c0_i32 = arith.constant 0 : i32
    %c0_i32_0 = arith.constant 0 : i32
    %c0_i32_1 = arith.constant 0 : i32
    %c0_i32_2 = arith.constant 0 : i32
    return %arg0, %c0_i32, %c0_i32_0, %c0_i32_1 : i32, i32, i32, i32
  }
  func.func @transform_1(%arg0: i32) -> (i32, i32) {
    %c0_i32 = arith.constant 0 : i32
    %c0_i32_0 = arith.constant 0 : i32
    %c0_i32_1 = arith.constant 0 : i32
    return %c0_i32, %c0_i32_0 : i32, i32
  }
  func.func @transform_2(%arg0: i32) -> (i32, i32) {
    %c0_i32 = arith.constant 0 : i32
    %c0_i32_0 = arith.constant 0 : i32
    %c0_i32_1 = arith.constant 0 : i32
    return %c0_i32, %c0_i32_0 : i32, i32
  }
  func.func @transform_3(%arg0: i32) -> (i32, i32) {
    %c0_i32 = arith.constant 0 : i32
    %c0_i32_0 = arith.constant 0 : i32
    %c0_i32_1 = arith.constant 0 : i32
    return %c0_i32, %c0_i32_0 : i32, i32
  }
  func.func @transform_4(%arg0: i32) -> i32 {
    %c0_i32 = arith.constant 0 : i32
    %c0_i32_0 = arith.constant 0 : i32
    return %c0_i32 : i32
  }
  func.func @transform_5(%arg0: i32) -> (i32, i32, i32, i32) {
    %c0_i32 = arith.constant 0 : i32
    %c0_i32_0 = arith.constant 0 : i32
    %c0_i32_1 = arith.constant 0 : i32
    %c0_i32_2 = arith.constant 0 : i32
    return %arg0, %c0_i32, %c0_i32_0, %c0_i32_1 : i32, i32, i32, i32
  }
}

</mosaic_0001>

<llo_original>
// kernel: tpu_custom_call.1
$region0: #{tpu_custom_call.1}
  #allocation0 [shape = 'u32[]', space=smem, size = 0x4, offset = 0x4, fixed_abs, tag = 'smem constant byte address 0x4 - core index']
  #allocation1 [shape = 'u32[144,128]{1,0:T(1,128)}', space=vmem, size = 0x12000, scoped, tag = 'internal scratch']
  #allocation2 [shape = 'f32[3,8,82]{2,1,0:T(8,128)}', space=vmem, size = 0x3000, scoped, tag = 'scratch operand']
  %s0 = inlined_call_operand.hbm [shape: f32[2,3,8,64], index: 0, kind: input, shape index: {}]
  %s1 = inlined_call_operand.vmem [shape: f32[8,1], index: 1, kind: input, shape index: {}]
  %s2 = inlined_call_operand.vmem [shape: f32[8,1], index: 2, kind: input, shape index: {}]
  %s3 = inlined_call_operand.vmem [shape: f32[8,27], index: 3, kind: input, shape index: {}]
  %s4 = inlined_call_operand.vmem [shape: f32[2], index: 4, kind: input, shape index: {}]
  %s5 = inlined_call_operand.hbm [shape: f32[2,3,8,64], index: 5, kind: output, shape index: {}]
  %s6 = sld [smem:[#allocation0]]
  $region61: #{tpu_custom_call.1} parent=0
    _
  %s8 = ssub.s32 1, %s6
  %s9 = scalar_select 0, %s8, %s6
  $region1: #{tpu_custom_call.1} parent=0
    #allocation3 [shape = 'u8[24576]{0}', space=vmem, size = 0x6000, scoped, tag = 'input window, operand 0']
    #allocation4 [shape = 's32[2]{0}', space=sflag, size = 0x8, scoped, tag = 'scoped memory for tpu_custom_call.1']
    #allocation5 [shape = 's32[2]{0}', space=sflag, size = 0x8, scoped, tag = 'scoped memory for tpu_custom_call.1']
    #allocation6 [shape = 's32[2]{0}', space=sflag, size = 0x8, scoped, tag = 'scoped memory for tpu_custom_call.1']
    #allocation7 [shape = 'u8[512]{0}', space=smem, size = 0x200, scoped, tag = 'input window, operand 4, single buffered']
    #allocation8 [shape = 'u8[24576]{0}', space=vmem, size = 0x6000, scoped, tag = 'output window, operand 0']
    %10 = vsyncpa [#allocation4], 0
    %s11 = scalar_lea.sflag [#allocation4], 1
    %12 = vsyncpa %s11, 0
    %13 = vsyncpa [#allocation6], 0
    %14 = vsyncpa [#allocation5], 0
    %s15 = scalar_lea.sflag [#allocation5], 1
    %16 = vsyncpa %s15, 0
    loop: start=0, step=1, limit=4
    $region2: #{tpu_custom_call.1} parent=1 // loop_pre_header
      _
    $region3: #{tpu_custom_call.1} parent=1 // loop_header
      %s18 = sphi 0, %s22
      %p19 = scmp.ge.s32.totalorder %s18, 4
      %s28 = sphi 0, %s30
      %s31 = sphi 0, %s28
      %s32 = sphi 0, %s31
      %s48 = sphi 0, %s32
      %s52 = sphi 0, %s52
      %s54 = sphi 0, %s52
      %s55 = sphi 0, %s54
      %s69 = sphi 0, %s55
      %s73 = sphi 0, %s73
      %s75 = sphi 0, %s73
      %s76 = sphi 0, %s75
      %s90 = sphi 0, %s76
      %s94 = sphi 0, %s94
      %s96 = sphi 0, %s94
      %s97 = sphi 0, %s96
      %s111 = sphi 0, %s97
      %s115 = sphi 0, %s115
      %s117 = sphi 0, %s115
      %s118 = sphi 0, %s117
      %s132 = sphi 0, %s118
      %s138 = sphi 0, %s140
      %s141 = sphi 0, %s138
      %s142 = sphi 0, %s141
      %s158 = sphi 0, %s142
    $region4: #{tpu_custom_call.1} parent=1 // loop_header_branch
      %21 = sbr.rel (%p19) target = $region8
    $region5: #{tpu_custom_call.1} parent=1 // loop_body
      %s23 = ssub.s32 %s18, 1
      %s24 = ssub.s32 %s18, 2
      %s25 = sadd.s32 %s18, 1
      %s26 = ssub.s32 %s18, %s25
      %p27 = scmp.eq.s32.totalorder %s26, 0
      %s29 = sadd.s32 %s28, 1
      %s30 = scalar_select %p27, %s28, %s29
      %p33 = pneg %p27
      %p34 = scmp.eq.s32.totalorder %s18, 1
      %p35 = por %p33, %p34
      %p36 = scmp.ne.s32.totalorder %s28, %s31
      %p37 = scmp.eq.s32.totalorder %s18, 0
      %p38 = por %p36, %p37
      %p39 = scmp.ne.s32.totalorder %s28, %s31
      %p40 = scmp.eq.s32.totalorder %s23, 1
      %p41 = por %p39, %p40
      %p42 = scmp.ne.s32.totalorder %s31, %s32
      %p43 = scmp.eq.s32.totalorder %s23, 0
      %p44 = por %p42, %p43
      %p45 = scmp.ne.s32.totalorder %s31, %s32
      %p46 = scmp.eq.s32.totalorder %s24, 1
      %p47 = por %p45, %p46
      %p49 = scmp.ne.s32.totalorder %s32, %s48
      %p50 = scmp.eq.s32.totalorder %s24, 0
      %p51 = por %p49, %p50
      %s53 = sadd.s32 %s52, 1
      %p56 = scmp.eq.s32.totalorder %s18, 1
      %p57 = scmp.ne.s32.totalorder %s52, %s54
      %p58 = scmp.eq.s32.totalorder %s18, 0
      %p59 = por %p57, %p58
      %p60 = scmp.ne.s32.totalorder %s52, %s54
      %p61 = scmp.eq.s32.totalorder %s23, 1
      %p62 = por %p60, %p61
      %p63 = scmp.ne.s32.totalorder %s54, %s55
      %p64 = scmp.eq.s32.totalorder %s23, 0
      %p65 = por %p63, %p64
      %p66 = scmp.ne.s32.totalorder %s54, %s55
      %p67 = scmp.eq.s32.totalorder %s24, 1
      %p68 = por %p66, %p67
      %p70 = scmp.ne.s32.totalorder %s55, %s69
      %p71 = scmp.eq.s32.totalorder %s24, 0
      %p72 = por %p70, %p71
      %s74 = sadd.s32 %s73, 1
      %p77 = scmp.eq.s32.totalorder %s18, 1
      %p78 = scmp.ne.s32.totalorder %s73, %s75
      %p79 = scmp.eq.s32.totalorder %s18, 0
      %p80 = por %p78, %p79
      %p81 = scmp.ne.s32.totalorder %s73, %s75
      %p82 = scmp.eq.s32.totalorder %s23, 1
      %p83 = por %p81, %p82
      %p84 = scmp.ne.s32.totalorder %s75, %s76
      %p85 = scmp.eq.s32.totalorder %s23, 0
      %p86 = por %p84, %p85
      %p87 = scmp.ne.s32.totalorder %s75, %s76
      %p88 = scmp.eq.s32.totalorder %s24, 1
      %p89 = por %p87, %p88
      %p91 = scmp.ne.s32.totalorder %s76, %s90
      %p92 = scmp.eq.s32.totalorder %s24, 0
      %p93 = por %p91, %p92
      %s95 = sadd.s32 %s94, 1
      %p98 = scmp.eq.s32.totalorder %s18, 1
      %p99 = scmp.ne.s32.totalorder %s94, %s96
      %p100 = scmp.eq.s32.totalorder %s18, 0
      %p101 = por %p99, %p100
      %p102 = scmp.ne.s32.totalorder %s94, %s96
      %p103 = scmp.eq.s32.totalorder %s23, 1
      %p104 = por %p102, %p103
      %p105 = scmp.ne.s32.totalorder %s96, %s97
      %p106 = scmp.eq.s32.totalorder %s23, 0
      %p107 = por %p105, %p106
      %p108 = scmp.ne.s32.totalorder %s96, %s97
      %p109 = scmp.eq.s32.totalorder %s24, 1
      %p110 = por %p108, %p109
      %p112 = scmp.ne.s32.totalorder %s97, %s111
      %p113 = scmp.eq.s32.totalorder %s24, 0
      %p114 = por %p112, %p113
      %s116 = sadd.s32 %s115, 1
      %p119 = scmp.eq.s32.totalorder %s18, 1
      %p120 = scmp.ne.s32.totalorder %s115, %s117
      %p121 = scmp.eq.s32.totalorder %s18, 0
      %p122 = por %p120, %p121
      %p123 = scmp.ne.s32.totalorder %s115, %s117
      %p124 = scmp.eq.s32.totalorder %s23, 1
      %p125 = por %p123, %p124
      %p126 = scmp.ne.s32.totalorder %s117, %s118
      %p127 = scmp.eq.s32.totalorder %s23, 0
      %p128 = por %p126, %p127
      %p129 = scmp.ne.s32.totalorder %s117, %s118
      %p130 = scmp.eq.s32.totalorder %s24, 1
      %p131 = por %p129, %p130
      %p133 = scmp.ne.s32.totalorder %s118, %s132
      %p134 = scmp.eq.s32.totalorder %s24, 0
      %p135 = por %p133, %p134
      %s136 = ssub.s32 %s18, %s25
      %p137 = scmp.eq.s32.totalorder %s136, 0
      %s139 = sadd.s32 %s138, 1
      %s140 = scalar_select %p137, %s138, %s139
      %p143 = pneg %p137
      %p144 = scmp.eq.s32.totalorder %s18, 1
      %p145 = por %p143, %p144
      %p146 = scmp.ne.s32.totalorder %s138, %s141
      %p147 = scmp.eq.s32.totalorder %s18, 0
      %p148 = por %p146, %p147
      %p149 = scmp.ne.s32.totalorder %s138, %s141
      %p150 = scmp.eq.s32.totalorder %s23, 1
      %p151 = por %p149, %p150
      %p152 = scmp.ne.s32.totalorder %s141, %s142
      %p153 = scmp.eq.s32.totalorder %s23, 0
      %p154 = por %p152, %p153
      %p155 = scmp.ne.s32.totalorder %s141, %s142
      %p156 = scmp.eq.s32.totalorder %s24, 1
      %p157 = por %p155, %p156
      %p159 = scmp.ne.s32.totalorder %s142, %s158
      %p160 = scmp.eq.s32.totalorder %s24, 0
      %p161 = por %p159, %p160
      %p162 = scmp.le.s32.totalorder 1, %s18
      %p163 = scmp.lt.s32.totalorder %s18, 3
      %p164 = pnand %p162, %p163
      %p165 = pneg %p164
      // Predicated region
      $region9: #{tpu_custom_call.1} parent=5 // pred_check
        _
      $region10: #{tpu_custom_call.1} parent=5 // pred_check_branch
        %167 = sbr.rel (%p164) target = $region12
      $region11: #{tpu_custom_call.1} parent=5 // pred_region
        %s168 = ssub.s32 %s18, 1
        // Predicated region
        $region13: #{tpu_custom_call.1} parent=11 // pred_check
          %p169 = pneg %p65
        $region14: #{tpu_custom_call.1} parent=11 // pred_check_branch
          %171 = sbr.rel (%p169) target = $region16
        $region15: #{tpu_custom_call.1} parent=11 // pred_region
          _
        $region16: #{tpu_custom_call.1} parent=11 // pred_fallthru
          _
        // Predicated region
        $region17: #{tpu_custom_call.1} parent=11 // pred_check
          %p172 = pneg %p86
        $region18: #{tpu_custom_call.1} parent=11 // pred_check_branch
          %174 = sbr.rel (%p172) target = $region20
        $region19: #{tpu_custom_call.1} parent=11 // pred_region
          _
        $region20: #{tpu_custom_call.1} parent=11 // pred_fallthru
          _
        // Predicated region
        $region21: #{tpu_custom_call.1} parent=11 // pred_check
          %p175 = pneg %p107
        $region22: #{tpu_custom_call.1} parent=11 // pred_check_branch
          %177 = sbr.rel (%p175) target = $region24
        $region23: #{tpu_custom_call.1} parent=11 // pred_region
          _
        $region24: #{tpu_custom_call.1} parent=11 // pred_fallthru
          _
        // Predicated region
        $region25: #{tpu_custom_call.1} parent=11 // pred_check
          %p178 = pneg %p128
        $region26: #{tpu_custom_call.1} parent=11 // pred_check_branch
          %180 = sbr.rel (%p178) target = $region28
        $region27: #{tpu_custom_call.1} parent=11 // pred_region
          %s182 = ssub.s32 16, 16
          %183 = vsyncadd [#allocation6], %s182
          %s185 = sshll.u32 %s4, 4
          %s186 = int_to_ptr.vmem [resolvable:$true] %s185
          %188 = dma.vmem_to_smem %s186, 16, [#allocation7], [#allocation6]
        $region28: #{tpu_custom_call.1} parent=11 // pred_fallthru
          _
      $region12: #{tpu_custom_call.1} parent=5 // pred_fallthru
        _
      %p189 = scmp.lt.s32.totalorder %s18, 2
      // Predicated region
      $region29: #{tpu_custom_call.1} parent=5 // pred_check
        %p190 = pneg %p189
      $region30: #{tpu_custom_call.1} parent=5 // pred_check_branch
        %192 = sbr.rel (%p190) target = $region32
      $region31: #{tpu_custom_call.1} parent=5 // pred_region
        // Predicated region
        $region33: #{tpu_custom_call.1} parent=31 // pred_check
          %p193 = pneg %p38
        $region34: #{tpu_custom_call.1} parent=31 // pred_check_branch
          %195 = sbr.rel (%p193) target = $region36
        $region35: #{tpu_custom_call.1} parent=31 // pred_region
          %s196 = sand.u32 %s28, 1
          %s197 = scalar_lea.sflag [#allocation4], %s196
          %s198 = sand.u32 %s28, 1
          %s199 = smul.addr %s198, 24
          %s200 = scalar_lea.vmem [#allocation3], %s199
          %s202 = ssub.s32 384, 384
          %203 = vsyncadd %s197, %s202
          %s204 = smul.addr %s18, 3
          %s205 = smul.addr %s204, 128
          %s206 = scalar_lea.hbm %s0, %s205
          %s207 = sshll.u32 %s200, 4
          %s208 = int_to_ptr.vmem [resolvable:$true] %s207
          %213 = dma.hbm_to_vmem [thread:$0]  %s206, 384, %s208, %s197, 128, 128, 8
        $region36: #{tpu_custom_call.1} parent=31 // pred_fallthru
          _
      $region32: #{tpu_custom_call.1} parent=5 // pred_fallthru
        _
      %p214 = scmp.le.s32.totalorder 1, %s18
      %p215 = scmp.lt.s32.totalorder %s18, 3
      %p216 = pnand %p214, %p215
      %p217 = pneg %p216
      // Predicated region
      $region37: #{tpu_custom_call.1} parent=5 // pred_check
        _
      $region38: #{tpu_custom_call.1} parent=5 // pred_check_branch
        %219 = sbr.rel (%p216) target = $region40
      $region39: #{tpu_custom_call.1} parent=5 // pred_region
        %s220 = ssub.s32 %s18, 1
        %s221 = sand.u32 %s31, 1
        %s222 = scalar_lea.sflag [#allocation4], %s221
        %s223 = sand.u32 %s31, 1
        %s224 = smul.addr %s223, 24
        %s225 = scalar_lea.vmem [#allocation3], %s224
        // Predicated region
        $region41: #{tpu_custom_call.1} parent=39 // pred_check
          %p226 = pneg %p44
        $region42: #{tpu_custom_call.1} parent=39 // pred_check_branch
          %228 = sbr.rel (%p226) target = $region44
        $region43: #{tpu_custom_call.1} parent=39 // pred_region
          %229 = dma.done %s222, 384
        $region44: #{tpu_custom_call.1} parent=39 // pred_fallthru
          _
        // Predicated region
        $region45: #{tpu_custom_call.1} parent=39 // pred_check
          %p230 = pneg %p128
        $region46: #{tpu_custom_call.1} parent=39 // pred_check_branch
          %232 = sbr.rel (%p230) target = $region48
        $region47: #{tpu_custom_call.1} parent=39 // pred_region
          %233 = dma.done [#allocation6], 16
        $region48: #{tpu_custom_call.1} parent=39 // pred_fallthru
          _
        %234 = sfence
        %s235 = sand.u32 %s31, 1
        %s236 = scalar_lea.sflag [#allocation4], %s235
        %s237 = sand.u32 %s31, 1
        %s238 = smul.addr %s237, 24
        %s239 = scalar_lea.vmem [#allocation3], %s238
        %p240 = pneg %p44
        %p241 = pneg %p41
        %p242 = pneg %p65
        %p243 = pneg %p62
        %p244 = pneg %p86
        %p245 = pneg %p83
        %p246 = pneg %p107
        %p247 = pneg %p104
        %p248 = pneg %p128
        %p249 = pneg %p125
        %p250 = pneg %p154
        %p251 = pneg %p151
        %s252 = sand.u32 %s141, 1
        %s253 = scalar_lea.sflag [#allocation5], %s252
        %s254 = sand.u32 %s141, 1
        %s255 = smul.addr %s254, 24
        %s256 = scalar_lea.vmem [#allocation8], %s255
        %v257 = vld [vmem:[%s225] sm:$0xff]
        %v258 = vld [vmem:[%s225 + $0x8] sm:$0xff]
        %v259 = vld [vmem:[%s225 + $0x10] sm:$0xff]
        %v260 = vld [vmem:[%s1] sm:$0xff]
        %262 = vset.pattern.permute.xlu0 0
        %263 = vperm.xlu0 %262, %v260
        %v264 = vpop.permute.xlu0 %263
        %v266 = vmul.f32 %v257, %v264
        %v267 = vmul.f32 %v258, %v264
        %v268 = vmul.f32 %v259, %v264
        %v269 = vld [vmem:[%s2] sm:$0xff]
        %271 = vset.pattern.permute.xlu0 0
        %272 = vperm.xlu0 %271, %v269
        %v273 = vpop.permute.xlu0 %272
        %v275 = vadd.f32 %v266, %v273
        %v276 = vadd.f32 %v267, %v273
        %v277 = vadd.f32 %v268, %v273
        %v278 = vmax.f32 %v275, 0.0
        %v279 = vmax.f32 %v276, 0.0
        %v280 = vmax.f32 %v277, 0.0
        %284 = vrot.lane.b32.xlu0 %v278, 9
        %v285 = vpop.permute.xlu0 %284
        %286 = vrot.lane.b32.xlu0 %v279, 9
        %v287 = vpop.permute.xlu0 %286
        %288 = vrot.lane.b32.xlu0 %v280, 9
        %v289 = vpop.permute.xlu0 %288
        %vm293 = vcmask 597064
        %294 = vst.msk [vmem:[#allocation2] sm:$0xff] %vm293, %v285
        %295 = vst.msk [vmem:[#allocation2 + $0x8] sm:$0xff] %vm293, %v287
        %296 = vst.msk [vmem:[#allocation2 + $0x10] sm:$0xff] %vm293, %v289
        %vm297 = vcmask 72704
        %298 = vst.msk [vmem:[#allocation2] sm:$0xff] %vm297, 0.0
        %299 = vst.msk [vmem:[#allocation2 + $0x8] sm:$0xff] %vm297, 0.0
        %300 = vst.msk [vmem:[#allocation2 + $0x10] sm:$0xff] %vm297, 0.0
        %vm301 = vcmask 671304
        %302 = vst.msk [vmem:[#allocation2] sm:$0xff] %vm301, 0.0
        %303 = vst.msk [vmem:[#allocation2 + $0x8] sm:$0xff] %vm301, 0.0
        %304 = vst.msk [vmem:[#allocation2 + $0x10] sm:$0xff] %vm301, 0.0
        %v305 = vlaneseq
        %v306 = vand.u32 %v305, 127
        %vm307 = vcmp.lt.s32.totalorder %v306, 0
        %v308 = vsub.s32 0, %v306
        %v309 = vsel %vm307, %v308, %v306
        %v310 = vshrl.u32 %v309, 3
        %v311 = vand.u32 %v309, 7
        %v312 = vsub.s32 0, %v311
        %v313 = vsel %vm307, %v312, %v311
        %vm314 = vcmp.ne.s32.totalorder %v313, 0
        %vm315 = vcmp.lt.s32.totalorder %v313, 0
        %vm316 = vmand %vm315, %vm314
        %v317 = vadd.s32 %v313, 8
        %v318 = vsel %vm316, %v317, %v313
        %vm319 = vcmp.ge.s32.totalorder %v318, 1
        %vm320 = vcmp.le.s32.totalorder %v318, 6
        %v321 = vld [vmem:[#allocation2] sm:$0xff]
        %v322 = vld [vmem:[#allocation2 + $0x8] sm:$0xff]
        %v323 = vld [vmem:[#allocation2 + $0x10] sm:$0xff]
        %v324 = vsel %vm319, 1, 0
        %vm325 = vcmp.eq.s32.totalorder %v324, 1
        %v326 = vsel %vm325, %v321, 0.0
        %v327 = vsel %vm325, %v322, 0.0
        %v328 = vsel %vm325, %v323, 0.0
        %v329 = vld [vmem:[%s3] sm:$0xff]
        %331 = vset.pattern.permute.xlu0 0
        %332 = vperm.xlu0 %331, %v329
        %v333 = vpop.permute.xlu0 %332
        %v335 = vmul.f32 %v326, %v333
        %v336 = vmul.f32 %v327, %v333
        %vm337 = vcmask 519168
        %v338 = vsel %vm337, %v335, 0.0
        %v339 = vrot.slane %v338, 4
        %v340 = vadd.f32 %v338, %v339
        %v341 = vrot.slane %v340, 2
        %v342 = vadd.f32 %v340, %v341
        %v343 = vrot.slane %v342, 1
        %v344 = vadd.f32 %v342, %v343
        %v345 = vsel %vm337, %v336, 0.0
        %v346 = vrot.slane %v345, 4
        %v347 = vadd.f32 %v345, %v346
        %v348 = vrot.slane %v347, 2
        %v349 = vadd.f32 %v347, %v348
        %v350 = vrot.slane %v349, 1
        %v351 = vadd.f32 %v349, %v350
        %v352 = vadd.f32 %v344, 0.0
        %v353 = vadd.f32 %v351, 0.0
        %v356 = vrot.slane %v335, 4
        %v357 = vrot.slane %v336, 4
        %v360 = vsel %vm337, %v356, 0.0
        %v361 = vrot.slane %v360, 4
        %v362 = vadd.f32 %v360, %v361
        %v363 = vrot.slane %v362, 2
        %v364 = vadd.f32 %v362, %v363
        %v365 = vrot.slane %v364, 1
        %v366 = vadd.f32 %v364, %v365
        %v367 = vsel %vm337, %v357, 0.0
        %v368 = vrot.slane %v367, 4
        %v369 = vadd.f32 %v367, %v368
        %v370 = vrot.slane %v369, 2
        %v371 = vadd.f32 %v369, %v370
        %v372 = vrot.slane %v371, 1
        %v373 = vadd.f32 %v371, %v372
        %v374 = vadd.f32 %v366, 0.0
        %v375 = vadd.f32 %v373, 0.0
        %376 = vset.pattern.permute.xlu0 9
        %377 = vperm.xlu0 %376, %v329
        %v378 = vpop.permute.xlu0 %377
        %v380 = vmul.f32 %v326, %v378
        %v381 = vmul.f32 %v327, %v378
        %v382 = vmul.f32 %v328, %v378
        %v383 = vsel %vm337, %v380, 0.0
        %v384 = vrot.slane %v383, 4
        %v385 = vadd.f32 %v383, %v384
        %v386 = vrot.slane %v385, 2
        %v387 = vadd.f32 %v385, %v386
        %v388 = vrot.slane %v387, 1
        %v389 = vadd.f32 %v387, %v388
        %v390 = vsel %vm337, %v381, 0.0
        %v391 = vrot.slane %v390, 4
        %v392 = vadd.f32 %v390, %v391
        %v393 = vrot.slane %v392, 2
        %v394 = vadd.f32 %v392, %v393
        %v395 = vrot.slane %v394, 1
        %v396 = vadd.f32 %v394, %v395
        %v397 = vsel %vm337, %v382, 0.0
        %v398 = vrot.slane %v397, 4
        %v399 = vadd.f32 %v397, %v398
        %v400 = vrot.slane %v399, 2
        %v401 = vadd.f32 %v399, %v400
        %v402 = vrot.slane %v401, 1
        %v403 = vadd.f32 %v401, %v402
        %v404 = vadd.f32 %v389, 0.0
        %v405 = vadd.f32 %v396, 0.0
        %v406 = vadd.f32 %v403, 0.0
        %v410 = vrot.slane %v380, 4
        %v411 = vrot.slane %v381, 4
        %v412 = vrot.slane %v382, 4
        %v416 = vsel %vm337, %v410, 0.0
        %v417 = vrot.slane %v416, 4
        %v418 = vadd.f32 %v416, %v417
        %v419 = vrot.slane %v418, 2
        %v420 = vadd.f32 %v418, %v419
        %v421 = vrot.slane %v420, 1
        %v422 = vadd.f32 %v420, %v421
        %v423 = vsel %vm337, %v411, 0.0
        %v424 = vrot.slane %v423, 4
        %v425 = vadd.f32 %v423, %v424
        %v426 = vrot.slane %v425, 2
        %v427 = vadd.f32 %v425, %v426
        %v428 = vrot.slane %v427, 1
        %v429 = vadd.f32 %v427, %v428
        %v430 = vsel %vm337, %v412, 0.0
        %v431 = vrot.slane %v430, 4
        %v432 = vadd.f32 %v430, %v431
        %v433 = vrot.slane %v432, 2
        %v434 = vadd.f32 %v432, %v433
        %v435 = vrot.slane %v434, 1
        %v436 = vadd.f32 %v434, %v435
        %v437 = vadd.f32 %v422, 0.0
        %v438 = vadd.f32 %v429, 0.0
        %v439 = vadd.f32 %v436, 0.0
        %440 = vset.pattern.permute.xlu0 18
        %441 = vperm.xlu0 %440, %v329
        %v442 = vpop.permute.xlu0 %441
        %v444 = vmul.f32 %v327, %v442
        %v445 = vmul.f32 %v328, %v442
        %v446 = vsel %vm337, %v444, 0.0
        %v447 = vrot.slane %v446, 4
        %v448 = vadd.f32 %v446, %v447
        %v449 = vrot.slane %v448, 2
        %v450 = vadd.f32 %v448, %v449
        %v451 = vrot.slane %v450, 1
        %v452 = vadd.f32 %v450, %v451
        %v453 = vsel %vm337, %v445, 0.0
        %v454 = vrot.slane %v453, 4
        %v455 = vadd.f32 %v453, %v454
        %v456 = vrot.slane %v455, 2
        %v457 = vadd.f32 %v455, %v456
        %v458 = vrot.slane %v457, 1
        %v459 = vadd.f32 %v457, %v458
        %v460 = vadd.f32 %v452, 0.0
        %v461 = vadd.f32 %v459, 0.0
        %v464 = vrot.slane %v444, 4
        %v465 = vrot.slane %v445, 4
        %v468 = vsel %vm337, %v464, 0.0
        %v469 = vrot.slane %v468, 4
        %v470 = vadd.f32 %v468, %v469
        %v471 = vrot.slane %v470, 2
        %v472 = vadd.f32 %v470, %v471
        %v473 = vrot.slane %v472, 1
        %v474 = vadd.f32 %v472, %v473
        %v475 = vsel %vm337, %v465, 0.0
        %v476 = vrot.slane %v475, 4
        %v477 = vadd.f32 %v475, %v476
        %v478 = vrot.slane %v477, 2
        %v479 = vadd.f32 %v477, %v478
        %v480 = vrot.slane %v479, 1
        %v481 = vadd.f32 %v479, %v480
        %v482 = vadd.f32 %v474, 0.0
        %v483 = vadd.f32 %v481, 0.0
        %484 = vset.pattern.permute.xlu0 1
        %485 = vperm.xlu0 %484, %v329
        %v486 = vpop.permute.xlu0 %485
        %v488 = vmul.f32 %v321, %v486
        %v489 = vmul.f32 %v322, %v486
        %vm490 = vcmask 527368
        %v491 = vsel %vm490, %v488, 0.0
        %v492 = vrot.slane %v491, 4
        %v493 = vadd.f32 %v491, %v492
        %v494 = vrot.slane %v493, 2
        %v495 = vadd.f32 %v493, %v494
        %v496 = vrot.slane %v495, 1
        %v497 = vadd.f32 %v495, %v496
        %v498 = vsel %vm490, %v489, 0.0
        %v499 = vrot.slane %v498, 4
        %v500 = vadd.f32 %v498, %v499
        %v501 = vrot.slane %v500, 2
        %v502 = vadd.f32 %v500, %v501
        %v503 = vrot.slane %v502, 1
        %v504 = vadd.f32 %v502, %v503
        %507 = vrot.lane.b32.xlu0 %v497, 127
        %v508 = vpop.permute.xlu0 %507
        %509 = vrot.lane.b32.xlu0 %v504, 127
        %v510 = vpop.permute.xlu0 %509
        %v513 = vadd.f32 %v352, %v508
        %v514 = vadd.f32 %v353, %v510
        %v517 = vrot.slane %v488, 4
        %v518 = vrot.slane %v489, 4
        %v521 = vsel %vm490, %v517, 0.0
        %v522 = vrot.slane %v521, 4
        %v523 = vadd.f32 %v521, %v522
        %v524 = vrot.slane %v523, 2
        %v525 = vadd.f32 %v523, %v524
        %v526 = vrot.slane %v525, 1
        %v527 = vadd.f32 %v525, %v526
        %v528 = vsel %vm490, %v518, 0.0
        %v529 = vrot.slane %v528, 4
        %v530 = vadd.f32 %v528, %v529
        %v531 = vrot.slane %v530, 2
        %v532 = vadd.f32 %v530, %v531
        %v533 = vrot.slane %v532, 1
        %v534 = vadd.f32 %v532, %v533
        %537 = vrot.lane.b32.xlu0 %v527, 127
        %v538 = vpop.permute.xlu0 %537
        %539 = vrot.lane.b32.xlu0 %v534, 127
        %v540 = vpop.permute.xlu0 %539
        %v543 = vadd.f32 %v374, %v538
        %v544 = vadd.f32 %v375, %v540
        %545 = vset.pattern.permute.xlu0 10
        %546 = vperm.xlu0 %545, %v329
        %v547 = vpop.permute.xlu0 %546
        %v549 = vmul.f32 %v321, %v547
        %v550 = vmul.f32 %v322, %v547
        %v551 = vmul.f32 %v323, %v547
        %v552 = vsel %vm490, %v549, 0.0
        %v553 = vrot.slane %v552, 4
        %v554 = vadd.f32 %v552, %v553
        %v555 = vrot.slane %v554, 2
        %v556 = vadd.f32 %v554, %v555
        %v557 = vrot.slane %v556, 1
        %v558 = vadd.f32 %v556, %v557
        %v559 = vsel %vm490, %v550, 0.0
        %v560 = vrot.slane %v559, 4
        %v561 = vadd.f32 %v559, %v560
        %v562 = vrot.slane %v561, 2
        %v563 = vadd.f32 %v561, %v562
        %v564 = vrot.slane %v563, 1
        %v565 = vadd.f32 %v563, %v564
        %v566 = vsel %vm490, %v551, 0.0
        %v567 = vrot.slane %v566, 4
        %v568 = vadd.f32 %v566, %v567
        %v569 = vrot.slane %v568, 2
        %v570 = vadd.f32 %v568, %v569
        %v571 = vrot.slane %v570, 1
        %v572 = vadd.f32 %v570, %v571
        %576 = vrot.lane.b32.xlu0 %v558, 127
        %v577 = vpop.permute.xlu0 %576
        %578 = vrot.lane.b32.xlu0 %v565, 127
        %v579 = vpop.permute.xlu0 %578
        %580 = vrot.lane.b32.xlu0 %v572, 127
        %v581 = vpop.permute.xlu0 %580
        %v585 = vadd.f32 %v404, %v577
        %v586 = vadd.f32 %v405, %v579
        %v587 = vadd.f32 %v406, %v581
        %v591 = vrot.slane %v549, 4
        %v592 = vrot.slane %v550, 4
        %v593 = vrot.slane %v551, 4
        %v597 = vsel %vm490, %v591, 0.0
        %v598 = vrot.slane %v597, 4
        %v599 = vadd.f32 %v597, %v598
        %v600 = vrot.slane %v599, 2
        %v601 = vadd.f32 %v599, %v600
        %v602 = vrot.slane %v601, 1
        %v603 = vadd.f32 %v601, %v602
        %v604 = vsel %vm490, %v592, 0.0
        %v605 = vrot.slane %v604, 4
        %v606 = vadd.f32 %v604, %v605
        %v607 = vrot.slane %v606, 2
        %v608 = vadd.f32 %v606, %v607
        %v609 = vrot.slane %v608, 1
        %v610 = vadd.f32 %v608, %v609
        %v611 = vsel %vm490, %v593, 0.0
        %v612 = vrot.slane %v611, 4
        %v613 = vadd.f32 %v611, %v612
        %v614 = vrot.slane %v613, 2
        %v615 = vadd.f32 %v613, %v614
        %v616 = vrot.slane %v615, 1
        %v617 = vadd.f32 %v615, %v616
        %621 = vrot.lane.b32.xlu0 %v603, 127
        %v622 = vpop.permute.xlu0 %621
        %623 = vrot.lane.b32.xlu0 %v610, 127
        %v624 = vpop.permute.xlu0 %623
        %625 = vrot.lane.b32.xlu0 %v617, 127
        %v626 = vpop.permute.xlu0 %625
        %v630 = vadd.f32 %v437, %v622
        %v631 = vadd.f32 %v438, %v624
        %v632 = vadd.f32 %v439, %v626
        %633 = vset.pattern.permute.xlu0 19
        %634 = vperm.xlu0 %633, %v329
        %v635 = vpop.permute.xlu0 %634
        %v637 = vmul.f32 %v322, %v635
        %v638 = vmul.f32 %v323, %v635
        %v639 = vsel %vm490, %v637, 0.0
        %v640 = vrot.slane %v639, 4
        %v641 = vadd.f32 %v639, %v640
        %v642 = vrot.slane %v641, 2
        %v643 = vadd.f32 %v641, %v642
        %v644 = vrot.slane %v643, 1
        %v645 = vadd.f32 %v643, %v644
        %v646 = vsel %vm490, %v638, 0.0
        %v647 = vrot.slane %v646, 4
        %v648 = vadd.f32 %v646, %v647
        %v649 = vrot.slane %v648, 2
        %v650 = vadd.f32 %v648, %v649
        %v651 = vrot.slane %v650, 1
        %v652 = vadd.f32 %v650, %v651
        %655 = vrot.lane.b32.xlu0 %v645, 127
        %v656 = vpop.permute.xlu0 %655
        %657 = vrot.lane.b32.xlu0 %v652, 127
        %v658 = vpop.permute.xlu0 %657
        %v661 = vadd.f32 %v460, %v656
        %v662 = vadd.f32 %v461, %v658
        %v665 = vrot.slane %v637, 4
        %v666 = vrot.slane %v638, 4
        %v669 = vsel %vm490, %v665, 0.0
        %v670 = vrot.slane %v669, 4
        %v671 = vadd.f32 %v669, %v670
        %v672 = vrot.slane %v671, 2
        %v673 = vadd.f32 %v671, %v672
        %v674 = vrot.slane %v673, 1
        %v675 = vadd.f32 %v673, %v674
        %v676 = vsel %vm490, %v666, 0.0
        %v677 = vrot.slane %v676, 4
        %v678 = vadd.f32 %v676, %v677
        %v679 = vrot.slane %v678, 2
        %v680 = vadd.f32 %v678, %v679
        %v681 = vrot.slane %v680, 1
        %v682 = vadd.f32 %v680, %v681
        %685 = vrot.lane.b32.xlu0 %v675, 127
        %v686 = vpop.permute.xlu0 %685
        %687 = vrot.lane.b32.xlu0 %v682, 127
        %v688 = vpop.permute.xlu0 %687
        %v691 = vadd.f32 %v482, %v686
        %v692 = vadd.f32 %v483, %v688
        %v693 = vsel %vm320, 1, 0
        %vm694 = vcmp.eq.s32.totalorder %v693, 1
        %698 = vrot.lane.b32.xlu0 %v321, 126
        %v699 = vpop.permute.xlu0 %698
        %700 = vrot.lane.b32.xlu0 %v322, 126
        %v701 = vpop.permute.xlu0 %700
        %702 = vrot.lane.b32.xlu0 %v323, 126
        %v703 = vpop.permute.xlu0 %702
        %v707 = vsel %vm694, %v699, 0.0
        %v708 = vsel %vm694, %v701, 0.0
        %v709 = vsel %vm694, %v703, 0.0
        %710 = vset.pattern.permute.xlu0 2
        %711 = vperm.xlu0 %710, %v329
        %v712 = vpop.permute.xlu0 %711
        %v714 = vmul.f32 %v707, %v712
        %v715 = vmul.f32 %v708, %v712
        %v716 = vsel %vm337, %v714, 0.0
        %v717 = vrot.slane %v716, 4
        %v718 = vadd.f32 %v716, %v717
        %v719 = vrot.slane %v718, 2
        %v720 = vadd.f32 %v718, %v719
        %v721 = vrot.slane %v720, 1
        %v722 = vadd.f32 %v720, %v721
        %v723 = vsel %vm337, %v715, 0.0
        %v724 = vrot.slane %v723, 4
        %v725 = vadd.f32 %v723, %v724
        %v726 = vrot.slane %v725, 2
        %v727 = vadd.f32 %v725, %v726
        %v728 = vrot.slane %v727, 1
        %v729 = vadd.f32 %v727, %v728
        %v730 = vadd.f32 %v513, %v722
        %v731 = vadd.f32 %v514, %v729
        %v734 = vrot.slane %v714, 4
        %v735 = vrot.slane %v715, 4
        %v738 = vsel %vm337, %v734, 0.0
        %v739 = vrot.slane %v738, 4
        %v740 = vadd.f32 %v738, %v739
        %v741 = vrot.slane %v740, 2
        %v742 = vadd.f32 %v740, %v741
        %v743 = vrot.slane %v742, 1
        %v744 = vadd.f32 %v742, %v743
        %v745 = vsel %vm337, %v735, 0.0
        %v746 = vrot.slane %v745, 4
        %v747 = vadd.f32 %v745, %v746
        %v748 = vrot.slane %v747, 2
        %v749 = vadd.f32 %v747, %v748
        %v750 = vrot.slane %v749, 1
        %v751 = vadd.f32 %v749, %v750
        %v752 = vadd.f32 %v543, %v744
        %v753 = vadd.f32 %v544, %v751
        %754 = vset.pattern.permute.xlu0 11
        %755 = vperm.xlu0 %754, %v329
        %v756 = vpop.permute.xlu0 %755
        %v758 = vmul.f32 %v707, %v756
        %v759 = vmul.f32 %v708, %v756
        %v760 = vmul.f32 %v709, %v756
        %v761 = vsel %vm337, %v758, 0.0
        %v762 = vrot.slane %v761, 4
        %v763 = vadd.f32 %v761, %v762
        %v764 = vrot.slane %v763, 2
        %v765 = vadd.f32 %v763, %v764
        %v766 = vrot.slane %v765, 1
        %v767 = vadd.f32 %v765, %v766
        %v768 = vsel %vm337, %v759, 0.0
        %v769 = vrot.slane %v768, 4
        %v770 = vadd.f32 %v768, %v769
        %v771 = vrot.slane %v770, 2
        %v772 = vadd.f32 %v770, %v771
        %v773 = vrot.slane %v772, 1
        %v774 = vadd.f32 %v772, %v773
        %v775 = vsel %vm337, %v760, 0.0
        %v776 = vrot.slane %v775, 4
        %v777 = vadd.f32 %v775, %v776
        %v778 = vrot.slane %v777, 2
        %v779 = vadd.f32 %v777, %v778
        %v780 = vrot.slane %v779, 1
        %v781 = vadd.f32 %v779, %v780
        %v782 = vadd.f32 %v585, %v767
        %v783 = vadd.f32 %v586, %v774
        %v784 = vadd.f32 %v587, %v781
        %v788 = vrot.slane %v758, 4
        %v789 = vrot.slane %v759, 4
        %v790 = vrot.slane %v760, 4
        %v794 = vsel %vm337, %v788, 0.0
        %v795 = vrot.slane %v794, 4
        %v796 = vadd.f32 %v794, %v795
        %v797 = vrot.slane %v796, 2
        %v798 = vadd.f32 %v796, %v797
        %v799 = vrot.slane %v798, 1
        %v800 = vadd.f32 %v798, %v799
        %v801 = vsel %vm337, %v789, 0.0
        %v802 = vrot.slane %v801, 4
        %v803 = vadd.f32 %v801, %v802
        %v804 = vrot.slane %v803, 2
        %v805 = vadd.f32 %v803, %v804
        %v806 = vrot.slane %v805, 1
        %v807 = vadd.f32 %v805, %v806
        %v808 = vsel %vm337, %v790, 0.0
        %v809 = vrot.slane %v808, 4
        %v810 = vadd.f32 %v808, %v809
        %v811 = vrot.slane %v810, 2
        %v812 = vadd.f32 %v810, %v811
        %v813 = vrot.slane %v812, 1
        %v814 = vadd.f32 %v812, %v813
        %v815 = vadd.f32 %v630, %v800
        %v816 = vadd.f32 %v631, %v807
        %v817 = vadd.f32 %v632, %v814
        %818 = vset.pattern.permute.xlu0 20
        %819 = vperm.xlu0 %818, %v329
        %v820 = vpop.permute.xlu0 %819
        %v822 = vmul.f32 %v708, %v820
        %v823 = vmul.f32 %v709, %v820
        %v824 = vsel %vm337, %v822, 0.0
        %v825 = vrot.slane %v824, 4
        %v826 = vadd.f32 %v824, %v825
        %v827 = vrot.slane %v826, 2
        %v828 = vadd.f32 %v826, %v827
        %v829 = vrot.slane %v828, 1
        %v830 = vadd.f32 %v828, %v829
        %v831 = vsel %vm337, %v823, 0.0
        %v832 = vrot.slane %v831, 4
        %v833 = vadd.f32 %v831, %v832
        %v834 = vrot.slane %v833, 2
        %v835 = vadd.f32 %v833, %v834
        %v836 = vrot.slane %v835, 1
        %v837 = vadd.f32 %v835, %v836
        %v838 = vadd.f32 %v661, %v830
        %v839 = vadd.f32 %v662, %v837
        %v842 = vrot.slane %v822, 4
        %v843 = vrot.slane %v823, 4
        %v846 = vsel %vm337, %v842, 0.0
        %v847 = vrot.slane %v846, 4
        %v848 = vadd.f32 %v846, %v847
        %v849 = vrot.slane %v848, 2
        %v850 = vadd.f32 %v848, %v849
        %v851 = vrot.slane %v850, 1
        %v852 = vadd.f32 %v850, %v851
        %v853 = vsel %vm337, %v843, 0.0
        %v854 = vrot.slane %v853, 4
        %v855 = vadd.f32 %v853, %v854
        %v856 = vrot.slane %v855, 2
        %v857 = vadd.f32 %v855, %v856
        %v858 = vrot.slane %v857, 1
        %v859 = vadd.f32 %v857, %v858
        %v860 = vadd.f32 %v691, %v852
        %v861 = vadd.f32 %v692, %v859
        %862 = vrot.lane.b32.xlu0 %v321, 120
        %v863 = vpop.permute.xlu0 %862
        %864 = vrot.lane.b32.xlu0 %v322, 120
        %v865 = vpop.permute.xlu0 %864
        %866 = vrot.lane.b32.xlu0 %v323, 120
        %v867 = vpop.permute.xlu0 %866
        %v871 = vsel %vm325, %v863, 0.0
        %v872 = vsel %vm325, %v865, 0.0
        %v873 = vsel %vm325, %v867, 0.0
        %874 = vset.pattern.permute.xlu0 3
        %875 = vperm.xlu0 %874, %v329
        %v876 = vpop.permute.xlu0 %875
        %v878 = vmul.f32 %v871, %v876
        %v879 = vmul.f32 %v872, %v876
        %v880 = vsel %vm337, %v878, 0.0
        %v881 = vrot.slane %v880, 4
        %v882 = vadd.f32 %v880, %v881
        %v883 = vrot.slane %v882, 2
        %v884 = vadd.f32 %v882, %v883
        %v885 = vrot.slane %v884, 1
        %v886 = vadd.f32 %v884, %v885
        %v887 = vsel %vm337, %v879, 0.0
        %v888 = vrot.slane %v887, 4
        %v889 = vadd.f32 %v887, %v888
        %v890 = vrot.slane %v889, 2
        %v891 = vadd.f32 %v889, %v890
        %v892 = vrot.slane %v891, 1
        %v893 = vadd.f32 %v891, %v892
        %v894 = vadd.f32 %v730, %v886
        %v895 = vadd.f32 %v731, %v893
        %v898 = vrot.slane %v878, 4
        %v899 = vrot.slane %v879, 4
        %v902 = vsel %vm337, %v898, 0.0
        %v903 = vrot.slane %v902, 4
        %v904 = vadd.f32 %v902, %v903
        %v905 = vrot.slane %v904, 2
        %v906 = vadd.f32 %v904, %v905
        %v907 = vrot.slane %v906, 1
        %v908 = vadd.f32 %v906, %v907
        %v909 = vsel %vm337, %v899, 0.0
        %v910 = vrot.slane %v909, 4
        %v911 = vadd.f32 %v909, %v910
        %v912 = vrot.slane %v911, 2
        %v913 = vadd.f32 %v911, %v912
        %v914 = vrot.slane %v913, 1
        %v915 = vadd.f32 %v913, %v914
        %v916 = vadd.f32 %v752, %v908
        %v917 = vadd.f32 %v753, %v915
        %918 = vset.pattern.permute.xlu0 12
        %919 = vperm.xlu0 %918, %v329
        %v920 = vpop.permute.xlu0 %919
        %v922 = vmul.f32 %v871, %v920
        %v923 = vmul.f32 %v872, %v920
        %v924 = vmul.f32 %v873, %v920
        %v925 = vsel %vm337, %v922, 0.0
        %v926 = vrot.slane %v925, 4
        %v927 = vadd.f32 %v925, %v926
        %v928 = vrot.slane %v927, 2
        %v929 = vadd.f32 %v927, %v928
        %v930 = vrot.slane %v929, 1
        %v931 = vadd.f32 %v929, %v930
        %v932 = vsel %vm337, %v923, 0.0
        %v933 = vrot.slane %v932, 4
        %v934 = vadd.f32 %v932, %v933
        %v935 = vrot.slane %v934, 2
        %v936 = vadd.f32 %v934, %v935
        %v937 = vrot.slane %v936, 1
        %v938 = vadd.f32 %v936, %v937
        %v939 = vsel %vm337, %v924, 0.0
        %v940 = vrot.slane %v939, 4
        %v941 = vadd.f32 %v939, %v940
        %v942 = vrot.slane %v941, 2
        %v943 = vadd.f32 %v941, %v942
        %v944 = vrot.slane %v943, 1
        %v945 = vadd.f32 %v943, %v944
        %v946 = vadd.f32 %v782, %v931
        %v947 = vadd.f32 %v783, %v938
        %v948 = vadd.f32 %v784, %v945
        %v952 = vrot.slane %v922, 4
        %v953 = vrot.slane %v923, 4
        %v954 = vrot.slane %v924, 4
        %v958 = vsel %vm337, %v952, 0.0
        %v959 = vrot.slane %v958, 4
        %v960 = vadd.f32 %v958, %v959
        %v961 = vrot.slane %v960, 2
        %v962 = vadd.f32 %v960, %v961
        %v963 = vrot.slane %v962, 1
        %v964 = vadd.f32 %v962, %v963
        %v965 = vsel %vm337, %v953, 0.0
        %v966 = vrot.slane %v965, 4
        %v967 = vadd.f32 %v965, %v966
        %v968 = vrot.slane %v967, 2
        %v969 = vadd.f32 %v967, %v968
        %v970 = vrot.slane %v969, 1
        %v971 = vadd.f32 %v969, %v970
        %v972 = vsel %vm337, %v954, 0.0
        %v973 = vrot.slane %v972, 4
        %v974 = vadd.f32 %v972, %v973
        %v975 = vrot.slane %v974, 2
        %v976 = vadd.f32 %v974, %v975
        %v977 = vrot.slane %v976, 1
        %v978 = vadd.f32 %v976, %v977
        %v979 = vadd.f32 %v815, %v964
        %v980 = vadd.f32 %v816, %v971
        %v981 = vadd.f32 %v817, %v978
        %982 = vset.pattern.permute.xlu0 21
        %983 = vperm.xlu0 %982, %v329
        %v984 = vpop.permute.xlu0 %983
        %v986 = vmul.f32 %v872, %v984
        %v987 = vmul.f32 %v873, %v984
        %v988 = vsel %vm337, %v986, 0.0
        %v989 = vrot.slane %v988, 4
        %v990 = vadd.f32 %v988, %v989
        %v991 = vrot.slane %v990, 2
        %v992 = vadd.f32 %v990, %v991
        %v993 = vrot.slane %v992, 1
        %v994 = vadd.f32 %v992, %v993
        %v995 = vsel %vm337, %v987, 0.0
        %v996 = vrot.slane %v995, 4
        %v997 = vadd.f32 %v995, %v996
        %v998 = vrot.slane %v997, 2
        %v999 = vadd.f32 %v997, %v998
        %v1000 = vrot.slane %v999, 1
        %v1001 = vadd.f32 %v999, %v1000
        %v1002 = vadd.f32 %v838, %v994
        %v1003 = vadd.f32 %v839, %v1001
        %v1006 = vrot.slane %v986, 4
        %v1007 = vrot.slane %v987, 4
        %v1010 = vsel %vm337, %v1006, 0.0
        %v1011 = vrot.slane %v1010, 4
        %v1012 = vadd.f32 %v1010, %v1011
        %v1013 = vrot.slane %v1012, 2
        %v1014 = vadd.f32 %v1012, %v1013
        %v1015 = vrot.slane %v1014, 1
        %v1016 = vadd.f32 %v1014, %v1015
        %v1017 = vsel %vm337, %v1007, 0.0
        %v1018 = vrot.slane %v1017, 4
        %v1019 = vadd.f32 %v1017, %v1018
        %v1020 = vrot.slane %v1019, 2
        %v1021 = vadd.f32 %v1019, %v1020
        %v1022 = vrot.slane %v1021, 1
        %v1023 = vadd.f32 %v1021, %v1022
        %v1024 = vadd.f32 %v860, %v1016
        %v1025 = vadd.f32 %v861, %v1023
        %1026 = vset.pattern.permute.xlu0 4
        %1027 = vperm.xlu0 %1026, %v329
        %v1028 = vpop.permute.xlu0 %1027
        %v1030 = vmul.f32 %v321, %v1028
        %v1031 = vmul.f32 %v322, %v1028
        %vm1032 = vcmask 592968
        %v1033 = vsel %vm1032, %v1030, 0.0
        %v1034 = vrot.slane %v1033, 4
        %v1035 = vadd.f32 %v1033, %v1034
        %v1036 = vrot.slane %v1035, 2
        %v1037 = vadd.f32 %v1035, %v1036
        %v1038 = vrot.slane %v1037, 1
        %v1039 = vadd.f32 %v1037, %v1038
        %v1040 = vsel %vm1032, %v1031, 0.0
        %v1041 = vrot.slane %v1040, 4
        %v1042 = vadd.f32 %v1040, %v1041
        %v1043 = vrot.slane %v1042, 2
        %v1044 = vadd.f32 %v1042, %v1043
        %v1045 = vrot.slane %v1044, 1
        %v1046 = vadd.f32 %v1044, %v1045
        %1049 = vrot.lane.b32.xlu0 %v1039, 119
        %v1050 = vpop.permute.xlu0 %1049
        %1051 = vrot.lane.b32.xlu0 %v1046, 119
        %v1052 = vpop.permute.xlu0 %1051
        %v1055 = vadd.f32 %v894, %v1050
        %v1056 = vadd.f32 %v895, %v1052
        %v1059 = vrot.slane %v1030, 4
        %v1060 = vrot.slane %v1031, 4
        %v1063 = vsel %vm1032, %v1059, 0.0
        %v1064 = vrot.slane %v1063, 4
        %v1065 = vadd.f32 %v1063, %v1064
        %v1066 = vrot.slane %v1065, 2
        %v1067 = vadd.f32 %v1065, %v1066
        %v1068 = vrot.slane %v1067, 1
        %v1069 = vadd.f32 %v1067, %v1068
        %v1070 = vsel %vm1032, %v1060, 0.0
        %v1071 = vrot.slane %v1070, 4
        %v1072 = vadd.f32 %v1070, %v1071
        %v1073 = vrot.slane %v1072, 2
        %v1074 = vadd.f32 %v1072, %v1073
        %v1075 = vrot.slane %v1074, 1
        %v1076 = vadd.f32 %v1074, %v1075
        %1079 = vrot.lane.b32.xlu0 %v1069, 119
        %v1080 = vpop.permute.xlu0 %1079
        %1081 = vrot.lane.b32.xlu0 %v1076, 119
        %v1082 = vpop.permute.xlu0 %1081
        %v1085 = vadd.f32 %v916, %v1080
        %v1086 = vadd.f32 %v917, %v1082
        %1087 = vset.pattern.permute.xlu0 13
        %1088 = vperm.xlu0 %1087, %v329
        %v1089 = vpop.permute.xlu0 %1088
        %v1091 = vmul.f32 %v321, %v1089
        %v1092 = vmul.f32 %v322, %v1089
        %v1093 = vmul.f32 %v323, %v1089
        %v1094 = vsel %vm1032, %v1091, 0.0
        %v1095 = vrot.slane %v1094, 4
        %v1096 = vadd.f32 %v1094, %v1095
        %v1097 = vrot.slane %v1096, 2
        %v1098 = vadd.f32 %v1096, %v1097
        %v1099 = vrot.slane %v1098, 1
        %v1100 = vadd.f32 %v1098, %v1099
        %v1101 = vsel %vm1032, %v1092, 0.0
        %v1102 = vrot.slane %v1101, 4
        %v1103 = vadd.f32 %v1101, %v1102
        %v1104 = vrot.slane %v1103, 2
        %v1105 = vadd.f32 %v1103, %v1104
        %v1106 = vrot.slane %v1105, 1
        %v1107 = vadd.f32 %v1105, %v1106
        %v1108 = vsel %vm1032, %v1093, 0.0
        %v1109 = vrot.slane %v1108, 4
        %v1110 = vadd.f32 %v1108, %v1109
        %v1111 = vrot.slane %v1110, 2
        %v1112 = vadd.f32 %v1110, %v1111
        %v1113 = vrot.slane %v1112, 1
        %v1114 = vadd.f32 %v1112, %v1113
        %1118 = vrot.lane.b32.xlu0 %v1100, 119
        %v1119 = vpop.permute.xlu0 %1118
        %1120 = vrot.lane.b32.xlu0 %v1107, 119
        %v1121 = vpop.permute.xlu0 %1120
        %1122 = vrot.lane.b32.xlu0 %v1114, 119
        %v1123 = vpop.permute.xlu0 %1122
        %v1127 = vadd.f32 %v946, %v1119
        %v1128 = vadd.f32 %v947, %v1121
        %v1129 = vadd.f32 %v948, %v1123
        %v1133 = vrot.slane %v1091, 4
        %v1134 = vrot.slane %v1092, 4
        %v1135 = vrot.slane %v1093, 4
        %v1139 = vsel %vm1032, %v1133, 0.0
        %v1140 = vrot.slane %v1139, 4
        %v1141 = vadd.f32 %v1139, %v1140
        %v1142 = vrot.slane %v1141, 2
        %v1143 = vadd.f32 %v1141, %v1142
        %v1144 = vrot.slane %v1143, 1
        %v1145 = vadd.f32 %v1143, %v1144
        %v1146 = vsel %vm1032, %v1134, 0.0
        %v1147 = vrot.slane %v1146, 4
        %v1148 = vadd.f32 %v1146, %v1147
        %v1149 = vrot.slane %v1148, 2
        %v1150 = vadd.f32 %v1148, %v1149
        %v1151 = vrot.slane %v1150, 1
        %v1152 = vadd.f32 %v1150, %v1151
        %v1153 = vsel %vm1032, %v1135, 0.0
        %v1154 = vrot.slane %v1153, 4
        %v1155 = vadd.f32 %v1153, %v1154
        %v1156 = vrot.slane %v1155, 2
        %v1157 = vadd.f32 %v1155, %v1156
        %v1158 = vrot.slane %v1157, 1
        %v1159 = vadd.f32 %v1157, %v1158
        %1163 = vrot.lane.b32.xlu0 %v1145, 119
        %v1164 = vpop.permute.xlu0 %1163
        %1165 = vrot.lane.b32.xlu0 %v1152, 119
        %v1166 = vpop.permute.xlu0 %1165
        %1167 = vrot.lane.b32.xlu0 %v1159, 119
        %v1168 = vpop.permute.xlu0 %1167
        %v1172 = vadd.f32 %v979, %v1164
        %v1173 = vadd.f32 %v980, %v1166
        %v1174 = vadd.f32 %v981, %v1168
        %1175 = vset.pattern.permute.xlu0 22
        %1176 = vperm.xlu0 %1175, %v329
        %v1177 = vpop.permute.xlu0 %1176
        %v1179 = vmul.f32 %v322, %v1177
        %v1180 = vmul.f32 %v323, %v1177
        %v1181 = vsel %vm1032, %v1179, 0.0
        %v1182 = vrot.slane %v1181, 4
        %v1183 = vadd.f32 %v1181, %v1182
        %v1184 = vrot.slane %v1183, 2
        %v1185 = vadd.f32 %v1183, %v1184
        %v1186 = vrot.slane %v1185, 1
        %v1187 = vadd.f32 %v1185, %v1186
        %v1188 = vsel %vm1032, %v1180, 0.0
        %v1189 = vrot.slane %v1188, 4
        %v1190 = vadd.f32 %v1188, %v1189
        %v1191 = vrot.slane %v1190, 2
        %v1192 = vadd.f32 %v1190, %v1191
        %v1193 = vrot.slane %v1192, 1
        %v1194 = vadd.f32 %v1192, %v1193
        %1197 = vrot.lane.b32.xlu0 %v1187, 119
        %v1198 = vpop.permute.xlu0 %1197
        %1199 = vrot.lane.b32.xlu0 %v1194, 119
        %v1200 = vpop.permute.xlu0 %1199
        %v1203 = vadd.f32 %v1002, %v1198
        %v1204 = vadd.f32 %v1003, %v1200
        %v1207 = vrot.slane %v1179, 4
        %v1208 = vrot.slane %v1180, 4
        %v1211 = vsel %vm1032, %v1207, 0.0
        %v1212 = vrot.slane %v1211, 4
        %v1213 = vadd.f32 %v1211, %v1212
        %v1214 = vrot.slane %v1213, 2
        %v1215 = vadd.f32 %v1213, %v1214
        %v1216 = vrot.slane %v1215, 1
        %v1217 = vadd.f32 %v1215, %v1216
        %v1218 = vsel %vm1032, %v1208, 0.0
        %v1219 = vrot.slane %v1218, 4
        %v1220 = vadd.f32 %v1218, %v1219
        %v1221 = vrot.slane %v1220, 2
        %v1222 = vadd.f32 %v1220, %v1221
        %v1223 = vrot.slane %v1222, 1
        %v1224 = vadd.f32 %v1222, %v1223
        %1227 = vrot.lane.b32.xlu0 %v1217, 119
        %v1228 = vpop.permute.xlu0 %1227
        %1229 = vrot.lane.b32.xlu0 %v1224, 119
        %v1230 = vpop.permute.xlu0 %1229
        %v1233 = vadd.f32 %v1024, %v1228
        %v1234 = vadd.f32 %v1025, %v1230
        %1235 = vrot.lane.b32.xlu0 %v321, 118
        %v1236 = vpop.permute.xlu0 %1235
        %1237 = vrot.lane.b32.xlu0 %v322, 118
        %v1238 = vpop.permute.xlu0 %1237
        %1239 = vrot.lane.b32.xlu0 %v323, 118
        %v1240 = vpop.permute.xlu0 %1239
        %v1244 = vsel %vm694, %v1236, 0.0
        %v1245 = vsel %vm694, %v1238, 0.0
        %v1246 = vsel %vm694, %v1240, 0.0
        %1247 = vset.pattern.permute.xlu0 5
        %1248 = vperm.xlu0 %1247, %v329
        %v1249 = vpop.permute.xlu0 %1248
        %v1251 = vmul.f32 %v1244, %v1249
        %v1252 = vmul.f32 %v1245, %v1249
        %v1253 = vsel %vm337, %v1251, 0.0
        %v1254 = vrot.slane %v1253, 4
        %v1255 = vadd.f32 %v1253, %v1254
        %v1256 = vrot.slane %v1255, 2
        %v1257 = vadd.f32 %v1255, %v1256
        %v1258 = vrot.slane %v1257, 1
        %v1259 = vadd.f32 %v1257, %v1258
        %v1260 = vsel %vm337, %v1252, 0.0
        %v1261 = vrot.slane %v1260, 4
        %v1262 = vadd.f32 %v1260, %v1261
        %v1263 = vrot.slane %v1262, 2
        %v1264 = vadd.f32 %v1262, %v1263
        %v1265 = vrot.slane %v1264, 1
        %v1266 = vadd.f32 %v1264, %v1265
        %v1267 = vadd.f32 %v1055, %v1259
        %v1268 = vadd.f32 %v1056, %v1266
        %v1271 = vrot.slane %v1251, 4
        %v1272 = vrot.slane %v1252, 4
        %v1275 = vsel %vm337, %v1271, 0.0
        %v1276 = vrot.slane %v1275, 4
        %v1277 = vadd.f32 %v1275, %v1276
        %v1278 = vrot.slane %v1277, 2
        %v1279 = vadd.f32 %v1277, %v1278
        %v1280 = vrot.slane %v1279, 1
        %v1281 = vadd.f32 %v1279, %v1280
        %v1282 = vsel %vm337, %v1272, 0.0
        %v1283 = vrot.slane %v1282, 4
        %v1284 = vadd.f32 %v1282, %v1283
        %v1285 = vrot.slane %v1284, 2
        %v1286 = vadd.f32 %v1284, %v1285
        %v1287 = vrot.slane %v1286, 1
        %v1288 = vadd.f32 %v1286, %v1287
        %v1289 = vadd.f32 %v1085, %v1281
        %v1290 = vadd.f32 %v1086, %v1288
        %1291 = vset.pattern.permute.xlu0 14
        %1292 = vperm.xlu0 %1291, %v329
        %v1293 = vpop.permute.xlu0 %1292
        %v1295 = vmul.f32 %v1244, %v1293
        %v1296 = vmul.f32 %v1245, %v1293
        %v1297 = vmul.f32 %v1246, %v1293
        %v1298 = vsel %vm337, %v1295, 0.0
        %v1299 = vrot.slane %v1298, 4
        %v1300 = vadd.f32 %v1298, %v1299
        %v1301 = vrot.slane %v1300, 2
        %v1302 = vadd.f32 %v1300, %v1301
        %v1303 = vrot.slane %v1302, 1
        %v1304 = vadd.f32 %v1302, %v1303
        %v1305 = vsel %vm337, %v1296, 0.0
        %v1306 = vrot.slane %v1305, 4
        %v1307 = vadd.f32 %v1305, %v1306
        %v1308 = vrot.slane %v1307, 2
        %v1309 = vadd.f32 %v1307, %v1308
        %v1310 = vrot.slane %v1309, 1
        %v1311 = vadd.f32 %v1309, %v1310
        %v1312 = vsel %vm337, %v1297, 0.0
        %v1313 = vrot.slane %v1312, 4
        %v1314 = vadd.f32 %v1312, %v1313
        %v1315 = vrot.slane %v1314, 2
        %v1316 = vadd.f32 %v1314, %v1315
        %v1317 = vrot.slane %v1316, 1
        %v1318 = vadd.f32 %v1316, %v1317
        %v1319 = vadd.f32 %v1127, %v1304
        %v1320 = vadd.f32 %v1128, %v1311
        %v1321 = vadd.f32 %v1129, %v1318
        %v1325 = vrot.slane %v1295, 4
        %v1326 = vrot.slane %v1296, 4
        %v1327 = vrot.slane %v1297, 4
        %v1331 = vsel %vm337, %v1325, 0.0
        %v1332 = vrot.slane %v1331, 4
        %v1333 = vadd.f32 %v1331, %v1332
        %v1334 = vrot.slane %v1333, 2
        %v1335 = vadd.f32 %v1333, %v1334
        %v1336 = vrot.slane %v1335, 1
        %v1337 = vadd.f32 %v1335, %v1336
        %v1338 = vsel %vm337, %v1326, 0.0
        %v1339 = vrot.slane %v1338, 4
        %v1340 = vadd.f32 %v1338, %v1339
        %v1341 = vrot.slane %v1340, 2
        %v1342 = vadd.f32 %v1340, %v1341
        %v1343 = vrot.slane %v1342, 1
        %v1344 = vadd.f32 %v1342, %v1343
        %v1345 = vsel %vm337, %v1327, 0.0
        %v1346 = vrot.slane %v1345, 4
        %v1347 = vadd.f32 %v1345, %v1346
        %v1348 = vrot.slane %v1347, 2
        %v1349 = vadd.f32 %v1347, %v1348
        %v1350 = vrot.slane %v1349, 1
        %v1351 = vadd.f32 %v1349, %v1350
        %v1352 = vadd.f32 %v1172, %v1337
        %v1353 = vadd.f32 %v1173, %v1344
        %v1354 = vadd.f32 %v1174, %v1351
        %1355 = vset.pattern.permute.xlu0 23
        %1356 = vperm.xlu0 %1355, %v329
        %v1357 = vpop.permute.xlu0 %1356
        %v1359 = vmul.f32 %v1245, %v1357
        %v1360 = vmul.f32 %v1246, %v1357
        %v1361 = vsel %vm337, %v1359, 0.0
        %v1362 = vrot.slane %v1361, 4
        %v1363 = vadd.f32 %v1361, %v1362
        %v1364 = vrot.slane %v1363, 2
        %v1365 = vadd.f32 %v1363, %v1364
        %v1366 = vrot.slane %v1365, 1
        %v1367 = vadd.f32 %v1365, %v1366
        %v1368 = vsel %vm337, %v1360, 0.0
        %v1369 = vrot.slane %v1368, 4
        %v1370 = vadd.f32 %v1368, %v1369
        %v1371 = vrot.slane %v1370, 2
        %v1372 = vadd.f32 %v1370, %v1371
        %v1373 = vrot.slane %v1372, 1
        %v1374 = vadd.f32 %v1372, %v1373
        %v1375 = vadd.f32 %v1203, %v1367
        %v1376 = vadd.f32 %v1204, %v1374
        %v1379 = vrot.slane %v1359, 4
        %v1380 = vrot.slane %v1360, 4
        %v1383 = vsel %vm337, %v1379, 0.0
        %v1384 = vrot.slane %v1383, 4
        %v1385 = vadd.f32 %v1383, %v1384
        %v1386 = vrot.slane %v1385, 2
        %v1387 = vadd.f32 %v1385, %v1386
        %v1388 = vrot.slane %v1387, 1
        %v1389 = vadd.f32 %v1387, %v1388
        %v1390 = vsel %vm337, %v1380, 0.0
        %v1391 = vrot.slane %v1390, 4
        %v1392 = vadd.f32 %v1390, %v1391
        %v1393 = vrot.slane %v1392, 2
        %v1394 = vadd.f32 %v1392, %v1393
        %v1395 = vrot.slane %v1394, 1
        %v1396 = vadd.f32 %v1394, %v1395
        %v1397 = vadd.f32 %v1233, %v1389
        %v1398 = vadd.f32 %v1234, %v1396
        %1399 = vrot.lane.b32.xlu0 %v321, 112
        %v1400 = vpop.permute.xlu0 %1399
        %1401 = vrot.lane.b32.xlu0 %v322, 112
        %v1402 = vpop.permute.xlu0 %1401
        %1403 = vrot.lane.b32.xlu0 %v323, 112
        %v1404 = vpop.permute.xlu0 %1403
        %v1408 = vsel %vm325, %v1400, 0.0
        %v1409 = vsel %vm325, %v1402, 0.0
        %v1410 = vsel %vm325, %v1404, 0.0
        %1411 = vset.pattern.permute.xlu0 6
        %1412 = vperm.xlu0 %1411, %v329
        %v1413 = vpop.permute.xlu0 %1412
        %v1415 = vmul.f32 %v1408, %v1413
        %v1416 = vmul.f32 %v1409, %v1413
        %v1417 = vsel %vm337, %v1415, 0.0
        %v1418 = vrot.slane %v1417, 4
        %v1419 = vadd.f32 %v1417, %v1418
        %v1420 = vrot.slane %v1419, 2
        %v1421 = vadd.f32 %v1419, %v1420
        %v1422 = vrot.slane %v1421, 1
        %v1423 = vadd.f32 %v1421, %v1422
        %v1424 = vsel %vm337, %v1416, 0.0
        %v1425 = vrot.slane %v1424, 4
        %v1426 = vadd.f32 %v1424, %v1425
        %v1427 = vrot.slane %v1426, 2
        %v1428 = vadd.f32 %v1426, %v1427
        %v1429 = vrot.slane %v1428, 1
        %v1430 = vadd.f32 %v1428, %v1429
        %v1431 = vadd.f32 %v1267, %v1423
        %v1432 = vadd.f32 %v1268, %v1430
        %v1435 = vrot.slane %v1415, 4
        %v1436 = vrot.slane %v1416, 4
        %v1439 = vsel %vm337, %v1435, 0.0
        %v1440 = vrot.slane %v1439, 4
        %v1441 = vadd.f32 %v1439, %v1440
        %v1442 = vrot.slane %v1441, 2
        %v1443 = vadd.f32 %v1441, %v1442
        %v1444 = vrot.slane %v1443, 1
        %v1445 = vadd.f32 %v1443, %v1444
        %v1446 = vsel %vm337, %v1436, 0.0
        %v1447 = vrot.slane %v1446, 4
        %v1448 = vadd.f32 %v1446, %v1447
        %v1449 = vrot.slane %v1448, 2
        %v1450 = vadd.f32 %v1448, %v1449
        %v1451 = vrot.slane %v1450, 1
        %v1452 = vadd.f32 %v1450, %v1451
        %v1453 = vadd.f32 %v1289, %v1445
        %v1454 = vadd.f32 %v1290, %v1452
        %1455 = vset.pattern.permute.xlu0 15
        %1456 = vperm.xlu0 %1455, %v329
        %v1457 = vpop.permute.xlu0 %1456
        %v1459 = vmul.f32 %v1408, %v1457
        %v1460 = vmul.f32 %v1409, %v1457
        %v1461 = vmul.f32 %v1410, %v1457
        %v1462 = vsel %vm337, %v1459, 0.0
        %v1463 = vrot.slane %v1462, 4
        %v1464 = vadd.f32 %v1462, %v1463
        %v1465 = vrot.slane %v1464, 2
        %v1466 = vadd.f32 %v1464, %v1465
        %v1467 = vrot.slane %v1466, 1
        %v1468 = vadd.f32 %v1466, %v1467
        %v1469 = vsel %vm337, %v1460, 0.0
        %v1470 = vrot.slane %v1469, 4
        %v1471 = vadd.f32 %v1469, %v1470
        %v1472 = vrot.slane %v1471, 2
        %v1473 = vadd.f32 %v1471, %v1472
        %v1474 = vrot.slane %v1473, 1
        %v1475 = vadd.f32 %v1473, %v1474
        %v1476 = vsel %vm337, %v1461, 0.0
        %v1477 = vrot.slane %v1476, 4
        %v1478 = vadd.f32 %v1476, %v1477
        %v1479 = vrot.slane %v1478, 2
        %v1480 = vadd.f32 %v1478, %v1479
        %v1481 = vrot.slane %v1480, 1
        %v1482 = vadd.f32 %v1480, %v1481
        %v1483 = vadd.f32 %v1319, %v1468
        %v1484 = vadd.f32 %v1320, %v1475
        %v1485 = vadd.f32 %v1321, %v1482
        %v1489 = vrot.slane %v1459, 4
        %v1490 = vrot.slane %v1460, 4
        %v1491 = vrot.slane %v1461, 4
        %v1495 = vsel %vm337, %v1489, 0.0
        %v1496 = vrot.slane %v1495, 4
        %v1497 = vadd.f32 %v1495, %v1496
        %v1498 = vrot.slane %v1497, 2
        %v1499 = vadd.f32 %v1497, %v1498
        %v1500 = vrot.slane %v1499, 1
        %v1501 = vadd.f32 %v1499, %v1500
        %v1502 = vsel %vm337, %v1490, 0.0
        %v1503 = vrot.slane %v1502, 4
        %v1504 = vadd.f32 %v1502, %v1503
        %v1505 = vrot.slane %v1504, 2
        %v1506 = vadd.f32 %v1504, %v1505
        %v1507 = vrot.slane %v1506, 1
        %v1508 = vadd.f32 %v1506, %v1507
        %v1509 = vsel %vm337, %v1491, 0.0
        %v1510 = vrot.slane %v1509, 4
        %v1511 = vadd.f32 %v1509, %v1510
        %v1512 = vrot.slane %v1511, 2
        %v1513 = vadd.f32 %v1511, %v1512
        %v1514 = vrot.slane %v1513, 1
        %v1515 = vadd.f32 %v1513, %v1514
        %v1516 = vadd.f32 %v1352, %v1501
        %v1517 = vadd.f32 %v1353, %v1508
        %v1518 = vadd.f32 %v1354, %v1515
        %1519 = vset.pattern.permute.xlu0 24
        %1520 = vperm.xlu0 %1519, %v329
        %v1521 = vpop.permute.xlu0 %1520
        %v1523 = vmul.f32 %v1409, %v1521
        %v1524 = vmul.f32 %v1410, %v1521
        %v1525 = vsel %vm337, %v1523, 0.0
        %v1526 = vrot.slane %v1525, 4
        %v1527 = vadd.f32 %v1525, %v1526
        %v1528 = vrot.slane %v1527, 2
        %v1529 = vadd.f32 %v1527, %v1528
        %v1530 = vrot.slane %v1529, 1
        %v1531 = vadd.f32 %v1529, %v1530
        %v1532 = vsel %vm337, %v1524, 0.0
        %v1533 = vrot.slane %v1532, 4
        %v1534 = vadd.f32 %v1532, %v1533
        %v1535 = vrot.slane %v1534, 2
        %v1536 = vadd.f32 %v1534, %v1535
        %v1537 = vrot.slane %v1536, 1
        %v1538 = vadd.f32 %v1536, %v1537
        %v1539 = vadd.f32 %v1375, %v1531
        %v1540 = vadd.f32 %v1376, %v1538
        %v1543 = vrot.slane %v1523, 4
        %v1544 = vrot.slane %v1524, 4
        %v1547 = vsel %vm337, %v1543, 0.0
        %v1548 = vrot.slane %v1547, 4
        %v1549 = vadd.f32 %v1547, %v1548
        %v1550 = vrot.slane %v1549, 2
        %v1551 = vadd.f32 %v1549, %v1550
        %v1552 = vrot.slane %v1551, 1
        %v1553 = vadd.f32 %v1551, %v1552
        %v1554 = vsel %vm337, %v1544, 0.0
        %v1555 = vrot.slane %v1554, 4
        %v1556 = vadd.f32 %v1554, %v1555
        %v1557 = vrot.slane %v1556, 2
        %v1558 = vadd.f32 %v1556, %v1557
        %v1559 = vrot.slane %v1558, 1
        %v1560 = vadd.f32 %v1558, %v1559
        %v1561 = vadd.f32 %v1397, %v1553
        %v1562 = vadd.f32 %v1398, %v1560
        %1563 = vset.pattern.permute.xlu0 7
        %1564 = vperm.xlu0 %1563, %v329
        %v1565 = vpop.permute.xlu0 %1564
        %v1567 = vmul.f32 %v321, %v1565
        %v1568 = vmul.f32 %v322, %v1565
        %vm1569 = vcmask 658568
        %v1570 = vsel %vm1569, %v1567, 0.0
        %v1571 = vrot.slane %v1570, 4
        %v1572 = vadd.f32 %v1570, %v1571
        %v1573 = vrot.slane %v1572, 2
        %v1574 = vadd.f32 %v1572, %v1573
        %v1575 = vrot.slane %v1574, 1
        %v1576 = vadd.f32 %v1574, %v1575
        %v1577 = vsel %vm1569, %v1568, 0.0
        %v1578 = vrot.slane %v1577, 4
        %v1579 = vadd.f32 %v1577, %v1578
        %v1580 = vrot.slane %v1579, 2
        %v1581 = vadd.f32 %v1579, %v1580
        %v1582 = vrot.slane %v1581, 1
        %v1583 = vadd.f32 %v1581, %v1582
        %1586 = vrot.lane.b32.xlu0 %v1576, 111
        %v1587 = vpop.permute.xlu0 %1586
        %1588 = vrot.lane.b32.xlu0 %v1583, 111
        %v1589 = vpop.permute.xlu0 %1588
        %v1592 = vadd.f32 %v1431, %v1587
        %v1593 = vadd.f32 %v1432, %v1589
        %v1596 = vrot.slane %v1567, 4
        %v1597 = vrot.slane %v1568, 4
        %v1600 = vsel %vm1569, %v1596, 0.0
        %v1601 = vrot.slane %v1600, 4
        %v1602 = vadd.f32 %v1600, %v1601
        %v1603 = vrot.slane %v1602, 2
        %v1604 = vadd.f32 %v1602, %v1603
        %v1605 = vrot.slane %v1604, 1
        %v1606 = vadd.f32 %v1604, %v1605
        %v1607 = vsel %vm1569, %v1597, 0.0
        %v1608 = vrot.slane %v1607, 4
        %v1609 = vadd.f32 %v1607, %v1608
        %v1610 = vrot.slane %v1609, 2
        %v1611 = vadd.f32 %v1609, %v1610
        %v1612 = vrot.slane %v1611, 1
        %v1613 = vadd.f32 %v1611, %v1612
        %1616 = vrot.lane.b32.xlu0 %v1606, 111
        %v1617 = vpop.permute.xlu0 %1616
        %1618 = vrot.lane.b32.xlu0 %v1613, 111
        %v1619 = vpop.permute.xlu0 %1618
        %v1622 = vadd.f32 %v1453, %v1617
        %v1623 = vadd.f32 %v1454, %v1619
        %1624 = vset.pattern.permute.xlu0 16
        %1625 = vperm.xlu0 %1624, %v329
        %v1626 = vpop.permute.xlu0 %1625
        %v1628 = vmul.f32 %v321, %v1626
        %v1629 = vmul.f32 %v322, %v1626
        %v1630 = vmul.f32 %v323, %v1626
        %v1631 = vsel %vm1569, %v1628, 0.0
        %v1632 = vrot.slane %v1631, 4
        %v1633 = vadd.f32 %v1631, %v1632
        %v1634 = vrot.slane %v1633, 2
        %v1635 = vadd.f32 %v1633, %v1634
        %v1636 = vrot.slane %v1635, 1
        %v1637 = vadd.f32 %v1635, %v1636
        %v1638 = vsel %vm1569, %v1629, 0.0
        %v1639 = vrot.slane %v1638, 4
        %v1640 = vadd.f32 %v1638, %v1639
        %v1641 = vrot.slane %v1640, 2
        %v1642 = vadd.f32 %v1640, %v1641
        %v1643 = vrot.slane %v1642, 1
        %v1644 = vadd.f32 %v1642, %v1643
        %v1645 = vsel %vm1569, %v1630, 0.0
        %v1646 = vrot.slane %v1645, 4
        %v1647 = vadd.f32 %v1645, %v1646
        %v1648 = vrot.slane %v1647, 2
        %v1649 = vadd.f32 %v1647, %v1648
        %v1650 = vrot.slane %v1649, 1
        %v1651 = vadd.f32 %v1649, %v1650
        %1655 = vrot.lane.b32.xlu0 %v1637, 111
        %v1656 = vpop.permute.xlu0 %1655
        %1657 = vrot.lane.b32.xlu0 %v1644, 111
        %v1658 = vpop.permute.xlu0 %1657
        %1659 = vrot.lane.b32.xlu0 %v1651, 111
        %v1660 = vpop.permute.xlu0 %1659
        %v1664 = vadd.f32 %v1483, %v1656
        %v1665 = vadd.f32 %v1484, %v1658
        %v1666 = vadd.f32 %v1485, %v1660
        %v1670 = vrot.slane %v1628, 4
        %v1671 = vrot.slane %v1629, 4
        %v1672 = vrot.slane %v1630, 4
        %v1676 = vsel %vm1569, %v1670, 0.0
        %v1677 = vrot.slane %v1676, 4
        %v1678 = vadd.f32 %v1676, %v1677
        %v1679 = vrot.slane %v1678, 2
        %v1680 = vadd.f32 %v1678, %v1679
        %v1681 = vrot.slane %v1680, 1
        %v1682 = vadd.f32 %v1680, %v1681
        %v1683 = vsel %vm1569, %v1671, 0.0
        %v1684 = vrot.slane %v1683, 4
        %v1685 = vadd.f32 %v1683, %v1684
        %v1686 = vrot.slane %v1685, 2
        %v1687 = vadd.f32 %v1685, %v1686
        %v1688 = vrot.slane %v1687, 1
        %v1689 = vadd.f32 %v1687, %v1688
        %v1690 = vsel %vm1569, %v1672, 0.0
        %v1691 = vrot.slane %v1690, 4
        %v1692 = vadd.f32 %v1690, %v1691
        %v1693 = vrot.slane %v1692, 2
        %v1694 = vadd.f32 %v1692, %v1693
        %v1695 = vrot.slane %v1694, 1
        %v1696 = vadd.f32 %v1694, %v1695
        %1700 = vrot.lane.b32.xlu0 %v1682, 111
        %v1701 = vpop.permute.xlu0 %1700
        %1702 = vrot.lane.b32.xlu0 %v1689, 111
        %v1703 = vpop.permute.xlu0 %1702
        %1704 = vrot.lane.b32.xlu0 %v1696, 111
        %v1705 = vpop.permute.xlu0 %1704
        %v1709 = vadd.f32 %v1516, %v1701
        %v1710 = vadd.f32 %v1517, %v1703
        %v1711 = vadd.f32 %v1518, %v1705
        %1712 = vset.pattern.permute.xlu0 25
        %1713 = vperm.xlu0 %1712, %v329
        %v1714 = vpop.permute.xlu0 %1713
        %v1716 = vmul.f32 %v322, %v1714
        %v1717 = vmul.f32 %v323, %v1714
        %v1718 = vsel %vm1569, %v1716, 0.0
        %v1719 = vrot.slane %v1718, 4
        %v1720 = vadd.f32 %v1718, %v1719
        %v1721 = vrot.slane %v1720, 2
        %v1722 = vadd.f32 %v1720, %v1721
        %v1723 = vrot.slane %v1722, 1
        %v1724 = vadd.f32 %v1722, %v1723
        %v1725 = vsel %vm1569, %v1717, 0.0
        %v1726 = vrot.slane %v1725, 4
        %v1727 = vadd.f32 %v1725, %v1726
        %v1728 = vrot.slane %v1727, 2
        %v1729 = vadd.f32 %v1727, %v1728
        %v1730 = vrot.slane %v1729, 1
        %v1731 = vadd.f32 %v1729, %v1730
        %1734 = vrot.lane.b32.xlu0 %v1724, 111
        %v1735 = vpop.permute.xlu0 %1734
        %1736 = vrot.lane.b32.xlu0 %v1731, 111
        %v1737 = vpop.permute.xlu0 %1736
        %v1740 = vadd.f32 %v1539, %v1735
        %v1741 = vadd.f32 %v1540, %v1737
        %v1744 = vrot.slane %v1716, 4
        %v1745 = vrot.slane %v1717, 4
        %v1748 = vsel %vm1569, %v1744, 0.0
        %v1749 = vrot.slane %v1748, 4
        %v1750 = vadd.f32 %v1748, %v1749
        %v1751 = vrot.slane %v1750, 2
        %v1752 = vadd.f32 %v1750, %v1751
        %v1753 = vrot.slane %v1752, 1
        %v1754 = vadd.f32 %v1752, %v1753
        %v1755 = vsel %vm1569, %v1745, 0.0
        %v1756 = vrot.slane %v1755, 4
        %v1757 = vadd.f32 %v1755, %v1756
        %v1758 = vrot.slane %v1757, 2
        %v1759 = vadd.f32 %v1757, %v1758
        %v1760 = vrot.slane %v1759, 1
        %v1761 = vadd.f32 %v1759, %v1760
        %1764 = vrot.lane.b32.xlu0 %v1754, 111
        %v1765 = vpop.permute.xlu0 %1764
        %1766 = vrot.lane.b32.xlu0 %v1761, 111
        %v1767 = vpop.permute.xlu0 %1766
        %v1770 = vadd.f32 %v1561, %v1765
        %v1771 = vadd.f32 %v1562, %v1767
        %1772 = vrot.lane.b32.xlu0 %v321, 110
        %v1773 = vpop.permute.xlu0 %1772
        %1774 = vrot.lane.b32.xlu0 %v322, 110
        %v1775 = vpop.permute.xlu0 %1774
        %1776 = vrot.lane.b32.xlu0 %v323, 110
        %v1777 = vpop.permute.xlu0 %1776
        %v1781 = vsel %vm694, %v1773, 0.0
        %v1782 = vsel %vm694, %v1775, 0.0
        %v1783 = vsel %vm694, %v1777, 0.0
        %1784 = vset.pattern.permute.xlu0 8
        %1785 = vperm.xlu0 %1784, %v329
        %v1786 = vpop.permute.xlu0 %1785
        %v1788 = vmul.f32 %v1781, %v1786
        %v1789 = vmul.f32 %v1782, %v1786
        %v1790 = vsel %vm337, %v1788, 0.0
        %v1791 = vrot.slane %v1790, 4
        %v1792 = vadd.f32 %v1790, %v1791
        %v1793 = vrot.slane %v1792, 2
        %v1794 = vadd.f32 %v1792, %v1793
        %v1795 = vrot.slane %v1794, 1
        %v1796 = vadd.f32 %v1794, %v1795
        %v1797 = vsel %vm337, %v1789, 0.0
        %v1798 = vrot.slane %v1797, 4
        %v1799 = vadd.f32 %v1797, %v1798
        %v1800 = vrot.slane %v1799, 2
        %v1801 = vadd.f32 %v1799, %v1800
        %v1802 = vrot.slane %v1801, 1
        %v1803 = vadd.f32 %v1801, %v1802
        %v1804 = vadd.f32 %v1592, %v1796
        %v1805 = vadd.f32 %v1593, %v1803
        %v1808 = vrot.slane %v1788, 4
        %v1809 = vrot.slane %v1789, 4
        %v1812 = vsel %vm337, %v1808, 0.0
        %v1813 = vrot.slane %v1812, 4
        %v1814 = vadd.f32 %v1812, %v1813
        %v1815 = vrot.slane %v1814, 2
        %v1816 = vadd.f32 %v1814, %v1815
        %v1817 = vrot.slane %v1816, 1
        %v1818 = vadd.f32 %v1816, %v1817
        %v1819 = vsel %vm337, %v1809, 0.0
        %v1820 = vrot.slane %v1819, 4
        %v1821 = vadd.f32 %v1819, %v1820
        %v1822 = vrot.slane %v1821, 2
        %v1823 = vadd.f32 %v1821, %v1822
        %v1824 = vrot.slane %v1823, 1
        %v1825 = vadd.f32 %v1823, %v1824
        %v1826 = vadd.f32 %v1622, %v1818
        %v1827 = vadd.f32 %v1623, %v1825
        %1828 = vset.pattern.permute.xlu0 17
        %1829 = vperm.xlu0 %1828, %v329
        %v1830 = vpop.permute.xlu0 %1829
        %v1832 = vmul.f32 %v1781, %v1830
        %v1833 = vmul.f32 %v1782, %v1830
        %v1834 = vmul.f32 %v1783, %v1830
        %v1835 = vsel %vm337, %v1832, 0.0
        %v1836 = vrot.slane %v1835, 4
        %v1837 = vadd.f32 %v1835, %v1836
        %v1838 = vrot.slane %v1837, 2
        %v1839 = vadd.f32 %v1837, %v1838
        %v1840 = vrot.slane %v1839, 1
        %v1841 = vadd.f32 %v1839, %v1840
        %v1842 = vsel %vm337, %v1833, 0.0
        %v1843 = vrot.slane %v1842, 4
        %v1844 = vadd.f32 %v1842, %v1843
        %v1845 = vrot.slane %v1844, 2
        %v1846 = vadd.f32 %v1844, %v1845
        %v1847 = vrot.slane %v1846, 1
        %v1848 = vadd.f32 %v1846, %v1847
        %v1849 = vsel %vm337, %v1834, 0.0
        %v1850 = vrot.slane %v1849, 4
        %v1851 = vadd.f32 %v1849, %v1850
        %v1852 = vrot.slane %v1851, 2
        %v1853 = vadd.f32 %v1851, %v1852
        %v1854 = vrot.slane %v1853, 1
        %v1855 = vadd.f32 %v1853, %v1854
        %v1856 = vadd.f32 %v1664, %v1841
        %v1857 = vadd.f32 %v1665, %v1848
        %v1858 = vadd.f32 %v1666, %v1855
        %v1862 = vrot.slane %v1832, 4
        %v1863 = vrot.slane %v1833, 4
        %v1864 = vrot.slane %v1834, 4
        %v1868 = vsel %vm337, %v1862, 0.0
        %v1869 = vrot.slane %v1868, 4
        %v1870 = vadd.f32 %v1868, %v1869
        %v1871 = vrot.slane %v1870, 2
        %v1872 = vadd.f32 %v1870, %v1871
        %v1873 = vrot.slane %v1872, 1
        %v1874 = vadd.f32 %v1872, %v1873
        %v1875 = vsel %vm337, %v1863, 0.0
        %v1876 = vrot.slane %v1875, 4
        %v1877 = vadd.f32 %v1875, %v1876
        %v1878 = vrot.slane %v1877, 2
        %v1879 = vadd.f32 %v1877, %v1878
        %v1880 = vrot.slane %v1879, 1
        %v1881 = vadd.f32 %v1879, %v1880
        %v1882 = vsel %vm337, %v1864, 0.0
        %v1883 = vrot.slane %v1882, 4
        %v1884 = vadd.f32 %v1882, %v1883
        %v1885 = vrot.slane %v1884, 2
        %v1886 = vadd.f32 %v1884, %v1885
        %v1887 = vrot.slane %v1886, 1
        %v1888 = vadd.f32 %v1886, %v1887
        %v1889 = vadd.f32 %v1709, %v1874
        %v1890 = vadd.f32 %v1710, %v1881
        %v1891 = vadd.f32 %v1711, %v1888
        %1892 = vset.pattern.permute.xlu0 26
        %1893 = vperm.xlu0 %1892, %v329
        %v1894 = vpop.permute.xlu0 %1893
        %v1896 = vmul.f32 %v1782, %v1894
        %v1897 = vmul.f32 %v1783, %v1894
        %v1898 = vsel %vm337, %v1896, 0.0
        %v1899 = vrot.slane %v1898, 4
        %v1900 = vadd.f32 %v1898, %v1899
        %v1901 = vrot.slane %v1900, 2
        %v1902 = vadd.f32 %v1900, %v1901
        %v1903 = vrot.slane %v1902, 1
        %v1904 = vadd.f32 %v1902, %v1903
        %v1905 = vsel %vm337, %v1897, 0.0
        %v1906 = vrot.slane %v1905, 4
        %v1907 = vadd.f32 %v1905, %v1906
        %v1908 = vrot.slane %v1907, 2
        %v1909 = vadd.f32 %v1907, %v1908
        %v1910 = vrot.slane %v1909, 1
        %v1911 = vadd.f32 %v1909, %v1910
        %v1912 = vadd.f32 %v1740, %v1904
        %v1913 = vadd.f32 %v1741, %v1911
        %v1916 = vrot.slane %v1896, 4
        %v1917 = vrot.slane %v1897, 4
        %v1920 = vsel %vm337, %v1916, 0.0
        %v1921 = vrot.slane %v1920, 4
        %v1922 = vadd.f32 %v1920, %v1921
        %v1923 = vrot.slane %v1922, 2
        %v1924 = vadd.f32 %v1922, %v1923
        %v1925 = vrot.slane %v1924, 1
        %v1926 = vadd.f32 %v1924, %v1925
        %v1927 = vsel %vm337, %v1917, 0.0
        %v1928 = vrot.slane %v1927, 4
        %v1929 = vadd.f32 %v1927, %v1928
        %v1930 = vrot.slane %v1929, 2
        %v1931 = vadd.f32 %v1929, %v1930
        %v1932 = vrot.slane %v1931, 1
        %v1933 = vadd.f32 %v1931, %v1932
        %v1934 = vadd.f32 %v1770, %v1926
        %v1935 = vadd.f32 %v1771, %v1933
        %v1936 = vadd.f32 %v1856, 0.0
        %v1937 = vadd.f32 %v1857, %v1804
        %v1938 = vadd.f32 %v1858, %v1805
        %v1939 = vadd.f32 %v1936, %v1912
        %v1940 = vadd.f32 %v1937, %v1913
        %v1941 = vadd.f32 %v1938, 0.0
        %s1942 = sld [smem:[#allocation7]]
        %v1943 = vstv %s1942
        %v1944 = vadd.f32 %v1939, %v1943
        %v1945 = vadd.f32 %v1940, %v1943
        %v1946 = vadd.f32 %v1941, %v1943
        %v1947 = vtanh.pop %v1944
        %v1948 = vtanh.pop %v1945
        %v1949 = vtanh.pop %v1946
        %v1950 = vadd.f32 %v1889, 0.0
        %v1951 = vadd.f32 %v1890, %v1826
        %v1952 = vadd.f32 %v1891, %v1827
        %v1953 = vadd.f32 %v1950, %v1934
        %v1954 = vadd.f32 %v1951, %v1935
        %v1955 = vadd.f32 %v1952, 0.0
        %s1956 = sld [smem:[#allocation7 + $0x1]]
        %v1957 = vstv %s1956
        %v1958 = vadd.f32 %v1953, %v1957
        %v1959 = vadd.f32 %v1954, %v1957
        %v1960 = vadd.f32 %v1955, %v1957
        %v1961 = vtanh.pop %v1958
        %v1962 = vtanh.pop %v1959
        %v1963 = vtanh.pop %v1960
        %v1964 = vld [vmem:[%s225] sm:$0xf]
        %v1965 = vld [vmem:[%s225 + $0x8] sm:$0xf]
        %v1966 = vld [vmem:[%s225 + $0x10] sm:$0xf]
        %v1967 = vld [vmem:[%s225 + $0x4] sm:$0xf]
        %v1968 = vld [vmem:[%s225 + $0xc] sm:$0xf]
        %v1969 = vld [vmem:[%s225 + $0x14] sm:$0xf]
        %v1970 = vlaneseq
        %v1971 = vshrl.u32 %v1970, 7
        %v1972 = vsub.s32 0, %v1971
        %v1973 = vrot.slane %v1947, %v1972
        %v1974 = vlaneseq
        %v1975 = vshrl.u32 %v1974, 7
        %v1976 = vsub.s32 0, %v1975
        %v1977 = vrot.slane %v1948, %v1976
        %v1978 = vlaneseq
        %v1979 = vshrl.u32 %v1978, 7
        %v1980 = vsub.s32 0, %v1979
        %v1981 = vrot.slane %v1949, %v1980
        %v1982 = vmul.f32 %v1973, %v1964
        %v1983 = vmul.f32 %v1977, %v1965
        %v1984 = vmul.f32 %v1981, %v1966
        %v1985 = vlaneseq
        %v1986 = vshrl.u32 %v1985, 7
        %v1987 = vsub.s32 0, %v1986
        %v1988 = vrot.slane %v1961, %v1987
        %v1989 = vlaneseq
        %v1990 = vshrl.u32 %v1989, 7
        %v1991 = vsub.s32 0, %v1990
        %v1992 = vrot.slane %v1962, %v1991
        %v1993 = vlaneseq
        %v1994 = vshrl.u32 %v1993, 7
        %v1995 = vsub.s32 0, %v1994
        %v1996 = vrot.slane %v1963, %v1995
        %v1997 = vmul.f32 %v1988, %v1967
        %v1998 = vmul.f32 %v1992, %v1968
        %v1999 = vmul.f32 %v1996, %v1969
        %v2000 = vsub.f32 %v1964, %v1982
        %v2001 = vsub.f32 %v1965, %v1983
        %v2002 = vsub.f32 %v1966, %v1984
        %v2003 = vsub.f32 %v1967, %v1997
        %v2004 = vsub.f32 %v1968, %v1998
        %v2005 = vsub.f32 %v1969, %v1999
        %v2006 = vadd.f32 %v1983, %v2000
        %v2007 = vadd.f32 %v1984, %v2001
        %v2008 = vadd.f32 %v2002, 0.0
        %v2009 = vadd.f32 %v2003, 0.0
        %v2010 = vadd.f32 %v1997, %v2004
        %v2011 = vadd.f32 %v1998, %v2005
        %v2015 = vrot.slane %v2006, 1
        %v2016 = vrot.slane %v2007, 1
        %v2017 = vrot.slane %v2008, 1
        %v2021 = vrot.slane %v2006, 7
        %v2022 = vrot.slane %v2007, 7
        %v2023 = vrot.slane %v2008, 7
        %v2030 = vrot.slane %v2009, 4
        %v2031 = vrot.slane %v2010, 4
        %v2032 = vrot.slane %v2011, 4
        %v2036 = vrot.slane %v2009, 5
        %v2037 = vrot.slane %v2010, 5
        %v2038 = vrot.slane %v2011, 5
        %v2042 = vrot.slane %v2009, 3
        %v2043 = vrot.slane %v2010, 3
        %v2044 = vrot.slane %v2011, 3
        %vm2048 = vcmask 1040384
        %v2049 = vsel %vm2048, %v2006, %v2015
        %v2050 = vsel %vm2048, %v2007, %v2016
        %v2051 = vsel %vm2048, %v2008, %v2017
        %vm2052 = vcmask 1041408
        %v2053 = vsel %vm2052, %v2049, %v2021
        %v2054 = vsel %vm2052, %v2050, %v2022
        %v2055 = vsel %vm2052, %v2051, %v2023
        %vm2056 = vcmask 1042432
        %v2057 = vsel %vm2056, %v2053, %v2006
        %v2058 = vsel %vm2056, %v2054, %v2007
        %v2059 = vsel %vm2056, %v2055, %v2008
        %vm2060 = vcmask 1043456
        %v2061 = vsel %vm2060, %v2057, %v2030
        %v2062 = vsel %vm2060, %v2058, %v2031
        %v2063 = vsel %vm2060, %v2059, %v2032
        %vm2064 = vcmask 1044480
        %v2065 = vsel %vm2064, %v2061, %v2036
        %v2066 = vsel %vm2064, %v2062, %v2037
        %v2067 = vsel %vm2064, %v2063, %v2038
        %vm2068 = vcmask 1045504
        %v2069 = vsel %vm2068, %v2065, %v2042
        %v2070 = vsel %vm2068, %v2066, %v2043
        %v2071 = vsel %vm2068, %v2067, %v2044
        %vm2072 = vcmask 1046528
        %v2073 = vsel %vm2072, %v2069, %v2030
        %v2074 = vsel %vm2072, %v2070, %v2031
        %v2075 = vsel %vm2072, %v2071, %v2032
        %vm2076 = vcmask 523264
        %2077 = vst.msk [vmem:[%s256] sm:$0xff] %vm2076, %v2073
        %2078 = vst.msk [vmem:[%s256 + $0x8] sm:$0xff] %vm2076, %v2074
        %2079 = vst.msk [vmem:[%s256 + $0x10] sm:$0xff] %vm2076, %v2075
        %s2080 = sand.u32 %s141, 1
        %s2081 = scalar_lea.sflag [#allocation5], %s2080
        %s2082 = sand.u32 %s141, 1
        %s2083 = smul.addr %s2082, 24
        %s2084 = scalar_lea.vmem [#allocation8], %s2083
        // Predicated region
        $region49: #{tpu_custom_call.1} parent=39 // pred_check
          %p2085 = pneg %p151
        $region50: #{tpu_custom_call.1} parent=39 // pred_check_branch
          %2087 = sbr.rel (%p2085) target = $region52
        $region51: #{tpu_custom_call.1} parent=39 // pred_region
          %s2089 = ssub.s32 384, 384
          %2090 = vsyncadd %s2081, %s2089
          %s2091 = smul.addr %s23, 3
          %s2092 = smul.addr %s2091, 128
          %s2093 = scalar_lea.hbm %s5, %s2092
          %s2094 = sshll.u32 %s2084, 4
          %s2095 = int_to_ptr.vmem [resolvable:$true] %s2094
          %2100 = dma.vmem_to_hbm [thread:$0]  %s2095, 384, %s2093, %s2081, 128, 128, 8
        $region52: #{tpu_custom_call.1} parent=39 // pred_fallthru
          _
      $region40: #{tpu_custom_call.1} parent=5 // pred_fallthru
        _
      %p2101 = scmp.le.s32.totalorder 2, %s18
      // Predicated region
      $region53: #{tpu_custom_call.1} parent=5 // pred_check
        %p2102 = pneg %p2101
      $region54: #{tpu_custom_call.1} parent=5 // pred_check_branch
        %2104 = sbr.rel (%p2102) target = $region56
      $region55: #{tpu_custom_call.1} parent=5 // pred_region
        %s2105 = ssub.s32 %s18, 2
        // Predicated region
        $region57: #{tpu_custom_call.1} parent=55 // pred_check
          %p2106 = pneg %p157
        $region58: #{tpu_custom_call.1} parent=55 // pred_check_branch
          %2108 = sbr.rel (%p2106) target = $region60
        $region59: #{tpu_custom_call.1} parent=55 // pred_region
          %s2109 = sand.u32 %s142, 1
          %s2110 = scalar_lea.sflag [#allocation5], %s2109
          %s2111 = sand.u32 %s142, 1
          %s2112 = smul.addr %s2111, 24
          %s2113 = scalar_lea.vmem [#allocation8], %s2112
          %2114 = dma.done %s2110, 384
        $region60: #{tpu_custom_call.1} parent=55 // pred_fallthru
          _
      $region56: #{tpu_custom_call.1} parent=5 // pred_fallthru
        _
    $region6: #{tpu_custom_call.1} parent=1 // loop_footer
      %s22 = sadd.s32 1, %s18
    $region7: #{tpu_custom_call.1} parent=1 // loop_footer_branch
      %17 = sbr.rel target = $region3
    $region8: #{tpu_custom_call.1} parent=1 // loop_exit
      _
    %2115 = vsyncpa [#allocation4], 1
    %s2116 = scalar_lea.sflag [#allocation4], 1
    %2117 = vsyncpa %s2116, 1
    %2118 = vsyncpa [#allocation5], 1
    %s2119 = scalar_lea.sflag [#allocation5], 1
    %2120 = vsyncpa %s2119, 1
    %2121 = vsyncpa [#allocation6], 1
    %s2122 = scalar_lea.sflag [#allocation6], 1
    %2123 = vsyncpa %s2122, 1

// kernel: tpu_custom_call.1
$region0: #{tpu_custom_call.1}
  #allocation0 [shape = 'u32[]', space=smem, size = 0x4, offset = 0x4, fixed_abs, tag = 'smem constant byte address 0x4 - core index']
  #allocation1 [shape = 'u32[144,128]{1,0:T(1,128)}', space=vmem, size = 0x12000, scoped, tag = 'internal scratch']
  #allocation2 [shape = 'f32[3,8,82]{2,1,0:T(8,128)}', space=vmem, size = 0x3000, scoped, tag = 'scratch operand']
  %s0 = inlined_call_operand.hbm [shape: f32[2,3,8,64], index: 0, kind: input, shape index: {}]
  %s1 = inlined_call_operand.vmem [shape: f32[8,1], index: 1, kind: input, shape index: {}]
  %s2 = inlined_call_operand.vmem [shape: f32[8,1], index: 2, kind: input, shape index: {}]
  %s3 = inlined_call_operand.vmem [shape: f32[8,27], index: 3, kind: input, shape index: {}]
  %s4 = inlined_call_operand.vmem [shape: f32[2], index: 4, kind: input, shape index: {}]
  %s5 = inlined_call_operand.hbm [shape: f32[2,3,8,64], index: 5, kind: output, shape index: {}]
  %s6 = sld [smem:[#allocation0]]
  $region61: #{tpu_custom_call.1} parent=0
    _
  %s8 = ssub.s32 1, %s6
  %s9 = scalar_select 0, %s8, %s6
  $region1: #{tpu_custom_call.1} parent=0
    #allocation3 [shape = 'u8[24576]{0}', space=vmem, size = 0x6000, scoped, tag = 'input window, operand 0']
    #allocation4 [shape = 's32[2]{0}', space=sflag, size = 0x8, scoped, tag = 'scoped memory for tpu_custom_call.1']
    #allocation5 [shape = 's32[2]{0}', space=sflag, size = 0x8, scoped, tag = 'scoped memory for tpu_custom_call.1']
    #allocation6 [shape = 's32[2]{0}', space=sflag, size = 0x8, scoped, tag = 'scoped memory for tpu_custom_call.1']
    #allocation7 [shape = 'u8[512]{0}', space=smem, size = 0x200, scoped, tag = 'input window, operand 4, single buffered']
    #allocation8 [shape = 'u8[24576]{0}', space=vmem, size = 0x6000, scoped, tag = 'output window, operand 0']
    %10 = vsyncpa [#allocation4], 0
    %s11 = scalar_lea.sflag [#allocation4], 1
    %12 = vsyncpa %s11, 0
    %13 = vsyncpa [#allocation6], 0
    %14 = vsyncpa [#allocation5], 0
    %s15 = scalar_lea.sflag [#allocation5], 1
    %16 = vsyncpa %s15, 0
    loop: start=0, step=1, limit=4
    $region2: #{tpu_custom_call.1} parent=1 // loop_pre_header
      _
    $region3: #{tpu_custom_call.1} parent=1 // loop_header
      %s18 = sphi 0, %s22
      %p19 = scmp.ge.s32.totalorder %s18, 4
      %s28 = sphi 0, %s30
      %s31 = sphi 0, %s28
      %s32 = sphi 0, %s31
      %s48 = sphi 0, %s32
      %s52 = sphi 0, %s52
      %s54 = sphi 0, %s52
      %s55 = sphi 0, %s54
      %s69 = sphi 0, %s55
      %s73 = sphi 0, %s73
      %s75 = sphi 0, %s73
      %s76 = sphi 0, %s75
      %s90 = sphi 0, %s76
      %s94 = sphi 0, %s94
      %s96 = sphi 0, %s94
      %s97 = sphi 0, %s96
      %s111 = sphi 0, %s97
      %s115 = sphi 0, %s115
      %s117 = sphi 0, %s115
      %s118 = sphi 0, %s117
      %s132 = sphi 0, %s118
      %s138 = sphi 0, %s140
      %s141 = sphi 0, %s138
      %s142 = sphi 0, %s141
      %s158 = sphi 0, %s142
    $region4: #{tpu_custom_call.1} parent=1 // loop_header_branch
      %21 = sbr.rel (%p19) target = $region8
    $region5: #{tpu_custom_call.1} parent=1 // loop_body
      %s23 = ssub.s32 %s18, 1
      %s24 = ssub.s32 %s18, 2
      %s25 = sadd.s32 %s18, 1
      %s26 = ssub.s32 %s18, %s25
      %p27 = scmp.eq.s32.totalorder %s26, 0
      %s29 = sadd.s32 %s28, 1
      %s30 = scalar_select %p27, %s28, %s29
      %p33 = pneg %p27
      %p34 = scmp.eq.s32.totalorder %s18, 1
      %p35 = por %p33, %p34
      %p36 = scmp.ne.s32.totalorder %s28, %s31
      %p37 = scmp.eq.s32.totalorder %s18, 0
      %p38 = por %p36, %p37
      %p39 = scmp.ne.s32.totalorder %s28, %s31
      %p40 = scmp.eq.s32.totalorder %s23, 1
      %p41 = por %p39, %p40
      %p42 = scmp.ne.s32.totalorder %s31, %s32
      %p43 = scmp.eq.s32.totalorder %s23, 0
      %p44 = por %p42, %p43
      %p45 = scmp.ne.s32.totalorder %s31, %s32
      %p46 = scmp.eq.s32.totalorder %s24, 1
      %p47 = por %p45, %p46
      %p49 = scmp.ne.s32.totalorder %s32, %s48
      %p50 = scmp.eq.s32.totalorder %s24, 0
      %p51 = por %p49, %p50
      %s53 = sadd.s32 %s52, 1
      %p56 = scmp.eq.s32.totalorder %s18, 1
      %p57 = scmp.ne.s32.totalorder %s52, %s54
      %p58 = scmp.eq.s32.totalorder %s18, 0
      %p59 = por %p57, %p58
      %p60 = scmp.ne.s32.totalorder %s52, %s54
      %p61 = scmp.eq.s32.totalorder %s23, 1
      %p62 = por %p60, %p61
      %p63 = scmp.ne.s32.totalorder %s54, %s55
      %p64 = scmp.eq.s32.totalorder %s23, 0
      %p65 = por %p63, %p64
      %p66 = scmp.ne.s32.totalorder %s54, %s55
      %p67 = scmp.eq.s32.totalorder %s24, 1
      %p68 = por %p66, %p67
      %p70 = scmp.ne.s32.totalorder %s55, %s69
      %p71 = scmp.eq.s32.totalorder %s24, 0
      %p72 = por %p70, %p71
      %s74 = sadd.s32 %s73, 1
      %p77 = scmp.eq.s32.totalorder %s18, 1
      %p78 = scmp.ne.s32.totalorder %s73, %s75
      %p79 = scmp.eq.s32.totalorder %s18, 0
      %p80 = por %p78, %p79
      %p81 = scmp.ne.s32.totalorder %s73, %s75
      %p82 = scmp.eq.s32.totalorder %s23, 1
      %p83 = por %p81, %p82
      %p84 = scmp.ne.s32.totalorder %s75, %s76
      %p85 = scmp.eq.s32.totalorder %s23, 0
      %p86 = por %p84, %p85
      %p87 = scmp.ne.s32.totalorder %s75, %s76
      %p88 = scmp.eq.s32.totalorder %s24, 1
      %p89 = por %p87, %p88
      %p91 = scmp.ne.s32.totalorder %s76, %s90
      %p92 = scmp.eq.s32.totalorder %s24, 0
      %p93 = por %p91, %p92
      %s95 = sadd.s32 %s94, 1
      %p98 = scmp.eq.s32.totalorder %s18, 1
      %p99 = scmp.ne.s32.totalorder %s94, %s96
      %p100 = scmp.eq.s32.totalorder %s18, 0
      %p101 = por %p99, %p100
      %p102 = scmp.ne.s32.totalorder %s94, %s96
      %p103 = scmp.eq.s32.totalorder %s23, 1
      %p104 = por %p102, %p103
      %p105 = scmp.ne.s32.totalorder %s96, %s97
      %p106 = scmp.eq.s32.totalorder %s23, 0
      %p107 = por %p105, %p106
      %p108 = scmp.ne.s32.totalorder %s96, %s97
      %p109 = scmp.eq.s32.totalorder %s24, 1
      %p110 = por %p108, %p109
      %p112 = scmp.ne.s32.totalorder %s97, %s111
      %p113 = scmp.eq.s32.totalorder %s24, 0
      %p114 = por %p112, %p113
      %s116 = sadd.s32 %s115, 1
      %p119 = scmp.eq.s32.totalorder %s18, 1
      %p120 = scmp.ne.s32.totalorder %s115, %s117
      %p121 = scmp.eq.s32.totalorder %s18, 0
      %p122 = por %p120, %p121
      %p123 = scmp.ne.s32.totalorder %s115, %s117
      %p124 = scmp.eq.s32.totalorder %s23, 1
      %p125 = por %p123, %p124
      %p126 = scmp.ne.s32.totalorder %s117, %s118
      %p127 = scmp.eq.s32.totalorder %s23, 0
      %p128 = por %p126, %p127
      %p129 = scmp.ne.s32.totalorder %s117, %s118
      %p130 = scmp.eq.s32.totalorder %s24, 1
      %p131 = por %p129, %p130
      %p133 = scmp.ne.s32.totalorder %s118, %s132
      %p134 = scmp.eq.s32.totalorder %s24, 0
      %p135 = por %p133, %p134
      %s136 = ssub.s32 %s18, %s25
      %p137 = scmp.eq.s32.totalorder %s136, 0
      %s139 = sadd.s32 %s138, 1
      %s140 = scalar_select %p137, %s138, %s139
      %p143 = pneg %p137
      %p144 = scmp.eq.s32.totalorder %s18, 1
      %p145 = por %p143, %p144
      %p146 = scmp.ne.s32.totalorder %s138, %s141
      %p147 = scmp.eq.s32.totalorder %s18, 0
      %p148 = por %p146, %p147
      %p149 = scmp.ne.s32.totalorder %s138, %s141
      %p150 = scmp.eq.s32.totalorder %s23, 1
      %p151 = por %p149, %p150
      %p152 = scmp.ne.s32.totalorder %s141, %s142
      %p153 = scmp.eq.s32.totalorder %s23, 0
      %p154 = por %p152, %p153
      %p155 = scmp.ne.s32.totalorder %s141, %s142
      %p156 = scmp.eq.s32.totalorder %s24, 1
      %p157 = por %p155, %p156
      %p159 = scmp.ne.s32.totalorder %s142, %s158
      %p160 = scmp.eq.s32.totalorder %s24, 0
      %p161 = por %p159, %p160
      %p162 = scmp.le.s32.totalorder 1, %s18
      %p163 = scmp.lt.s32.totalorder %s18, 3
      %p164 = pnand %p162, %p163
      %p165 = pneg %p164
      // Predicated region
      $region9: #{tpu_custom_call.1} parent=5 // pred_check
        _
      $region10: #{tpu_custom_call.1} parent=5 // pred_check_branch
        %167 = sbr.rel (%p164) target = $region12
      $region11: #{tpu_custom_call.1} parent=5 // pred_region
        %s168 = ssub.s32 %s18, 1
        // Predicated region
        $region13: #{tpu_custom_call.1} parent=11 // pred_check
          %p169 = pneg %p65
        $region14: #{tpu_custom_call.1} parent=11 // pred_check_branch
          %171 = sbr.rel (%p169) target = $region16
        $region15: #{tpu_custom_call.1} parent=11 // pred_region
          _
        $region16: #{tpu_custom_call.1} parent=11 // pred_fallthru
          _
        // Predicated region
        $region17: #{tpu_custom_call.1} parent=11 // pred_check
          %p172 = pneg %p86
        $region18: #{tpu_custom_call.1} parent=11 // pred_check_branch
          %174 = sbr.rel (%p172) target = $region20
        $region19: #{tpu_custom_call.1} parent=11 // pred_region
          _
        $region20: #{tpu_custom_call.1} parent=11 // pred_fallthru
          _
        // Predicated region
        $region21: #{tpu_custom_call.1} parent=11 // pred_check
          %p175 = pneg %p107
        $region22: #{tpu_custom_call.1} parent=11 // pred_check_branch
          %177 = sbr.rel (%p175) target = $region24
        $region23: #{tpu_custom_call.1} parent=11 // pred_region
          _
        $region24: #{tpu_custom_call.1} parent=11 // pred_fallthru
          _
        // Predicated region
        $region25: #{tpu_custom_call.1} parent=11 // pred_check
          %p178 = pneg %p128
        $region26: #{tpu_custom_call.1} parent=11 // pred_check_branch
          %180 = sbr.rel (%p178) target = $region28
        $region27: #{tpu_custom_call.1} parent=11 // pred_region
          %s182 = ssub.s32 16, 16
          %183 = vsyncadd [#allocation6], %s182
          %s185 = sshll.u32 %s4, 4
          %s186 = int_to_ptr.vmem [resolvable:$true] %s185
          %188 = dma.vmem_to_smem %s186, 16, [#allocation7], [#allocation6]
        $region28: #{tpu_custom_call.1} parent=11 // pred_fallthru
          _
      $region12: #{tpu_custom_call.1} parent=5 // pred_fallthru
        _
      %p189 = scmp.lt.s32.totalorder %s18, 2
      // Predicated region
      $region29: #{tpu_custom_call.1} parent=5 // pred_check
        %p190 = pneg %p189
      $region30: #{tpu_custom_call.1} parent=5 // pred_check_branch
        %192 = sbr.rel (%p190) target = $region32
      $region31: #{tpu_custom_call.1} parent=5 // pred_region
        // Predicated region
        $region33: #{tpu_custom_call.1} parent=31 // pred_check
          %p193 = pneg %p38
        $region34: #{tpu_custom_call.1} parent=31 // pred_check_branch
          %195 = sbr.rel (%p193) target = $region36
        $region35: #{tpu_custom_call.1} parent=31 // pred_region
          %s196 = sand.u32 %s28, 1
          %s197 = scalar_lea.sflag [#allocation4], %s196
          %s198 = sand.u32 %s28, 1
          %s199 = smul.addr %s198, 24
          %s200 = scalar_lea.vmem [#allocation3], %s199
          %s202 = ssub.s32 384, 384
          %203 = vsyncadd %s197, %s202
          %s204 = smul.addr %s18, 3
          %s205 = smul.addr %s204, 128
          %s206 = scalar_lea.hbm %s0, %s205
          %s207 = sshll.u32 %s200, 4
          %s208 = int_to_ptr.vmem [resolvable:$true] %s207
          %213 = dma.hbm_to_vmem [thread:$0]  %s206, 384, %s208, %s197, 128, 128, 8
        $region36: #{tpu_custom_call.1} parent=31 // pred_fallthru
          _
      $region32: #{tpu_custom_call.1} parent=5 // pred_fallthru
        _
      %p214 = scmp.le.s32.totalorder 1, %s18
      %p215 = scmp.lt.s32.totalorder %s18, 3
      %p216 = pnand %p214, %p215
      %p217 = pneg %p216
      // Predicated region
      $region37: #{tpu_custom_call.1} parent=5 // pred_check
        _
      $region38: #{tpu_custom_call.1} parent=5 // pred_check_branch
        %219 = sbr.rel (%p216) target = $region40
      $region39: #{tpu_custom_call.1} parent=5 // pred_region
        %s220 = ssub.s32 %s18, 1
        %s221 = sand.u32 %s31, 1
        %s222 = scalar_lea.sflag [#allocation4], %s221
        %s223 = sand.u32 %s31, 1
        %s224 = smul.addr %s223, 24
        %s225 = scalar_lea.vmem [#allocation3], %s224
        // Predicated region
        $region41: #{tpu_custom_call.1} parent=39 // pred_check
          %p226 = pneg %p44
        $region42: #{tpu_custom_call.1} parent=39 // pred_check_branch
          %228 = sbr.rel (%p226) target = $region44
        $region43: #{tpu_custom_call.1} parent=39 // pred_region
          %229 = dma.done %s222, 384
        $region44: #{tpu_custom_call.1} parent=39 // pred_fallthru
          _
        // Predicated region
        $region45: #{tpu_custom_call.1} parent=39 // pred_check
          %p230 = pneg %p128
        $region46: #{tpu_custom_call.1} parent=39 // pred_check_branch
          %232 = sbr.rel (%p230) target = $region48
        $region47: #{tpu_custom_call.1} parent=39 // pred_region
          %233 = dma.done [#allocation6], 16
        $region48: #{tpu_custom_call.1} parent=39 // pred_fallthru
          _
        %234 = sfence
        %s235 = sand.u32 %s31, 1
        %s236 = scalar_lea.sflag [#allocation4], %s235
        %s237 = sand.u32 %s31, 1
        %s238 = smul.addr %s237, 24
        %s239 = scalar_lea.vmem [#allocation3], %s238
        %p240 = pneg %p44
        %p241 = pneg %p41
        %p242 = pneg %p65
        %p243 = pneg %p62
        %p244 = pneg %p86
        %p245 = pneg %p83
        %p246 = pneg %p107
        %p247 = pneg %p104
        %p248 = pneg %p128
        %p249 = pneg %p125
        %p250 = pneg %p154
        %p251 = pneg %p151
        %s252 = sand.u32 %s141, 1
        %s253 = scalar_lea.sflag [#allocation5], %s252
        %s254 = sand.u32 %s141, 1
        %s255 = smul.addr %s254, 24
        %s256 = scalar_lea.vmem [#allocation8], %s255
        %v257 = vld [vmem:[%s225] sm:$0xff]
        %v258 = vld [vmem:[%s225 + $0x8] sm:$0xff]
        %v259 = vld [vmem:[%s225 + $0x10] sm:$0xff]
        %v260 = vld [vmem:[%s1] sm:$0xff]
        %262 = vset.pattern.permute.xlu0 0
        %263 = vperm.xlu0 %262, %v260
        %v264 = vpop.permute.xlu0 %263
        %v266 = vmul.f32 %v257, %v264
        %v267 = vmul.f32 %v258, %v264
        %v268 = vmul.f32 %v259, %v264
        %v269 = vld [vmem:[%s2] sm:$0xff]
        %271 = vset.pattern.permute.xlu0 0
        %272 = vperm.xlu0 %271, %v269
        %v273 = vpop.permute.xlu0 %272
        %v275 = vadd.f32 %v266, %v273
        %v276 = vadd.f32 %v267, %v273
        %v277 = vadd.f32 %v268, %v273
        %v278 = vmax.f32 %v275, 0.0
        %v279 = vmax.f32 %v276, 0.0
        %v280 = vmax.f32 %v277, 0.0
        %284 = vrot.lane.b32.xlu0 %v278, 9
        %v285 = vpop.permute.xlu0 %284
        %286 = vrot.lane.b32.xlu0 %v279, 9
        %v287 = vpop.permute.xlu0 %286
        %288 = vrot.lane.b32.xlu0 %v280, 9
        %v289 = vpop.permute.xlu0 %288
        %vm293 = vcmask 597064
        %294 = vst.msk [vmem:[#allocation2] sm:$0xff] %vm293, %v285
        %295 = vst.msk [vmem:[#allocation2 + $0x8] sm:$0xff] %vm293, %v287
        %296 = vst.msk [vmem:[#allocation2 + $0x10] sm:$0xff] %vm293, %v289
        %vm297 = vcmask 72704
        %298 = vst.msk [vmem:[#allocation2] sm:$0xff] %vm297, 0.0
        %299 = vst.msk [vmem:[#allocation2 + $0x8] sm:$0xff] %vm297, 0.0
        %300 = vst.msk [vmem:[#allocation2 + $0x10] sm:$0xff] %vm297, 0.0
        %vm301 = vcmask 671304
        %302 = vst.msk [vmem:[#allocation2] sm:$0xff] %vm301, 0.0
        %303 = vst.msk [vmem:[#allocation2 + $0x8] sm:$0xff] %vm301, 0.0
        %304 = vst.msk [vmem:[#allocation2 + $0x10] sm:$0xff] %vm301, 0.0
        %v305 = vlaneseq
        %v306 = vand.u32 %v305, 127
        %vm307 = vcmp.lt.s32.totalorder %v306, 0
        %v308 = vsub.s32 0, %v306
        %v309 = vsel %vm307, %v308, %v306
        %v310 = vshrl.u32 %v309, 3
        %v311 = vand.u32 %v309, 7
        %v312 = vsub.s32 0, %v311
        %v313 = vsel %vm307, %v312, %v311
        %vm314 = vcmp.ne.s32.totalorder %v313, 0
        %vm315 = vcmp.lt.s32.totalorder %v313, 0
        %vm316 = vmand %vm315, %vm314
        %v317 = vadd.s32 %v313, 8
        %v318 = vsel %vm316, %v317, %v313
        %vm319 = vcmp.ge.s32.totalorder %v318, 1
        %vm320 = vcmp.le.s32.totalorder %v318, 6
        %v321 = vld [vmem:[#allocation2] sm:$0xff]
        %v322 = vld [vmem:[#allocation2 + $0x8] sm:$0xff]
        %v323 = vld [vmem:[#allocation2 + $0x10] sm:$0xff]
        %v324 = vsel %vm319, 1, 0
        %vm325 = vcmp.eq.s32.totalorder %v324, 1
        %v326 = vsel %vm325, %v321, 0.0
        %v327 = vsel %vm325, %v322, 0.0
        %v328 = vsel %vm325, %v323, 0.0
        %v329 = vld [vmem:[%s3] sm:$0xff]
        %331 = vset.pattern.permute.xlu0 0
        %332 = vperm.xlu0 %331, %v329
        %v333 = vpop.permute.xlu0 %332
        %v335 = vmul.f32 %v326, %v333
        %v336 = vmul.f32 %v327, %v333
        %vm337 = vcmask 519168
        %v338 = vsel %vm337, %v335, 0.0
        %v339 = vrot.slane %v338, 4
        %v340 = vadd.f32 %v338, %v339
        %v341 = vrot.slane %v340, 2
        %v342 = vadd.f32 %v340, %v341
        %v343 = vrot.slane %v342, 1
        %v344 = vadd.f32 %v342, %v343
        %v345 = vsel %vm337, %v336, 0.0
        %v346 = vrot.slane %v345, 4
        %v347 = vadd.f32 %v345, %v346
        %v348 = vrot.slane %v347, 2
        %v349 = vadd.f32 %v347, %v348
        %v350 = vrot.slane %v349, 1
        %v351 = vadd.f32 %v349, %v350
        %v352 = vadd.f32 %v344, 0.0
        %v353 = vadd.f32 %v351, 0.0
        %v356 = vrot.slane %v335, 4
        %v357 = vrot.slane %v336, 4
        %v360 = vsel %vm337, %v356, 0.0
        %v361 = vrot.slane %v360, 4
        %v362 = vadd.f32 %v360, %v361
        %v363 = vrot.slane %v362, 2
        %v364 = vadd.f32 %v362, %v363
        %v365 = vrot.slane %v364, 1
        %v366 = vadd.f32 %v364, %v365
        %v367 = vsel %vm337, %v357, 0.0
        %v368 = vrot.slane %v367, 4
        %v369 = vadd.f32 %v367, %v368
        %v370 = vrot.slane %v369, 2
        %v371 = vadd.f32 %v369, %v370
        %v372 = vrot.slane %v371, 1
        %v373 = vadd.f32 %v371, %v372
        %v374 = vadd.f32 %v366, 0.0
        %v375 = vadd.f32 %v373, 0.0
        %376 = vset.pattern.permute.xlu0 9
        %377 = vperm.xlu0 %376, %v329
        %v378 = vpop.permute.xlu0 %377
        %v380 = vmul.f32 %v326, %v378
        %v381 = vmul.f32 %v327, %v378
        %v382 = vmul.f32 %v328, %v378
        %v383 = vsel %vm337, %v380, 0.0
        %v384 = vrot.slane %v383, 4
        %v385 = vadd.f32 %v383, %v384
        %v386 = vrot.slane %v385, 2
        %v387 = vadd.f32 %v385, %v386
        %v388 = vrot.slane %v387, 1
        %v389 = vadd.f32 %v387, %v388
        %v390 = vsel %vm337, %v381, 0.0
        %v391 = vrot.slane %v390, 4
        %v392 = vadd.f32 %v390, %v391
        %v393 = vrot.slane %v392, 2
        %v394 = vadd.f32 %v392, %v393
        %v395 = vrot.slane %v394, 1
        %v396 = vadd.f32 %v394, %v395
        %v397 = vsel %vm337, %v382, 0.0
        %v398 = vrot.slane %v397, 4
        %v399 = vadd.f32 %v397, %v398
        %v400 = vrot.slane %v399, 2
        %v401 = vadd.f32 %v399, %v400
        %v402 = vrot.slane %v401, 1
        %v403 = vadd.f32 %v401, %v402
        %v404 = vadd.f32 %v389, 0.0
        %v405 = vadd.f32 %v396, 0.0
        %v406 = vadd.f32 %v403, 0.0
        %v410 = vrot.slane %v380, 4
        %v411 = vrot.slane %v381, 4
        %v412 = vrot.slane %v382, 4
        %v416 = vsel %vm337, %v410, 0.0
        %v417 = vrot.slane %v416, 4
        %v418 = vadd.f32 %v416, %v417
        %v419 = vrot.slane %v418, 2
        %v420 = vadd.f32 %v418, %v419
        %v421 = vrot.slane %v420, 1
        %v422 = vadd.f32 %v420, %v421
        %v423 = vsel %vm337, %v411, 0.0
        %v424 = vrot.slane %v423, 4
        %v425 = vadd.f32 %v423, %v424
        %v426 = vrot.slane %v425, 2
        %v427 = vadd.f32 %v425, %v426
        %v428 = vrot.slane %v427, 1
        %v429 = vadd.f32 %v427, %v428
        %v430 = vsel %vm337, %v412, 0.0
        %v431 = vrot.slane %v430, 4
        %v432 = vadd.f32 %v430, %v431
        %v433 = vrot.slane %v432, 2
        %v434 = vadd.f32 %v432, %v433
        %v435 = vrot.slane %v434, 1
        %v436 = vadd.f32 %v434, %v435
        %v437 = vadd.f32 %v422, 0.0
        %v438 = vadd.f32 %v429, 0.0
        %v439 = vadd.f32 %v436, 0.0
        %440 = vset.pattern.permute.xlu0 18
        %441 = vperm.xlu0 %440, %v329
        %v442 = vpop.permute.xlu0 %441
        %v444 = vmul.f32 %v327, %v442
        %v445 = vmul.f32 %v328, %v442
        %v446 = vsel %vm337, %v444, 0.0
        %v447 = vrot.slane %v446, 4
        %v448 = vadd.f32 %v446, %v447
        %v449 = vrot.slane %v448, 2
        %v450 = vadd.f32 %v448, %v449
        %v451 = vrot.slane %v450, 1
        %v452 = vadd.f32 %v450, %v451
        %v453 = vsel %vm337, %v445, 0.0
        %v454 = vrot.slane %v453, 4
        %v455 = vadd.f32 %v453, %v454
        %v456 = vrot.slane %v455, 2
        %v457 = vadd.f32 %v455, %v456
        %v458 = vrot.slane %v457, 1
        %v459 = vadd.f32 %v457, %v458
        %v460 = vadd.f32 %v452, 0.0
        %v461 = vadd.f32 %v459, 0.0
        %v464 = vrot.slane %v444, 4
        %v465 = vrot.slane %v445, 4
        %v468 = vsel %vm337, %v464, 0.0
        %v469 = vrot.slane %v468, 4
        %v470 = vadd.f32 %v468, %v469
        %v471 = vrot.slane %v470, 2
        %v472 = vadd.f32 %v470, %v471
        %v473 = vrot.slane %v472, 1
        %v474 = vadd.f32 %v472, %v473
        %v475 = vsel %vm337, %v465, 0.0
        %v476 = vrot.slane %v475, 4
        %v477 = vadd.f32 %v475, %v476
        %v478 = vrot.slane %v477, 2
        %v479 = vadd.f32 %v477, %v478
        %v480 = vrot.slane %v479, 1
        %v481 = vadd.f32 %v479, %v480
        %v482 = vadd.f32 %v474, 0.0
        %v483 = vadd.f32 %v481, 0.0
        %484 = vset.pattern.permute.xlu0 1
        %485 = vperm.xlu0 %484, %v329
        %v486 = vpop.permute.xlu0 %485
        %v488 = vmul.f32 %v321, %v486
        %v489 = vmul.f32 %v322, %v486
        %vm490 = vcmask 527368
        %v491 = vsel %vm490, %v488, 0.0
        %v492 = vrot.slane %v491, 4
        %v493 = vadd.f32 %v491, %v492
        %v494 = vrot.slane %v493, 2
        %v495 = vadd.f32 %v493, %v494
        %v496 = vrot.slane %v495, 1
        %v497 = vadd.f32 %v495, %v496
        %v498 = vsel %vm490, %v489, 0.0
        %v499 = vrot.slane %v498, 4
        %v500 = vadd.f32 %v498, %v499
        %v501 = vrot.slane %v500, 2
        %v502 = vadd.f32 %v500, %v501
        %v503 = vrot.slane %v502, 1
        %v504 = vadd.f32 %v502, %v503
        %507 = vrot.lane.b32.xlu0 %v497, 127
        %v508 = vpop.permute.xlu0 %507
        %509 = vrot.lane.b32.xlu0 %v504, 127
        %v510 = vpop.permute.xlu0 %509
        %v513 = vadd.f32 %v352, %v508
        %v514 = vadd.f32 %v353, %v510
        %v517 = vrot.slane %v488, 4
        %v518 = vrot.slane %v489, 4
        %v521 = vsel %vm490, %v517, 0.0
        %v522 = vrot.slane %v521, 4
        %v523 = vadd.f32 %v521, %v522
        %v524 = vrot.slane %v523, 2
        %v525 = vadd.f32 %v523, %v524
        %v526 = vrot.slane %v525, 1
        %v527 = vadd.f32 %v525, %v526
        %v528 = vsel %vm490, %v518, 0.0
        %v529 = vrot.slane %v528, 4
        %v530 = vadd.f32 %v528, %v529
        %v531 = vrot.slane %v530, 2
        %v532 = vadd.f32 %v530, %v531
        %v533 = vrot.slane %v532, 1
        %v534 = vadd.f32 %v532, %v533
        %537 = vrot.lane.b32.xlu0 %v527, 127
        %v538 = vpop.permute.xlu0 %537
        %539 = vrot.lane.b32.xlu0 %v534, 127
        %v540 = vpop.permute.xlu0 %539
        %v543 = vadd.f32 %v374, %v538
        %v544 = vadd.f32 %v375, %v540
        %545 = vset.pattern.permute.xlu0 10
        %546 = vperm.xlu0 %545, %v329
        %v547 = vpop.permute.xlu0 %546
        %v549 = vmul.f32 %v321, %v547
        %v550 = vmul.f32 %v322, %v547
        %v551 = vmul.f32 %v323, %v547
        %v552 = vsel %vm490, %v549, 0.0
        %v553 = vrot.slane %v552, 4
        %v554 = vadd.f32 %v552, %v553
        %v555 = vrot.slane %v554, 2
        %v556 = vadd.f32 %v554, %v555
        %v557 = vrot.slane %v556, 1
        %v558 = vadd.f32 %v556, %v557
        %v559 = vsel %vm490, %v550, 0.0
        %v560 = vrot.slane %v559, 4
        %v561 = vadd.f32 %v559, %v560
        %v562 = vrot.slane %v561, 2
        %v563 = vadd.f32 %v561, %v562
        %v564 = vrot.slane %v563, 1
        %v565 = vadd.f32 %v563, %v564
        %v566 = vsel %vm490, %v551, 0.0
        %v567 = vrot.slane %v566, 4
        %v568 = vadd.f32 %v566, %v567
        %v569 = vrot.slane %v568, 2
        %v570 = vadd.f32 %v568, %v569
        %v571 = vrot.slane %v570, 1
        %v572 = vadd.f32 %v570, %v571
        %576 = vrot.lane.b32.xlu0 %v558, 127
        %v577 = vpop.permute.xlu0 %576
        %578 = vrot.lane.b32.xlu0 %v565, 127
        %v579 = vpop.permute.xlu0 %578
        %580 = vrot.lane.b32.xlu0 %v572, 127
        %v581 = vpop.permute.xlu0 %580
        %v585 = vadd.f32 %v404, %v577
        %v586 = vadd.f32 %v405, %v579
        %v587 = vadd.f32 %v406, %v581
        %v591 = vrot.slane %v549, 4
        %v592 = vrot.slane %v550, 4
        %v593 = vrot.slane %v551, 4
        %v597 = vsel %vm490, %v591, 0.0
        %v598 = vrot.slane %v597, 4
        %v599 = vadd.f32 %v597, %v598
        %v600 = vrot.slane %v599, 2
        %v601 = vadd.f32 %v599, %v600
        %v602 = vrot.slane %v601, 1
        %v603 = vadd.f32 %v601, %v602
        %v604 = vsel %vm490, %v592, 0.0
        %v605 = vrot.slane %v604, 4
        %v606 = vadd.f32 %v604, %v605
        %v607 = vrot.slane %v606, 2
        %v608 = vadd.f32 %v606, %v607
        %v609 = vrot.slane %v608, 1
        %v610 = vadd.f32 %v608, %v609
        %v611 = vsel %vm490, %v593, 0.0
        %v612 = vrot.slane %v611, 4
        %v613 = vadd.f32 %v611, %v612
        %v614 = vrot.slane %v613, 2
        %v615 = vadd.f32 %v613, %v614
        %v616 = vrot.slane %v615, 1
        %v617 = vadd.f32 %v615, %v616
        %621 = vrot.lane.b32.xlu0 %v603, 127
        %v622 = vpop.permute.xlu0 %621
        %623 = vrot.lane.b32.xlu0 %v610, 127
        %v624 = vpop.permute.xlu0 %623
        %625 = vrot.lane.b32.xlu0 %v617, 127
        %v626 = vpop.permute.xlu0 %625
        %v630 = vadd.f32 %v437, %v622
        %v631 = vadd.f32 %v438, %v624
        %v632 = vadd.f32 %v439, %v626
        %633 = vset.pattern.permute.xlu0 19
        %634 = vperm.xlu0 %633, %v329
        %v635 = vpop.permute.xlu0 %634
        %v637 = vmul.f32 %v322, %v635
        %v638 = vmul.f32 %v323, %v635
        %v639 = vsel %vm490, %v637, 0.0
        %v640 = vrot.slane %v639, 4
        %v641 = vadd.f32 %v639, %v640
        %v642 = vrot.slane %v641, 2
        %v643 = vadd.f32 %v641, %v642
        %v644 = vrot.slane %v643, 1
        %v645 = vadd.f32 %v643, %v644
        %v646 = vsel %vm490, %v638, 0.0
        %v647 = vrot.slane %v646, 4
        %v648 = vadd.f32 %v646, %v647
        %v649 = vrot.slane %v648, 2
        %v650 = vadd.f32 %v648, %v649
        %v651 = vrot.slane %v650, 1
        %v652 = vadd.f32 %v650, %v651
        %655 = vrot.lane.b32.xlu0 %v645, 127
        %v656 = vpop.permute.xlu0 %655
        %657 = vrot.lane.b32.xlu0 %v652, 127
        %v658 = vpop.permute.xlu0 %657
        %v661 = vadd.f32 %v460, %v656
        %v662 = vadd.f32 %v461, %v658
        %v665 = vrot.slane %v637, 4
        %v666 = vrot.slane %v638, 4
        %v669 = vsel %vm490, %v665, 0.0
        %v670 = vrot.slane %v669, 4
        %v671 = vadd.f32 %v669, %v670
        %v672 = vrot.slane %v671, 2
        %v673 = vadd.f32 %v671, %v672
        %v674 = vrot.slane %v673, 1
        %v675 = vadd.f32 %v673, %v674
        %v676 = vsel %vm490, %v666, 0.0
        %v677 = vrot.slane %v676, 4
        %v678 = vadd.f32 %v676, %v677
        %v679 = vrot.slane %v678, 2
        %v680 = vadd.f32 %v678, %v679
        %v681 = vrot.slane %v680, 1
        %v682 = vadd.f32 %v680, %v681
        %685 = vrot.lane.b32.xlu0 %v675, 127
        %v686 = vpop.permute.xlu0 %685
        %687 = vrot.lane.b32.xlu0 %v682, 127
        %v688 = vpop.permute.xlu0 %687
        %v691 = vadd.f32 %v482, %v686
        %v692 = vadd.f32 %v483, %v688
        %v693 = vsel %vm320, 1, 0
        %vm694 = vcmp.eq.s32.totalorder %v693, 1
        %698 = vrot.lane.b32.xlu0 %v321, 126
        %v699 = vpop.permute.xlu0 %698
        %700 = vrot.lane.b32.xlu0 %v322, 126
        %v701 = vpop.permute.xlu0 %700
        %702 = vrot.lane.b32.xlu0 %v323, 126
        %v703 = vpop.permute.xlu0 %702
        %v707 = vsel %vm694, %v699, 0.0
        %v708 = vsel %vm694, %v701, 0.0
        %v709 = vsel %vm694, %v703, 0.0
        %710 = vset.pattern.permute.xlu0 2
        %711 = vperm.xlu0 %710, %v329
        %v712 = vpop.permute.xlu0 %711
        %v714 = vmul.f32 %v707, %v712
        %v715 = vmul.f32 %v708, %v712
        %v716 = vsel %vm337, %v714, 0.0
        %v717 = vrot.slane %v716, 4
        %v718 = vadd.f32 %v716, %v717
        %v719 = vrot.slane %v718, 2
        %v720 = vadd.f32 %v718, %v719
        %v721 = vrot.slane %v720, 1
        %v722 = vadd.f32 %v720, %v721
        %v723 = vsel %vm337, %v715, 0.0
        %v724 = vrot.slane %v723, 4
        %v725 = vadd.f32 %v723, %v724
        %v726 = vrot.slane %v725, 2
        %v727 = vadd.f32 %v725, %v726
        %v728 = vrot.slane %v727, 1
        %v729 = vadd.f32 %v727, %v728
        %v730 = vadd.f32 %v513, %v722
        %v731 = vadd.f32 %v514, %v729
        %v734 = vrot.slane %v714, 4
        %v735 = vrot.slane %v715, 4
        %v738 = vsel %vm337, %v734, 0.0
        %v739 = vrot.slane %v738, 4
        %v740 = vadd.f32 %v738, %v739
        %v741 = vrot.slane %v740, 2
        %v742 = vadd.f32 %v740, %v741
        %v743 = vrot.slane %v742, 1
        %v744 = vadd.f32 %v742, %v743
        %v745 = vsel %vm337, %v735, 0.0
        %v746 = vrot.slane %v745, 4
        %v747 = vadd.f32 %v745, %v746
        %v748 = vrot.slane %v747, 2
        %v749 = vadd.f32 %v747, %v748
        %v750 = vrot.slane %v749, 1
        %v751 = vadd.f32 %v749, %v750
        %v752 = vadd.f32 %v543, %v744
        %v753 = vadd.f32 %v544, %v751
        %754 = vset.pattern.permute.xlu0 11
        %755 = vperm.xlu0 %754, %v329
        %v756 = vpop.permute.xlu0 %755
        %v758 = vmul.f32 %v707, %v756
        %v759 = vmul.f32 %v708, %v756
        %v760 = vmul.f32 %v709, %v756
        %v761 = vsel %vm337, %v758, 0.0
        %v762 = vrot.slane %v761, 4
        %v763 = vadd.f32 %v761, %v762
        %v764 = vrot.slane %v763, 2
        %v765 = vadd.f32 %v763, %v764
        %v766 = vrot.slane %v765, 1
        %v767 = vadd.f32 %v765, %v766
        %v768 = vsel %vm337, %v759, 0.0
        %v769 = vrot.slane %v768, 4
        %v770 = vadd.f32 %v768, %v769
        %v771 = vrot.slane %v770, 2
        %v772 = vadd.f32 %v770, %v771
        %v773 = vrot.slane %v772, 1
        %v774 = vadd.f32 %v772, %v773
        %v775 = vsel %vm337, %v760, 0.0
        %v776 = vrot.slane %v775, 4
        %v777 = vadd.f32 %v775, %v776
        %v778 = vrot.slane %v777, 2
        %v779 = vadd.f32 %v777, %v778
        %v780 = vrot.slane %v779, 1
        %v781 = vadd.f32 %v779, %v780
        %v782 = vadd.f32 %v585, %v767
        %v783 = vadd.f32 %v586, %v774
        %v784 = vadd.f32 %v587, %v781
        %v788 = vrot.slane %v758, 4
        %v789 = vrot.slane %v759, 4
        %v790 = vrot.slane %v760, 4
        %v794 = vsel %vm337, %v788, 0.0
        %v795 = vrot.slane %v794, 4
        %v796 = vadd.f32 %v794, %v795
        %v797 = vrot.slane %v796, 2
        %v798 = vadd.f32 %v796, %v797
        %v799 = vrot.slane %v798, 1
        %v800 = vadd.f32 %v798, %v799
        %v801 = vsel %vm337, %v789, 0.0
        %v802 = vrot.slane %v801, 4
        %v803 = vadd.f32 %v801, %v802
        %v804 = vrot.slane %v803, 2
        %v805 = vadd.f32 %v803, %v804
        %v806 = vrot.slane %v805, 1
        %v807 = vadd.f32 %v805, %v806
        %v808 = vsel %vm337, %v790, 0.0
        %v809 = vrot.slane %v808, 4
        %v810 = vadd.f32 %v808, %v809
        %v811 = vrot.slane %v810, 2
        %v812 = vadd.f32 %v810, %v811
        %v813 = vrot.slane %v812, 1
        %v814 = vadd.f32 %v812, %v813
        %v815 = vadd.f32 %v630, %v800
        %v816 = vadd.f32 %v631, %v807
        %v817 = vadd.f32 %v632, %v814
        %818 = vset.pattern.permute.xlu0 20
        %819 = vperm.xlu0 %818, %v329
        %v820 = vpop.permute.xlu0 %819
        %v822 = vmul.f32 %v708, %v820
        %v823 = vmul.f32 %v709, %v820
        %v824 = vsel %vm337, %v822, 0.0
        %v825 = vrot.slane %v824, 4
        %v826 = vadd.f32 %v824, %v825
        %v827 = vrot.slane %v826, 2
        %v828 = vadd.f32 %v826, %v827
        %v829 = vrot.slane %v828, 1
        %v830 = vadd.f32 %v828, %v829
        %v831 = vsel %vm337, %v823, 0.0
        %v832 = vrot.slane %v831, 4
        %v833 = vadd.f32 %v831, %v832
        %v834 = vrot.slane %v833, 2
        %v835 = vadd.f32 %v833, %v834
        %v836 = vrot.slane %v835, 1
        %v837 = vadd.f32 %v835, %v836
        %v838 = vadd.f32 %v661, %v830
        %v839 = vadd.f32 %v662, %v837
        %v842 = vrot.slane %v822, 4
        %v843 = vrot.slane %v823, 4
        %v846 = vsel %vm337, %v842, 0.0
        %v847 = vrot.slane %v846, 4
        %v848 = vadd.f32 %v846, %v847
        %v849 = vrot.slane %v848, 2
        %v850 = vadd.f32 %v848, %v849
        %v851 = vrot.slane %v850, 1
        %v852 = vadd.f32 %v850, %v851
        %v853 = vsel %vm337, %v843, 0.0
        %v854 = vrot.slane %v853, 4
        %v855 = vadd.f32 %v853, %v854
        %v856 = vrot.slane %v855, 2
        %v857 = vadd.f32 %v855, %v856
        %v858 = vrot.slane %v857, 1
        %v859 = vadd.f32 %v857, %v858
        %v860 = vadd.f32 %v691, %v852
        %v861 = vadd.f32 %v692, %v859
        %862 = vrot.lane.b32.xlu0 %v321, 120
        %v863 = vpop.permute.xlu0 %862
        %864 = vrot.lane.b32.xlu0 %v322, 120
        %v865 = vpop.permute.xlu0 %864
        %866 = vrot.lane.b32.xlu0 %v323, 120
        %v867 = vpop.permute.xlu0 %866
        %v871 = vsel %vm325, %v863, 0.0
        %v872 = vsel %vm325, %v865, 0.0
        %v873 = vsel %vm325, %v867, 0.0
        %874 = vset.pattern.permute.xlu0 3
        %875 = vperm.xlu0 %874, %v329
        %v876 = vpop.permute.xlu0 %875
        %v878 = vmul.f32 %v871, %v876
        %v879 = vmul.f32 %v872, %v876
        %v880 = vsel %vm337, %v878, 0.0
        %v881 = vrot.slane %v880, 4
        %v882 = vadd.f32 %v880, %v881
        %v883 = vrot.slane %v882, 2
        %v884 = vadd.f32 %v882, %v883
        %v885 = vrot.slane %v884, 1
        %v886 = vadd.f32 %v884, %v885
        %v887 = vsel %vm337, %v879, 0.0
        %v888 = vrot.slane %v887, 4
        %v889 = vadd.f32 %v887, %v888
        %v890 = vrot.slane %v889, 2
        %v891 = vadd.f32 %v889, %v890
        %v892 = vrot.slane %v891, 1
        %v893 = vadd.f32 %v891, %v892
        %v894 = vadd.f32 %v730, %v886
        %v895 = vadd.f32 %v731, %v893
        %v898 = vrot.slane %v878, 4
        %v899 = vrot.slane %v879, 4
        %v902 = vsel %vm337, %v898, 0.0
        %v903 = vrot.slane %v902, 4
        %v904 = vadd.f32 %v902, %v903
        %v905 = vrot.slane %v904, 2
        %v906 = vadd.f32 %v904, %v905
        %v907 = vrot.slane %v906, 1
        %v908 = vadd.f32 %v906, %v907
        %v909 = vsel %vm337, %v899, 0.0
        %v910 = vrot.slane %v909, 4
        %v911 = vadd.f32 %v909, %v910
        %v912 = vrot.slane %v911, 2
        %v913 = vadd.f32 %v911, %v912
        %v914 = vrot.slane %v913, 1
        %v915 = vadd.f32 %v913, %v914
        %v916 = vadd.f32 %v752, %v908
        %v917 = vadd.f32 %v753, %v915
        %918 = vset.pattern.permute.xlu0 12
        %919 = vperm.xlu0 %918, %v329
        %v920 = vpop.permute.xlu0 %919
        %v922 = vmul.f32 %v871, %v920
        %v923 = vmul.f32 %v872, %v920
        %v924 = vmul.f32 %v873, %v920
        %v925 = vsel %vm337, %v922, 0.0
        %v926 = vrot.slane %v925, 4
        %v927 = vadd.f32 %v925, %v926
        %v928 = vrot.slane %v927, 2
        %v929 = vadd.f32 %v927, %v928
        %v930 = vrot.slane %v929, 1
        %v931 = vadd.f32 %v929, %v930
        %v932 = vsel %vm337, %v923, 0.0
        %v933 = vrot.slane %v932, 4
        %v934 = vadd.f32 %v932, %v933
        %v935 = vrot.slane %v934, 2
        %v936 = vadd.f32 %v934, %v935
        %v937 = vrot.slane %v936, 1
        %v938 = vadd.f32 %v936, %v937
        %v939 = vsel %vm337, %v924, 0.0
        %v940 = vrot.slane %v939, 4
        %v941 = vadd.f32 %v939, %v940
        %v942 = vrot.slane %v941, 2
        %v943 = vadd.f32 %v941, %v942
        %v944 = vrot.slane %v943, 1
        %v945 = vadd.f32 %v943, %v944
        %v946 = vadd.f32 %v782, %v931
        %v947 = vadd.f32 %v783, %v938
        %v948 = vadd.f32 %v784, %v945
        %v952 = vrot.slane %v922, 4
        %v953 = vrot.slane %v923, 4
        %v954 = vrot.slane %v924, 4
        %v958 = vsel %vm337, %v952, 0.0
        %v959 = vrot.slane %v958, 4
        %v960 = vadd.f32 %v958, %v959
        %v961 = vrot.slane %v960, 2
        %v962 = vadd.f32 %v960, %v961
        %v963 = vrot.slane %v962, 1
        %v964 = vadd.f32 %v962, %v963
        %v965 = vsel %vm337, %v953, 0.0
        %v966 = vrot.slane %v965, 4
        %v967 = vadd.f32 %v965, %v966
        %v968 = vrot.slane %v967, 2
        %v969 = vadd.f32 %v967, %v968
        %v970 = vrot.slane %v969, 1
        %v971 = vadd.f32 %v969, %v970
        %v972 = vsel %vm337, %v954, 0.0
        %v973 = vrot.slane %v972, 4
        %v974 = vadd.f32 %v972, %v973
        %v975 = vrot.slane %v974, 2
        %v976 = vadd.f32 %v974, %v975
        %v977 = vrot.slane %v976, 1
        %v978 = vadd.f32 %v976, %v977
        %v979 = vadd.f32 %v815, %v964
        %v980 = vadd.f32 %v816, %v971
        %v981 = vadd.f32 %v817, %v978
        %982 = vset.pattern.permute.xlu0 21
        %983 = vperm.xlu0 %982, %v329
        %v984 = vpop.permute.xlu0 %983
        %v986 = vmul.f32 %v872, %v984
        %v987 = vmul.f32 %v873, %v984
        %v988 = vsel %vm337, %v986, 0.0
        %v989 = vrot.slane %v988, 4
        %v990 = vadd.f32 %v988, %v989
        %v991 = vrot.slane %v990, 2
        %v992 = vadd.f32 %v990, %v991
        %v993 = vrot.slane %v992, 1
        %v994 = vadd.f32 %v992, %v993
        %v995 = vsel %vm337, %v987, 0.0
        %v996 = vrot.slane %v995, 4
        %v997 = vadd.f32 %v995, %v996
        %v998 = vrot.slane %v997, 2
        %v999 = vadd.f32 %v997, %v998
        %v1000 = vrot.slane %v999, 1
        %v1001 = vadd.f32 %v999, %v1000
        %v1002 = vadd.f32 %v838, %v994
        %v1003 = vadd.f32 %v839, %v1001
        %v1006 = vrot.slane %v986, 4
        %v1007 = vrot.slane %v987, 4
        %v1010 = vsel %vm337, %v1006, 0.0
        %v1011 = vrot.slane %v1010, 4
        %v1012 = vadd.f32 %v1010, %v1011
        %v1013 = vrot.slane %v1012, 2
        %v1014 = vadd.f32 %v1012, %v1013
        %v1015 = vrot.slane %v1014, 1
        %v1016 = vadd.f32 %v1014, %v1015
        %v1017 = vsel %vm337, %v1007, 0.0
        %v1018 = vrot.slane %v1017, 4
        %v1019 = vadd.f32 %v1017, %v1018
        %v1020 = vrot.slane %v1019, 2
        %v1021 = vadd.f32 %v1019, %v1020
        %v1022 = vrot.slane %v1021, 1
        %v1023 = vadd.f32 %v1021, %v1022
        %v1024 = vadd.f32 %v860, %v1016
        %v1025 = vadd.f32 %v861, %v1023
        %1026 = vset.pattern.permute.xlu0 4
        %1027 = vperm.xlu0 %1026, %v329
        %v1028 = vpop.permute.xlu0 %1027
        %v1030 = vmul.f32 %v321, %v1028
        %v1031 = vmul.f32 %v322, %v1028
        %vm1032 = vcmask 592968
        %v1033 = vsel %vm1032, %v1030, 0.0
        %v1034 = vrot.slane %v1033, 4
        %v1035 = vadd.f32 %v1033, %v1034
        %v1036 = vrot.slane %v1035, 2
        %v1037 = vadd.f32 %v1035, %v1036
        %v1038 = vrot.slane %v1037, 1
        %v1039 = vadd.f32 %v1037, %v1038
        %v1040 = vsel %vm1032, %v1031, 0.0
        %v1041 = vrot.slane %v1040, 4
        %v1042 = vadd.f32 %v1040, %v1041
        %v1043 = vrot.slane %v1042, 2
        %v1044 = vadd.f32 %v1042, %v1043
        %v1045 = vrot.slane %v1044, 1
        %v1046 = vadd.f32 %v1044, %v1045
        %1049 = vrot.lane.b32.xlu0 %v1039, 119
        %v1050 = vpop.permute.xlu0 %1049
        %1051 = vrot.lane.b32.xlu0 %v1046, 119
        %v1052 = vpop.permute.xlu0 %1051
        %v1055 = vadd.f32 %v894, %v1050
        %v1056 = vadd.f32 %v895, %v1052
        %v1059 = vrot.slane %v1030, 4
        %v1060 = vrot.slane %v1031, 4
        %v1063 = vsel %vm1032, %v1059, 0.0
        %v1064 = vrot.slane %v1063, 4
        %v1065 = vadd.f32 %v1063, %v1064
        %v1066 = vrot.slane %v1065, 2
        %v1067 = vadd.f32 %v1065, %v1066
        %v1068 = vrot.slane %v1067, 1
        %v1069 = vadd.f32 %v1067, %v1068
        %v1070 = vsel %vm1032, %v1060, 0.0
        %v1071 = vrot.slane %v1070, 4
        %v1072 = vadd.f32 %v1070, %v1071
        %v1073 = vrot.slane %v1072, 2
        %v1074 = vadd.f32 %v1072, %v1073
        %v1075 = vrot.slane %v1074, 1
        %v1076 = vadd.f32 %v1074, %v1075
        %1079 = vrot.lane.b32.xlu0 %v1069, 119
        %v1080 = vpop.permute.xlu0 %1079
        %1081 = vrot.lane.b32.xlu0 %v1076, 119
        %v1082 = vpop.permute.xlu0 %1081
        %v1085 = vadd.f32 %v916, %v1080
        %v1086 = vadd.f32 %v917, %v1082
        %1087 = vset.pattern.permute.xlu0 13
        %1088 = vperm.xlu0 %1087, %v329
        %v1089 = vpop.permute.xlu0 %1088
        %v1091 = vmul.f32 %v321, %v1089
        %v1092 = vmul.f32 %v322, %v1089
        %v1093 = vmul.f32 %v323, %v1089
        %v1094 = vsel %vm1032, %v1091, 0.0
        %v1095 = vrot.slane %v1094, 4
        %v1096 = vadd.f32 %v1094, %v1095
        %v1097 = vrot.slane %v1096, 2
        %v1098 = vadd.f32 %v1096, %v1097
        %v1099 = vrot.slane %v1098, 1
        %v1100 = vadd.f32 %v1098, %v1099
        %v1101 = vsel %vm1032, %v1092, 0.0
        %v1102 = vrot.slane %v1101, 4
        %v1103 = vadd.f32 %v1101, %v1102
        %v1104 = vrot.slane %v1103, 2
        %v1105 = vadd.f32 %v1103, %v1104
        %v1106 = vrot.slane %v1105, 1
        %v1107 = vadd.f32 %v1105, %v1106
        %v1108 = vsel %vm1032, %v1093, 0.0
        %v1109 = vrot.slane %v1108, 4
        %v1110 = vadd.f32 %v1108, %v1109
        %v1111 = vrot.slane %v1110, 2
        %v1112 = vadd.f32 %v1110, %v1111
        %v1113 = vrot.slane %v1112, 1
        %v1114 = vadd.f32 %v1112, %v1113
        %1118 = vrot.lane.b32.xlu0 %v1100, 119
        %v1119 = vpop.permute.xlu0 %1118
        %1120 = vrot.lane.b32.xlu0 %v1107, 119
        %v1121 = vpop.permute.xlu0 %1120
        %1122 = vrot.lane.b32.xlu0 %v1114, 119
        %v1123 = vpop.permute.xlu0 %1122
        %v1127 = vadd.f32 %v946, %v1119
        %v1128 = vadd.f32 %v947, %v1121
        %v1129 = vadd.f32 %v948, %v1123
        %v1133 = vrot.slane %v1091, 4
        %v1134 = vrot.slane %v1092, 4
        %v1135 = vrot.slane %v1093, 4
        %v1139 = vsel %vm1032, %v1133, 0.0
        %v1140 = vrot.slane %v1139, 4
        %v1141 = vadd.f32 %v1139, %v1140
        %v1142 = vrot.slane %v1141, 2
        %v1143 = vadd.f32 %v1141, %v1142
        %v1144 = vrot.slane %v1143, 1
        %v1145 = vadd.f32 %v1143, %v1144
        %v1146 = vsel %vm1032, %v1134, 0.0
        %v1147 = vrot.slane %v1146, 4
        %v1148 = vadd.f32 %v1146, %v1147
        %v1149 = vrot.slane %v1148, 2
        %v1150 = vadd.f32 %v1148, %v1149
        %v1151 = vrot.slane %v1150, 1
        %v1152 = vadd.f32 %v1150, %v1151
        %v1153 = vsel %vm1032, %v1135, 0.0
        %v1154 = vrot.slane %v1153, 4
        %v1155 = vadd.f32 %v1153, %v1154
        %v1156 = vrot.slane %v1155, 2
        %v1157 = vadd.f32 %v1155, %v1156
        %v1158 = vrot.slane %v1157, 1
        %v1159 = vadd.f32 %v1157, %v1158
        %1163 = vrot.lane.b32.xlu0 %v1145, 119
        %v1164 = vpop.permute.xlu0 %1163
        %1165 = vrot.lane.b32.xlu0 %v1152, 119
        %v1166 = vpop.permute.xlu0 %1165
        %1167 = vrot.lane.b32.xlu0 %v1159, 119
        %v1168 = vpop.permute.xlu0 %1167
        %v1172 = vadd.f32 %v979, %v1164
        %v1173 = vadd.f32 %v980, %v1166
        %v1174 = vadd.f32 %v981, %v1168
        %1175 = vset.pattern.permute.xlu0 22
        %1176 = vperm.xlu0 %1175, %v329
        %v1177 = vpop.permute.xlu0 %1176
        %v1179 = vmul.f32 %v322, %v1177
        %v1180 = vmul.f32 %v323, %v1177
        %v1181 = vsel %vm1032, %v1179, 0.0
        %v1182 = vrot.slane %v1181, 4
        %v1183 = vadd.f32 %v1181, %v1182
        %v1184 = vrot.slane %v1183, 2
        %v1185 = vadd.f32 %v1183, %v1184
        %v1186 = vrot.slane %v1185, 1
        %v1187 = vadd.f32 %v1185, %v1186
        %v1188 = vsel %vm1032, %v1180, 0.0
        %v1189 = vrot.slane %v1188, 4
        %v1190 = vadd.f32 %v1188, %v1189
        %v1191 = vrot.slane %v1190, 2
        %v1192 = vadd.f32 %v1190, %v1191
        %v1193 = vrot.slane %v1192, 1
        %v1194 = vadd.f32 %v1192, %v1193
        %1197 = vrot.lane.b32.xlu0 %v1187, 119
        %v1198 = vpop.permute.xlu0 %1197
        %1199 = vrot.lane.b32.xlu0 %v1194, 119
        %v1200 = vpop.permute.xlu0 %1199
        %v1203 = vadd.f32 %v1002, %v1198
        %v1204 = vadd.f32 %v1003, %v1200
        %v1207 = vrot.slane %v1179, 4
        %v1208 = vrot.slane %v1180, 4
        %v1211 = vsel %vm1032, %v1207, 0.0
        %v1212 = vrot.slane %v1211, 4
        %v1213 = vadd.f32 %v1211, %v1212
        %v1214 = vrot.slane %v1213, 2
        %v1215 = vadd.f32 %v1213, %v1214
        %v1216 = vrot.slane %v1215, 1
        %v1217 = vadd.f32 %v1215, %v1216
        %v1218 = vsel %vm1032, %v1208, 0.0
        %v1219 = vrot.slane %v1218, 4
        %v1220 = vadd.f32 %v1218, %v1219
        %v1221 = vrot.slane %v1220, 2
        %v1222 = vadd.f32 %v1220, %v1221
        %v1223 = vrot.slane %v1222, 1
        %v1224 = vadd.f32 %v1222, %v1223
        %1227 = vrot.lane.b32.xlu0 %v1217, 119
        %v1228 = vpop.permute.xlu0 %1227
        %1229 = vrot.lane.b32.xlu0 %v1224, 119
        %v1230 = vpop.permute.xlu0 %1229
        %v1233 = vadd.f32 %v1024, %v1228
        %v1234 = vadd.f32 %v1025, %v1230
        %1235 = vrot.lane.b32.xlu0 %v321, 118
        %v1236 = vpop.permute.xlu0 %1235
        %1237 = vrot.lane.b32.xlu0 %v322, 118
        %v1238 = vpop.permute.xlu0 %1237
        %1239 = vrot.lane.b32.xlu0 %v323, 118
        %v1240 = vpop.permute.xlu0 %1239
        %v1244 = vsel %vm694, %v1236, 0.0
        %v1245 = vsel %vm694, %v1238, 0.0
        %v1246 = vsel %vm694, %v1240, 0.0
        %1247 = vset.pattern.permute.xlu0 5
        %1248 = vperm.xlu0 %1247, %v329
        %v1249 = vpop.permute.xlu0 %1248
        %v1251 = vmul.f32 %v1244, %v1249
        %v1252 = vmul.f32 %v1245, %v1249
        %v1253 = vsel %vm337, %v1251, 0.0
        %v1254 = vrot.slane %v1253, 4
        %v1255 = vadd.f32 %v1253, %v1254
        %v1256 = vrot.slane %v1255, 2
        %v1257 = vadd.f32 %v1255, %v1256
        %v1258 = vrot.slane %v1257, 1
        %v1259 = vadd.f32 %v1257, %v1258
        %v1260 = vsel %vm337, %v1252, 0.0
        %v1261 = vrot.slane %v1260, 4
        %v1262 = vadd.f32 %v1260, %v1261
        %v1263 = vrot.slane %v1262, 2
        %v1264 = vadd.f32 %v1262, %v1263
        %v1265 = vrot.slane %v1264, 1
        %v1266 = vadd.f32 %v1264, %v1265
        %v1267 = vadd.f32 %v1055, %v1259
        %v1268 = vadd.f32 %v1056, %v1266
        %v1271 = vrot.slane %v1251, 4
        %v1272 = vrot.slane %v1252, 4
        %v1275 = vsel %vm337, %v1271, 0.0
        %v1276 = vrot.slane %v1275, 4
        %v1277 = vadd.f32 %v1275, %v1276
        %v1278 = vrot.slane %v1277, 2
        %v1279 = vadd.f32 %v1277, %v1278
        %v1280 = vrot.slane %v1279, 1
        %v1281 = vadd.f32 %v1279, %v1280
        %v1282 = vsel %vm337, %v1272, 0.0
        %v1283 = vrot.slane %v1282, 4
        %v1284 = vadd.f32 %v1282, %v1283
        %v1285 = vrot.slane %v1284, 2
        %v1286 = vadd.f32 %v1284, %v1285
        %v1287 = vrot.slane %v1286, 1
        %v1288 = vadd.f32 %v1286, %v1287
        %v1289 = vadd.f32 %v1085, %v1281
        %v1290 = vadd.f32 %v1086, %v1288
        %1291 = vset.pattern.permute.xlu0 14
        %1292 = vperm.xlu0 %1291, %v329
        %v1293 = vpop.permute.xlu0 %1292
        %v1295 = vmul.f32 %v1244, %v1293
        %v1296 = vmul.f32 %v1245, %v1293
        %v1297 = vmul.f32 %v1246, %v1293
        %v1298 = vsel %vm337, %v1295, 0.0
        %v1299 = vrot.slane %v1298, 4
        %v1300 = vadd.f32 %v1298, %v1299
        %v1301 = vrot.slane %v1300, 2
        %v1302 = vadd.f32 %v1300, %v1301
        %v1303 = vrot.slane %v1302, 1
        %v1304 = vadd.f32 %v1302, %v1303
        %v1305 = vsel %vm337, %v1296, 0.0
        %v1306 = vrot.slane %v1305, 4
        %v1307 = vadd.f32 %v1305, %v1306
        %v1308 = vrot.slane %v1307, 2
        %v1309 = vadd.f32 %v1307, %v1308
        %v1310 = vrot.slane %v1309, 1
        %v1311 = vadd.f32 %v1309, %v1310
        %v1312 = vsel %vm337, %v1297, 0.0
        %v1313 = vrot.slane %v1312, 4
        %v1314 = vadd.f32 %v1312, %v1313
        %v1315 = vrot.slane %v1314, 2
        %v1316 = vadd.f32 %v1314, %v1315
        %v1317 = vrot.slane %v1316, 1
        %v1318 = vadd.f32 %v1316, %v1317
        %v1319 = vadd.f32 %v1127, %v1304
        %v1320 = vadd.f32 %v1128, %v1311
        %v1321 = vadd.f32 %v1129, %v1318
        %v1325 = vrot.slane %v1295, 4
        %v1326 = vrot.slane %v1296, 4
        %v1327 = vrot.slane %v1297, 4
        %v1331 = vsel %vm337, %v1325, 0.0
        %v1332 = vrot.slane %v1331, 4
        %v1333 = vadd.f32 %v1331, %v1332
        %v1334 = vrot.slane %v1333, 2
        %v1335 = vadd.f32 %v1333, %v1334
        %v1336 = vrot.slane %v1335, 1
        %v1337 = vadd.f32 %v1335, %v1336
        %v1338 = vsel %vm337, %v1326, 0.0
        %v1339 = vrot.slane %v1338, 4
        %v1340 = vadd.f32 %v1338, %v1339
        %v1341 = vrot.slane %v1340, 2
        %v1342 = vadd.f32 %v1340, %v1341
        %v1343 = vrot.slane %v1342, 1
        %v1344 = vadd.f32 %v1342, %v1343
        %v1345 = vsel %vm337, %v1327, 0.0
        %v1346 = vrot.slane %v1345, 4
        %v1347 = vadd.f32 %v1345, %v1346
        %v1348 = vrot.slane %v1347, 2
        %v1349 = vadd.f32 %v1347, %v1348
        %v1350 = vrot.slane %v1349, 1
        %v1351 = vadd.f32 %v1349, %v1350
        %v1352 = vadd.f32 %v1172, %v1337
        %v1353 = vadd.f32 %v1173, %v1344
        %v1354 = vadd.f32 %v1174, %v1351
        %1355 = vset.pattern.permute.xlu0 23
        %1356 = vperm.xlu0 %1355, %v329
        %v1357 = vpop.permute.xlu0 %1356
        %v1359 = vmul.f32 %v1245, %v1357
        %v1360 = vmul.f32 %v1246, %v1357
        %v1361 = vsel %vm337, %v1359, 0.0
        %v1362 = vrot.slane %v1361, 4
        %v1363 = vadd.f32 %v1361, %v1362
        %v1364 = vrot.slane %v1363, 2
        %v1365 = vadd.f32 %v1363, %v1364
        %v1366 = vrot.slane %v1365, 1
        %v1367 = vadd.f32 %v1365, %v1366
        %v1368 = vsel %vm337, %v1360, 0.0
        %v1369 = vrot.slane %v1368, 4
        %v1370 = vadd.f32 %v1368, %v1369
        %v1371 = vrot.slane %v1370, 2
        %v1372 = vadd.f32 %v1370, %v1371
        %v1373 = vrot.slane %v1372, 1
        %v1374 = vadd.f32 %v1372, %v1373
        %v1375 = vadd.f32 %v1203, %v1367
        %v1376 = vadd.f32 %v1204, %v1374
        %v1379 = vrot.slane %v1359, 4
        %v1380 = vrot.slane %v1360, 4
        %v1383 = vsel %vm337, %v1379, 0.0
        %v1384 = vrot.slane %v1383, 4
        %v1385 = vadd.f32 %v1383, %v1384
        %v1386 = vrot.slane %v1385, 2
        %v1387 = vadd.f32 %v1385, %v1386
        %v1388 = vrot.slane %v1387, 1
        %v1389 = vadd.f32 %v1387, %v1388
        %v1390 = vsel %vm337, %v1380, 0.0
        %v1391 = vrot.slane %v1390, 4
        %v1392 = vadd.f32 %v1390, %v1391
        %v1393 = vrot.slane %v1392, 2
        %v1394 = vadd.f32 %v1392, %v1393
        %v1395 = vrot.slane %v1394, 1
        %v1396 = vadd.f32 %v1394, %v1395
        %v1397 = vadd.f32 %v1233, %v1389
        %v1398 = vadd.f32 %v1234, %v1396
        %1399 = vrot.lane.b32.xlu0 %v321, 112
        %v1400 = vpop.permute.xlu0 %1399
        %1401 = vrot.lane.b32.xlu0 %v322, 112
        %v1402 = vpop.permute.xlu0 %1401
        %1403 = vrot.lane.b32.xlu0 %v323, 112
        %v1404 = vpop.permute.xlu0 %1403
        %v1408 = vsel %vm325, %v1400, 0.0
        %v1409 = vsel %vm325, %v1402, 0.0
        %v1410 = vsel %vm325, %v1404, 0.0
        %1411 = vset.pattern.permute.xlu0 6
        %1412 = vperm.xlu0 %1411, %v329
        %v1413 = vpop.permute.xlu0 %1412
        %v1415 = vmul.f32 %v1408, %v1413
        %v1416 = vmul.f32 %v1409, %v1413
        %v1417 = vsel %vm337, %v1415, 0.0
        %v1418 = vrot.slane %v1417, 4
        %v1419 = vadd.f32 %v1417, %v1418
        %v1420 = vrot.slane %v1419, 2
        %v1421 = vadd.f32 %v1419, %v1420
        %v1422 = vrot.slane %v1421, 1
        %v1423 = vadd.f32 %v1421, %v1422
        %v1424 = vsel %vm337, %v1416, 0.0
        %v1425 = vrot.slane %v1424, 4
        %v1426 = vadd.f32 %v1424, %v1425
        %v1427 = vrot.slane %v1426, 2
        %v1428 = vadd.f32 %v1426, %v1427
        %v1429 = vrot.slane %v1428, 1
        %v1430 = vadd.f32 %v1428, %v1429
        %v1431 = vadd.f32 %v1267, %v1423
        %v1432 = vadd.f32 %v1268, %v1430
        %v1435 = vrot.slane %v1415, 4
        %v1436 = vrot.slane %v1416, 4
        %v1439 = vsel %vm337, %v1435, 0.0
        %v1440 = vrot.slane %v1439, 4
        %v1441 = vadd.f32 %v1439, %v1440
        %v1442 = vrot.slane %v1441, 2
        %v1443 = vadd.f32 %v1441, %v1442
        %v1444 = vrot.slane %v1443, 1
        %v1445 = vadd.f32 %v1443, %v1444
        %v1446 = vsel %vm337, %v1436, 0.0
        %v1447 = vrot.slane %v1446, 4
        %v1448 = vadd.f32 %v1446, %v1447
        %v1449 = vrot.slane %v1448, 2
        %v1450 = vadd.f32 %v1448, %v1449
        %v1451 = vrot.slane %v1450, 1
        %v1452 = vadd.f32 %v1450, %v1451
        %v1453 = vadd.f32 %v1289, %v1445
        %v1454 = vadd.f32 %v1290, %v1452
        %1455 = vset.pattern.permute.xlu0 15
        %1456 = vperm.xlu0 %1455, %v329
        %v1457 = vpop.permute.xlu0 %1456
        %v1459 = vmul.f32 %v1408, %v1457
        %v1460 = vmul.f32 %v1409, %v1457
        %v1461 = vmul.f32 %v1410, %v1457
        %v1462 = vsel %vm337, %v1459, 0.0
        %v1463 = vrot.slane %v1462, 4
        %v1464 = vadd.f32 %v1462, %v1463
        %v1465 = vrot.slane %v1464, 2
        %v1466 = vadd.f32 %v1464, %v1465
        %v1467 = vrot.slane %v1466, 1
        %v1468 = vadd.f32 %v1466, %v1467
        %v1469 = vsel %vm337, %v1460, 0.0
        %v1470 = vrot.slane %v1469, 4
        %v1471 = vadd.f32 %v1469, %v1470
        %v1472 = vrot.slane %v1471, 2
        %v1473 = vadd.f32 %v1471, %v1472
        %v1474 = vrot.slane %v1473, 1
        %v1475 = vadd.f32 %v1473, %v1474
        %v1476 = vsel %vm337, %v1461, 0.0
        %v1477 = vrot.slane %v1476, 4
        %v1478 = vadd.f32 %v1476, %v1477
        %v1479 = vrot.slane %v1478, 2
        %v1480 = vadd.f32 %v1478, %v1479
        %v1481 = vrot.slane %v1480, 1
        %v1482 = vadd.f32 %v1480, %v1481
        %v1483 = vadd.f32 %v1319, %v1468
        %v1484 = vadd.f32 %v1320, %v1475
        %v1485 = vadd.f32 %v1321, %v1482
        %v1489 = vrot.slane %v1459, 4
        %v1490 = vrot.slane %v1460, 4
        %v1491 = vrot.slane %v1461, 4
        %v1495 = vsel %vm337, %v1489, 0.0
        %v1496 = vrot.slane %v1495, 4
        %v1497 = vadd.f32 %v1495, %v1496
        %v1498 = vrot.slane %v1497, 2
        %v1499 = vadd.f32 %v1497, %v1498
        %v1500 = vrot.slane %v1499, 1
        %v1501 = vadd.f32 %v1499, %v1500
        %v1502 = vsel %vm337, %v1490, 0.0
        %v1503 = vrot.slane %v1502, 4
        %v1504 = vadd.f32 %v1502, %v1503
        %v1505 = vrot.slane %v1504, 2
        %v1506 = vadd.f32 %v1504, %v1505
        %v1507 = vrot.slane %v1506, 1
        %v1508 = vadd.f32 %v1506, %v1507
        %v1509 = vsel %vm337, %v1491, 0.0
        %v1510 = vrot.slane %v1509, 4
        %v1511 = vadd.f32 %v1509, %v1510
        %v1512 = vrot.slane %v1511, 2
        %v1513 = vadd.f32 %v1511, %v1512
        %v1514 = vrot.slane %v1513, 1
        %v1515 = vadd.f32 %v1513, %v1514
        %v1516 = vadd.f32 %v1352, %v1501
        %v1517 = vadd.f32 %v1353, %v1508
        %v1518 = vadd.f32 %v1354, %v1515
        %1519 = vset.pattern.permute.xlu0 24
        %1520 = vperm.xlu0 %1519, %v329
        %v1521 = vpop.permute.xlu0 %1520
        %v1523 = vmul.f32 %v1409, %v1521
        %v1524 = vmul.f32 %v1410, %v1521
        %v1525 = vsel %vm337, %v1523, 0.0
        %v1526 = vrot.slane %v1525, 4
        %v1527 = vadd.f32 %v1525, %v1526
        %v1528 = vrot.slane %v1527, 2
        %v1529 = vadd.f32 %v1527, %v1528
        %v1530 = vrot.slane %v1529, 1
        %v1531 = vadd.f32 %v1529, %v1530
        %v1532 = vsel %vm337, %v1524, 0.0
        %v1533 = vrot.slane %v1532, 4
        %v1534 = vadd.f32 %v1532, %v1533
        %v1535 = vrot.slane %v1534, 2
        %v1536 = vadd.f32 %v1534, %v1535
        %v1537 = vrot.slane %v1536, 1
        %v1538 = vadd.f32 %v1536, %v1537
        %v1539 = vadd.f32 %v1375, %v1531
        %v1540 = vadd.f32 %v1376, %v1538
        %v1543 = vrot.slane %v1523, 4
        %v1544 = vrot.slane %v1524, 4
        %v1547 = vsel %vm337, %v1543, 0.0
        %v1548 = vrot.slane %v1547, 4
        %v1549 = vadd.f32 %v1547, %v1548
        %v1550 = vrot.slane %v1549, 2
        %v1551 = vadd.f32 %v1549, %v1550
        %v1552 = vrot.slane %v1551, 1
        %v1553 = vadd.f32 %v1551, %v1552
        %v1554 = vsel %vm337, %v1544, 0.0
        %v1555 = vrot.slane %v1554, 4
        %v1556 = vadd.f32 %v1554, %v1555
        %v1557 = vrot.slane %v1556, 2
        %v1558 = vadd.f32 %v1556, %v1557
        %v1559 = vrot.slane %v1558, 1
        %v1560 = vadd.f32 %v1558, %v1559
        %v1561 = vadd.f32 %v1397, %v1553
        %v1562 = vadd.f32 %v1398, %v1560
        %1563 = vset.pattern.permute.xlu0 7
        %1564 = vperm.xlu0 %1563, %v329
        %v1565 = vpop.permute.xlu0 %1564
        %v1567 = vmul.f32 %v321, %v1565
        %v1568 = vmul.f32 %v322, %v1565
        %vm1569 = vcmask 658568
        %v1570 = vsel %vm1569, %v1567, 0.0
        %v1571 = vrot.slane %v1570, 4
        %v1572 = vadd.f32 %v1570, %v1571
        %v1573 = vrot.slane %v1572, 2
        %v1574 = vadd.f32 %v1572, %v1573
        %v1575 = vrot.slane %v1574, 1
        %v1576 = vadd.f32 %v1574, %v1575
        %v1577 = vsel %vm1569, %v1568, 0.0
        %v1578 = vrot.slane %v1577, 4
        %v1579 = vadd.f32 %v1577, %v1578
        %v1580 = vrot.slane %v1579, 2
        %v1581 = vadd.f32 %v1579, %v1580
        %v1582 = vrot.slane %v1581, 1
        %v1583 = vadd.f32 %v1581, %v1582
        %1586 = vrot.lane.b32.xlu0 %v1576, 111
        %v1587 = vpop.permute.xlu0 %1586
        %1588 = vrot.lane.b32.xlu0 %v1583, 111
        %v1589 = vpop.permute.xlu0 %1588
        %v1592 = vadd.f32 %v1431, %v1587
        %v1593 = vadd.f32 %v1432, %v1589
        %v1596 = vrot.slane %v1567, 4
        %v1597 = vrot.slane %v1568, 4
        %v1600 = vsel %vm1569, %v1596, 0.0
        %v1601 = vrot.slane %v1600, 4
        %v1602 = vadd.f32 %v1600, %v1601
        %v1603 = vrot.slane %v1602, 2
        %v1604 = vadd.f32 %v1602, %v1603
        %v1605 = vrot.slane %v1604, 1
        %v1606 = vadd.f32 %v1604, %v1605
        %v1607 = vsel %vm1569, %v1597, 0.0
        %v1608 = vrot.slane %v1607, 4
        %v1609 = vadd.f32 %v1607, %v1608
        %v1610 = vrot.slane %v1609, 2
        %v1611 = vadd.f32 %v1609, %v1610
        %v1612 = vrot.slane %v1611, 1
        %v1613 = vadd.f32 %v1611, %v1612
        %1616 = vrot.lane.b32.xlu0 %v1606, 111
        %v1617 = vpop.permute.xlu0 %1616
        %1618 = vrot.lane.b32.xlu0 %v1613, 111
        %v1619 = vpop.permute.xlu0 %1618
        %v1622 = vadd.f32 %v1453, %v1617
        %v1623 = vadd.f32 %v1454, %v1619
        %1624 = vset.pattern.permute.xlu0 16
        %1625 = vperm.xlu0 %1624, %v329
        %v1626 = vpop.permute.xlu0 %1625
        %v1628 = vmul.f32 %v321, %v1626
        %v1629 = vmul.f32 %v322, %v1626
        %v1630 = vmul.f32 %v323, %v1626
        %v1631 = vsel %vm1569, %v1628, 0.0
        %v1632 = vrot.slane %v1631, 4
        %v1633 = vadd.f32 %v1631, %v1632
        %v1634 = vrot.slane %v1633, 2
        %v1635 = vadd.f32 %v1633, %v1634
        %v1636 = vrot.slane %v1635, 1
        %v1637 = vadd.f32 %v1635, %v1636
        %v1638 = vsel %vm1569, %v1629, 0.0
        %v1639 = vrot.slane %v1638, 4
        %v1640 = vadd.f32 %v1638, %v1639
        %v1641 = vrot.slane %v1640, 2
        %v1642 = vadd.f32 %v1640, %v1641
        %v1643 = vrot.slane %v1642, 1
        %v1644 = vadd.f32 %v1642, %v1643
        %v1645 = vsel %vm1569, %v1630, 0.0
        %v1646 = vrot.slane %v1645, 4
        %v1647 = vadd.f32 %v1645, %v1646
        %v1648 = vrot.slane %v1647, 2
        %v1649 = vadd.f32 %v1647, %v1648
        %v1650 = vrot.slane %v1649, 1
        %v1651 = vadd.f32 %v1649, %v1650
        %1655 = vrot.lane.b32.xlu0 %v1637, 111
        %v1656 = vpop.permute.xlu0 %1655
        %1657 = vrot.lane.b32.xlu0 %v1644, 111
        %v1658 = vpop.permute.xlu0 %1657
        %1659 = vrot.lane.b32.xlu0 %v1651, 111
        %v1660 = vpop.permute.xlu0 %1659
        %v1664 = vadd.f32 %v1483, %v1656
        %v1665 = vadd.f32 %v1484, %v1658
        %v1666 = vadd.f32 %v1485, %v1660
        %v1670 = vrot.slane %v1628, 4
        %v1671 = vrot.slane %v1629, 4
        %v1672 = vrot.slane %v1630, 4
        %v1676 = vsel %vm1569, %v1670, 0.0
        %v1677 = vrot.slane %v1676, 4
        %v1678 = vadd.f32 %v1676, %v1677
        %v1679 = vrot.slane %v1678, 2
        %v1680 = vadd.f32 %v1678, %v1679
        %v1681 = vrot.slane %v1680, 1
        %v1682 = vadd.f32 %v1680, %v1681
        %v1683 = vsel %vm1569, %v1671, 0.0
        %v1684 = vrot.slane %v1683, 4
        %v1685 = vadd.f32 %v1683, %v1684
        %v1686 = vrot.slane %v1685, 2
        %v1687 = vadd.f32 %v1685, %v1686
        %v1688 = vrot.slane %v1687, 1
        %v1689 = vadd.f32 %v1687, %v1688
        %v1690 = vsel %vm1569, %v1672, 0.0
        %v1691 = vrot.slane %v1690, 4
        %v1692 = vadd.f32 %v1690, %v1691
        %v1693 = vrot.slane %v1692, 2
        %v1694 = vadd.f32 %v1692, %v1693
        %v1695 = vrot.slane %v1694, 1
        %v1696 = vadd.f32 %v1694, %v1695
        %1700 = vrot.lane.b32.xlu0 %v1682, 111
        %v1701 = vpop.permute.xlu0 %1700
        %1702 = vrot.lane.b32.xlu0 %v1689, 111
        %v1703 = vpop.permute.xlu0 %1702
        %1704 = vrot.lane.b32.xlu0 %v1696, 111
        %v1705 = vpop.permute.xlu0 %1704
        %v1709 = vadd.f32 %v1516, %v1701
        %v1710 = vadd.f32 %v1517, %v1703
        %v1711 = vadd.f32 %v1518, %v1705
        %1712 = vset.pattern.permute.xlu0 25
        %1713 = vperm.xlu0 %1712, %v329
        %v1714 = vpop.permute.xlu0 %1713
        %v1716 = vmul.f32 %v322, %v1714
        %v1717 = vmul.f32 %v323, %v1714
        %v1718 = vsel %vm1569, %v1716, 0.0
        %v1719 = vrot.slane %v1718, 4
        %v1720 = vadd.f32 %v1718, %v1719
        %v1721 = vrot.slane %v1720, 2
        %v1722 = vadd.f32 %v1720, %v1721
        %v1723 = vrot.slane %v1722, 1
        %v1724 = vadd.f32 %v1722, %v1723
        %v1725 = vsel %vm1569, %v1717, 0.0
        %v1726 = vrot.slane %v1725, 4
        %v1727 = vadd.f32 %v1725, %v1726
        %v1728 = vrot.slane %v1727, 2
        %v1729 = vadd.f32 %v1727, %v1728
        %v1730 = vrot.slane %v1729, 1
        %v1731 = vadd.f32 %v1729, %v1730
        %1734 = vrot.lane.b32.xlu0 %v1724, 111
        %v1735 = vpop.permute.xlu0 %1734
        %1736 = vrot.lane.b32.xlu0 %v1731, 111
        %v1737 = vpop.permute.xlu0 %1736
        %v1740 = vadd.f32 %v1539, %v1735
        %v1741 = vadd.f32 %v1540, %v1737
        %v1744 = vrot.slane %v1716, 4
        %v1745 = vrot.slane %v1717, 4
        %v1748 = vsel %vm1569, %v1744, 0.0
        %v1749 = vrot.slane %v1748, 4
        %v1750 = vadd.f32 %v1748, %v1749
        %v1751 = vrot.slane %v1750, 2
        %v1752 = vadd.f32 %v1750, %v1751
        %v1753 = vrot.slane %v1752, 1
        %v1754 = vadd.f32 %v1752, %v1753
        %v1755 = vsel %vm1569, %v1745, 0.0
        %v1756 = vrot.slane %v1755, 4
        %v1757 = vadd.f32 %v1755, %v1756
        %v1758 = vrot.slane %v1757, 2
        %v1759 = vadd.f32 %v1757, %v1758
        %v1760 = vrot.slane %v1759, 1
        %v1761 = vadd.f32 %v1759, %v1760
        %1764 = vrot.lane.b32.xlu0 %v1754, 111
        %v1765 = vpop.permute.xlu0 %1764
        %1766 = vrot.lane.b32.xlu0 %v1761, 111
        %v1767 = vpop.permute.xlu0 %1766
        %v1770 = vadd.f32 %v1561, %v1765
        %v1771 = vadd.f32 %v1562, %v1767
        %1772 = vrot.lane.b32.xlu0 %v321, 110
        %v1773 = vpop.permute.xlu0 %1772
        %1774 = vrot.lane.b32.xlu0 %v322, 110
        %v1775 = vpop.permute.xlu0 %1774
        %1776 = vrot.lane.b32.xlu0 %v323, 110
        %v1777 = vpop.permute.xlu0 %1776
        %v1781 = vsel %vm694, %v1773, 0.0
        %v1782 = vsel %vm694, %v1775, 0.0
        %v1783 = vsel %vm694, %v1777, 0.0
        %1784 = vset.pattern.permute.xlu0 8
        %1785 = vperm.xlu0 %1784, %v329
        %v1786 = vpop.permute.xlu0 %1785
        %v1788 = vmul.f32 %v1781, %v1786
        %v1789 = vmul.f32 %v1782, %v1786
        %v1790 = vsel %vm337, %v1788, 0.0
        %v1791 = vrot.slane %v1790, 4
        %v1792 = vadd.f32 %v1790, %v1791
        %v1793 = vrot.slane %v1792, 2
        %v1794 = vadd.f32 %v1792, %v1793
        %v1795 = vrot.slane %v1794, 1
        %v1796 = vadd.f32 %v1794, %v1795
        %v1797 = vsel %vm337, %v1789, 0.0
        %v1798 = vrot.slane %v1797, 4
        %v1799 = vadd.f32 %v1797, %v1798
        %v1800 = vrot.slane %v1799, 2
        %v1801 = vadd.f32 %v1799, %v1800
        %v1802 = vrot.slane %v1801, 1
        %v1803 = vadd.f32 %v1801, %v1802
        %v1804 = vadd.f32 %v1592, %v1796
        %v1805 = vadd.f32 %v1593, %v1803
        %v1808 = vrot.slane %v1788, 4
        %v1809 = vrot.slane %v1789, 4
        %v1812 = vsel %vm337, %v1808, 0.0
        %v1813 = vrot.slane %v1812, 4
        %v1814 = vadd.f32 %v1812, %v1813
        %v1815 = vrot.slane %v1814, 2
        %v1816 = vadd.f32 %v1814, %v1815
        %v1817 = vrot.slane %v1816, 1
        %v1818 = vadd.f32 %v1816, %v1817
        %v1819 = vsel %vm337, %v1809, 0.0
        %v1820 = vrot.slane %v1819, 4
        %v1821 = vadd.f32 %v1819, %v1820
        %v1822 = vrot.slane %v1821, 2
        %v1823 = vadd.f32 %v1821, %v1822
        %v1824 = vrot.slane %v1823, 1
        %v1825 = vadd.f32 %v1823, %v1824
        %v1826 = vadd.f32 %v1622, %v1818
        %v1827 = vadd.f32 %v1623, %v1825
        %1828 = vset.pattern.permute.xlu0 17
        %1829 = vperm.xlu0 %1828, %v329
        %v1830 = vpop.permute.xlu0 %1829
        %v1832 = vmul.f32 %v1781, %v1830
        %v1833 = vmul.f32 %v1782, %v1830
        %v1834 = vmul.f32 %v1783, %v1830
        %v1835 = vsel %vm337, %v1832, 0.0
        %v1836 = vrot.slane %v1835, 4
        %v1837 = vadd.f32 %v1835, %v1836
        %v1838 = vrot.slane %v1837, 2
        %v1839 = vadd.f32 %v1837, %v1838
        %v1840 = vrot.slane %v1839, 1
        %v1841 = vadd.f32 %v1839, %v1840
        %v1842 = vsel %vm337, %v1833, 0.0
        %v1843 = vrot.slane %v1842, 4
        %v1844 = vadd.f32 %v1842, %v1843
        %v1845 = vrot.slane %v1844, 2
        %v1846 = vadd.f32 %v1844, %v1845
        %v1847 = vrot.slane %v1846, 1
        %v1848 = vadd.f32 %v1846, %v1847
        %v1849 = vsel %vm337, %v1834, 0.0
        %v1850 = vrot.slane %v1849, 4
        %v1851 = vadd.f32 %v1849, %v1850
        %v1852 = vrot.slane %v1851, 2
        %v1853 = vadd.f32 %v1851, %v1852
        %v1854 = vrot.slane %v1853, 1
        %v1855 = vadd.f32 %v1853, %v1854
        %v1856 = vadd.f32 %v1664, %v1841
        %v1857 = vadd.f32 %v1665, %v1848
        %v1858 = vadd.f32 %v1666, %v1855
        %v1862 = vrot.slane %v1832, 4
        %v1863 = vrot.slane %v1833, 4
        %v1864 = vrot.slane %v1834, 4
        %v1868 = vsel %vm337, %v1862, 0.0
        %v1869 = vrot.slane %v1868, 4
        %v1870 = vadd.f32 %v1868, %v1869
        %v1871 = vrot.slane %v1870, 2
        %v1872 = vadd.f32 %v1870, %v1871
        %v1873 = vrot.slane %v1872, 1
        %v1874 = vadd.f32 %v1872, %v1873
        %v1875 = vsel %vm337, %v1863, 0.0
        %v1876 = vrot.slane %v1875, 4
        %v1877 = vadd.f32 %v1875, %v1876
        %v1878 = vrot.slane %v1877, 2
        %v1879 = vadd.f32 %v1877, %v1878
        %v1880 = vrot.slane %v1879, 1
        %v1881 = vadd.f32 %v1879, %v1880
        %v1882 = vsel %vm337, %v1864, 0.0
        %v1883 = vrot.slane %v1882, 4
        %v1884 = vadd.f32 %v1882, %v1883
        %v1885 = vrot.slane %v1884, 2
        %v1886 = vadd.f32 %v1884, %v1885
        %v1887 = vrot.slane %v1886, 1
        %v1888 = vadd.f32 %v1886, %v1887
        %v1889 = vadd.f32 %v1709, %v1874
        %v1890 = vadd.f32 %v1710, %v1881
        %v1891 = vadd.f32 %v1711, %v1888
        %1892 = vset.pattern.permute.xlu0 26
        %1893 = vperm.xlu0 %1892, %v329
        %v1894 = vpop.permute.xlu0 %1893
        %v1896 = vmul.f32 %v1782, %v1894
        %v1897 = vmul.f32 %v1783, %v1894
        %v1898 = vsel %vm337, %v1896, 0.0
        %v1899 = vrot.slane %v1898, 4
        %v1900 = vadd.f32 %v1898, %v1899
        %v1901 = vrot.slane %v1900, 2
        %v1902 = vadd.f32 %v1900, %v1901
        %v1903 = vrot.slane %v1902, 1
        %v1904 = vadd.f32 %v1902, %v1903
        %v1905 = vsel %vm337, %v1897, 0.0
        %v1906 = vrot.slane %v1905, 4
        %v1907 = vadd.f32 %v1905, %v1906
        %v1908 = vrot.slane %v1907, 2
        %v1909 = vadd.f32 %v1907, %v1908
        %v1910 = vrot.slane %v1909, 1
        %v1911 = vadd.f32 %v1909, %v1910
        %v1912 = vadd.f32 %v1740, %v1904
        %v1913 = vadd.f32 %v1741, %v1911
        %v1916 = vrot.slane %v1896, 4
        %v1917 = vrot.slane %v1897, 4
        %v1920 = vsel %vm337, %v1916, 0.0
        %v1921 = vrot.slane %v1920, 4
        %v1922 = vadd.f32 %v1920, %v1921
        %v1923 = vrot.slane %v1922, 2
        %v1924 = vadd.f32 %v1922, %v1923
        %v1925 = vrot.slane %v1924, 1
        %v1926 = vadd.f32 %v1924, %v1925
        %v1927 = vsel %vm337, %v1917, 0.0
        %v1928 = vrot.slane %v1927, 4
        %v1929 = vadd.f32 %v1927, %v1928
        %v1930 = vrot.slane %v1929, 2
        %v1931 = vadd.f32 %v1929, %v1930
        %v1932 = vrot.slane %v1931, 1
        %v1933 = vadd.f32 %v1931, %v1932
        %v1934 = vadd.f32 %v1770, %v1926
        %v1935 = vadd.f32 %v1771, %v1933
        %v1936 = vadd.f32 %v1856, 0.0
        %v1937 = vadd.f32 %v1857, %v1804
        %v1938 = vadd.f32 %v1858, %v1805
        %v1939 = vadd.f32 %v1936, %v1912
        %v1940 = vadd.f32 %v1937, %v1913
        %v1941 = vadd.f32 %v1938, 0.0
        %s1942 = sld [smem:[#allocation7]]
        %v1943 = vstv %s1942
        %v1944 = vadd.f32 %v1939, %v1943
        %v1945 = vadd.f32 %v1940, %v1943
        %v1946 = vadd.f32 %v1941, %v1943
        %v1947 = vtanh.pop %v1944
        %v1948 = vtanh.pop %v1945
        %v1949 = vtanh.pop %v1946
        %v1950 = vadd.f32 %v1889, 0.0
        %v1951 = vadd.f32 %v1890, %v1826
        %v1952 = vadd.f32 %v1891, %v1827
        %v1953 = vadd.f32 %v1950, %v1934
        %v1954 = vadd.f32 %v1951, %v1935
        %v1955 = vadd.f32 %v1952, 0.0
        %s1956 = sld [smem:[#allocation7 + $0x1]]
        %v1957 = vstv %s1956
        %v1958 = vadd.f32 %v1953, %v1957
        %v1959 = vadd.f32 %v1954, %v1957
        %v1960 = vadd.f32 %v1955, %v1957
        %v1961 = vtanh.pop %v1958
        %v1962 = vtanh.pop %v1959
        %v1963 = vtanh.pop %v1960
        %v1964 = vld [vmem:[%s225] sm:$0xf]
        %v1965 = vld [vmem:[%s225 + $0x8] sm:$0xf]
        %v1966 = vld [vmem:[%s225 + $0x10] sm:$0xf]
        %v1967 = vld [vmem:[%s225 + $0x4] sm:$0xf]
        %v1968 = vld [vmem:[%s225 + $0xc] sm:$0xf]
        %v1969 = vld [vmem:[%s225 + $0x14] sm:$0xf]
        %v1970 = vlaneseq
        %v1971 = vshrl.u32 %v1970, 7
        %v1972 = vsub.s32 0, %v1971
        %v1973 = vrot.slane %v1947, %v1972
        %v1974 = vlaneseq
        %v1975 = vshrl.u32 %v1974, 7
        %v1976 = vsub.s32 0, %v1975
        %v1977 = vrot.slane %v1948, %v1976
        %v1978 = vlaneseq
        %v1979 = vshrl.u32 %v1978, 7
        %v1980 = vsub.s32 0, %v1979
        %v1981 = vrot.slane %v1949, %v1980
        %v1982 = vmul.f32 %v1973, %v1964
        %v1983 = vmul.f32 %v1977, %v1965
        %v1984 = vmul.f32 %v1981, %v1966
        %v1985 = vlaneseq
        %v1986 = vshrl.u32 %v1985, 7
        %v1987 = vsub.s32 0, %v1986
        %v1988 = vrot.slane %v1961, %v1987
        %v1989 = vlaneseq
        %v1990 = vshrl.u32 %v1989, 7
        %v1991 = vsub.s32 0, %v1990
        %v1992 = vrot.slane %v1962, %v1991
        %v1993 = vlaneseq
        %v1994 = vshrl.u32 %v1993, 7
        %v1995 = vsub.s32 0, %v1994
        %v1996 = vrot.slane %v1963, %v1995
        %v1997 = vmul.f32 %v1988, %v1967
        %v1998 = vmul.f32 %v1992, %v1968
        %v1999 = vmul.f32 %v1996, %v1969
        %v2000 = vsub.f32 %v1964, %v1982
        %v2001 = vsub.f32 %v1965, %v1983
        %v2002 = vsub.f32 %v1966, %v1984
        %v2003 = vsub.f32 %v1967, %v1997
        %v2004 = vsub.f32 %v1968, %v1998
        %v2005 = vsub.f32 %v1969, %v1999
        %v2006 = vadd.f32 %v1983, %v2000
        %v2007 = vadd.f32 %v1984, %v2001
        %v2008 = vadd.f32 %v2002, 0.0
        %v2009 = vadd.f32 %v2003, 0.0
        %v2010 = vadd.f32 %v1997, %v2004
        %v2011 = vadd.f32 %v1998, %v2005
        %vm2012 = vcmask 516096
        %2013 = vst.msk [vmem:[%s256] sm:$0x1] %vm2012, %v2006
        %2014 = vst.msk [vmem:[%s256 + $0x8] sm:$0x1] %vm2012, %v2007
        %2015 = vst.msk [vmem:[%s256 + $0x10] sm:$0x1] %vm2012, %v2008
        %vm2016 = vcmask 518146
        %2017 = vst.msk [vmem:[%s256 - $0x1] sm:$0x4] %vm2016, %v2006
        %2018 = vst.msk [vmem:[%s256 + $0x7] sm:$0x4] %vm2016, %v2007
        %2019 = vst.msk [vmem:[%s256 + $0xf] sm:$0x4] %vm2016, %v2008
        %vm2020 = vcmask 517121
        %2021 = vst.msk [vmem:[%s256 + $0x1] sm:$0x2] %vm2020, %v2006
        %2022 = vst.msk [vmem:[%s256 + $0x9] sm:$0x2] %vm2020, %v2007
        %2023 = vst.msk [vmem:[%s256 + $0x11] sm:$0x2] %vm2020, %v2008
        %vm2024 = vcmask 519171
        %2025 = vst.msk [vmem:[%s256] sm:$0x8] %vm2024, %v2006
        %2026 = vst.msk [vmem:[%s256 + $0x8] sm:$0x8] %vm2024, %v2007
        %2027 = vst.msk [vmem:[%s256 + $0x10] sm:$0x8] %vm2024, %v2008
        %2028 = vst.msk [vmem:[%s256 + $0x4] sm:$0x1] %vm2012, %v2009
        %2029 = vst.msk [vmem:[%s256 + $0xc] sm:$0x1] %vm2012, %v2010
        %2030 = vst.msk [vmem:[%s256 + $0x14] sm:$0x1] %vm2012, %v2011
        %2031 = vst.msk [vmem:[%s256 + $0x3] sm:$0x4] %vm2016, %v2009
        %2032 = vst.msk [vmem:[%s256 + $0xb] sm:$0x4] %vm2016, %v2010
        %2033 = vst.msk [vmem:[%s256 + $0x13] sm:$0x4] %vm2016, %v2011
        %2034 = vst.msk [vmem:[%s256 + $0x5] sm:$0x2] %vm2020, %v2009
        %2035 = vst.msk [vmem:[%s256 + $0xd] sm:$0x2] %vm2020, %v2010
        %2036 = vst.msk [vmem:[%s256 + $0x15] sm:$0x2] %vm2020, %v2011
        %2037 = vst.msk [vmem:[%s256 + $0x4] sm:$0x8] %vm2024, %v2009
        %2038 = vst.msk [vmem:[%s256 + $0xc] sm:$0x8] %vm2024, %v2010
        %2039 = vst.msk [vmem:[%s256 + $0x14] sm:$0x8] %vm2024, %v2011
        %s2040 = sand.u32 %s141, 1
        %s2041 = scalar_lea.sflag [#allocation5], %s2040
        %s2042 = sand.u32 %s141, 1
        %s2043 = smul.addr %s2042, 24
        %s2044 = scalar_lea.vmem [#allocation8], %s2043
        // Predicated region
        $region49: #{tpu_custom_call.1} parent=39 // pred_check
          %p2045 = pneg %p151
        $region50: #{tpu_custom_call.1} parent=39 // pred_check_branch
          %2047 = sbr.rel (%p2045) target = $region52
        $region51: #{tpu_custom_call.1} parent=39 // pred_region
          %s2049 = ssub.s32 384, 384
          %2050 = vsyncadd %s2041, %s2049
          %s2051 = smul.addr %s23, 3
          %s2052 = smul.addr %s2051, 128
          %s2053 = scalar_lea.hbm %s5, %s2052
          %s2054 = sshll.u32 %s2044, 4
          %s2055 = int_to_ptr.vmem [resolvable:$true] %s2054
          %2060 = dma.vmem_to_hbm [thread:$0]  %s2055, 384, %s2053, %s2041, 128, 128, 8
        $region52: #{tpu_custom_call.1} parent=39 // pred_fallthru
          _
      $region40: #{tpu_custom_call.1} parent=5 // pred_fallthru
        _
      %p2061 = scmp.le.s32.totalorder 2, %s18
      // Predicated region
      $region53: #{tpu_custom_call.1} parent=5 // pred_check
        %p2062 = pneg %p2061
      $region54: #{tpu_custom_call.1} parent=5 // pred_check_branch
        %2064 = sbr.rel (%p2062) target = $region56
      $region55: #{tpu_custom_call.1} parent=5 // pred_region
        %s2065 = ssub.s32 %s18, 2
        // Predicated region
        $region57: #{tpu_custom_call.1} parent=55 // pred_check
          %p2066 = pneg %p157
        $region58: #{tpu_custom_call.1} parent=55 // pred_check_branch
          %2068 = sbr.rel (%p2066) target = $region60
        $region59: #{tpu_custom_call.1} parent=55 // pred_region
          %s2069 = sand.u32 %s142, 1
          %s2070 = scalar_lea.sflag [#allocation5], %s2069
          %s2071 = sand.u32 %s142, 1
          %s2072 = smul.addr %s2071, 24
          %s2073 = scalar_lea.vmem [#allocation8], %s2072
          %2074 = dma.done %s2070, 384
        $region60: #{tpu_custom_call.1} parent=55 // pred_fallthru
          _
      $region56: #{tpu_custom_call.1} parent=5 // pred_fallthru
        _
    $region6: #{tpu_custom_call.1} parent=1 // loop_footer
      %s22 = sadd.s32 1, %s18
    $region7: #{tpu_custom_call.1} parent=1 // loop_footer_branch
      %17 = sbr.rel target = $region3
    $region8: #{tpu_custom_call.1} parent=1 // loop_exit
      _
    %2075 = vsyncpa [#allocation4], 1
    %s2076 = scalar_lea.sflag [#allocation4], 1
    %2077 = vsyncpa %s2076, 1
    %2078 = vsyncpa [#allocation5], 1
    %s2079 = scalar_lea.sflag [#allocation5], 1
    %2080 = vsyncpa %s2079, 1
    %2081 = vsyncpa [#allocation6], 1
    %s2082 = scalar_lea.sflag [#allocation6], 1
    %2083 = vsyncpa %s2082, 1

</llo_original>
